<compile_context>
chip_gen: v7x
topology: tpu7x:2x2x1
jax: 0.10.0
libtpu: 0.0.40
codegen_flags: <defaults>
</compile_context>

<pallas_src>
import functools
import numpy as np
import jax
import jax.numpy as jnp
from jax.experimental import pallas as pl
from jax.experimental.pallas import tpu as pltpu

# ---------------- small config consistent with the module ----------------
B = 2
IN_CHANS = 4
FRAMES = 8
IMG = 8
PATCH = 4
FRAME_PATCH = 4
EMBED_DIM = 32
DEPTH = 2
NUM_HEADS = 4
DEC_DIM = 32
DEC_DEPTH = 1
DEC_HEADS = 4
MLP_RATIO = 4
MASK_RATIO = 0.75
LN_EPS = 1e-5  # nn.LayerNorm default

GRID_F = FRAMES // FRAME_PATCH
GRID_HW = IMG // PATCH
NUM_PATCHES = GRID_F * GRID_HW * GRID_HW             # (f h w)
PATCH_DIM = PATCH * PATCH * FRAME_PATCH * IN_CHANS   # (p1 p2 pf c)


# ============================ in-kernel math helpers ============================

def _ln(x, g, b, eps):
    """LayerNorm over the last (lane) dim, f32 math."""
    mu = jnp.mean(x, axis=-1, keepdims=True)
    xc = x - mu
    var = jnp.mean(xc * xc, axis=-1, keepdims=True)
    return xc * jax.lax.rsqrt(var + eps) * g + b


def _erf_approx(x):
    # Abramowitz & Stegun 7.1.26 polynomial erf (|err| < 1.5e-7); only uses
    # exp / mul / add / select so it always lowers inside a Mosaic kernel.
    a1, a2, a3, a4, a5 = (0.254829592, -0.284496736, 1.421413741,
                          -1.453152027, 1.061405429)
    p = 0.3275911
    ax = jnp.abs(x)
    t = 1.0 / (1.0 + p * ax)
    poly = ((((a5 * t + a4) * t + a3) * t + a2) * t + a1) * t
    y = 1.0 - poly * jnp.exp(-ax * ax)
    return jnp.where(x >= 0.0, y, -y)


def _gelu_erf(x):
    """Exact (erf-based) GELU, matching nn.GELU (parity over EUP-tanh speed)."""
    return 0.5 * x * (1.0 + _erf_approx(x * np.float32(1.0 / np.sqrt(2.0))))


# ============================ patch embedding ============================

def _patch_embed_kernel(x_ref, w_ref, b_ref, pos_ref, o_ref, *, nb):
    # (B*L, PD) @ (PD, D) + bias + pos, single grid step (no per-batch steps).
    y = (jnp.dot(x_ref[...].astype(jnp.bfloat16), w_ref[...],
                 preferred_element_type=jnp.float32)
         + b_ref[...])
    pos = pos_ref[...]
    y = y + jnp.concatenate([pos] * nb, axis=0)      # batch-major tiling of pos
    o_ref[...] = y.astype(o_ref.dtype)


def patch_embed(x, w, b, pos):
    """x: (B, L, PD) f32, w: (PD, D) bf16, b: (D,), pos: (L, D) -> (B, L, D) bf16."""
    Bn, L, PD = x.shape
    D = w.shape[1]
    M = Bn * L
    out = pl.pallas_call(
        functools.partial(_patch_embed_kernel, nb=Bn),
        grid=(1,),
        out_shape=jax.ShapeDtypeStruct((M, D), jnp.bfloat16),
        in_specs=[
            pl.BlockSpec((M, PD), lambda i: (0, 0)),
            pl.BlockSpec((PD, D), lambda i: (0, 0)),
            pl.BlockSpec((1, D), lambda i: (0, 0)),
            pl.BlockSpec((L, D), lambda i: (0, 0)),
        ],
        out_specs=pl.BlockSpec((M, D), lambda i: (0, 0)),
    )(x.reshape(M, PD), w, b.reshape(1, D), pos)
    return out.reshape(Bn, L, D)


# ============================ small fused linear ============================

def _linear_kernel(x_ref, w_ref, b_ref, o_ref):
    o_ref[...] = (
        jnp.dot(x_ref[...].astype(jnp.bfloat16), w_ref[...],
                preferred_element_type=jnp.float32)
        + b_ref[...]
    )


def linear(x, w, b):
    """x: (..., K) @ w: (K, N) bf16 + b: (N,) -> (..., N) f32 (single MXU pass)."""
    *lead, K = x.shape
    N = w.shape[1]
    M = int(np.prod(lead))
    out = pl.pallas_call(
        _linear_kernel,
        grid=(1,),
        out_shape=jax.ShapeDtypeStruct((M, N), jnp.float32),
        in_specs=[
            pl.BlockSpec((M, K), lambda i: (0, 0)),
            pl.BlockSpec((K, N), lambda i: (0, 0)),
            pl.BlockSpec((1, N), lambda i: (0, 0)),
        ],
        out_specs=pl.BlockSpec((M, N), lambda i: (0, 0)),
    )(x.reshape(M, K), w, b.reshape(1, N))
    return out.reshape(*lead, N)


# ============================ transformer stack ============================

def _block_stack_kernel(*refs, num_heads, eps, has_pos):
    """grid = (batch, depth); one invocation = one transformer block on one
    batch element.  Residual stream lives in an f32 VMEM scratch across the
    depth axis; all weights are VMEM-resident (hoisted) and indexed by layer."""
    if has_pos:
        (x_ref, pos_ref, ln_ref, qkvw_ref, qkvb_ref, projw_ref, projb_ref,
         fc1w_ref, fc1b_ref, fc2w_ref, fc2b_ref, nf_ref, o_ref, res_ref) = refs
    else:
        (x_ref, ln_ref, qkvw_ref, qkvb_ref, projw_ref, projb_ref,
         fc1w_ref, fc1b_ref, fc2w_ref, fc2b_ref, nf_ref, o_ref, res_ref) = refs
        pos_ref = None

    layer = pl.program_id(1)
    last = pl.num_programs(1) - 1

    @pl.when(layer == 0)
    def _():
        x0 = x_ref[...].astype(jnp.float32)
        if has_pos:
            x0 = x0 + pos_ref[...]            # fused "+ decoder_pos_embed"
        res_ref[...] = x0

    x = res_ref[...]                          # (S, D) f32 residual stream
    S, D = x.shape
    dh = D // num_heads
    scale = float(dh) ** -0.5

    lnp = ln_ref[layer]                       # (4, D): ln1_g, ln1_b, ln2_g, ln2_b
    ln1_g, ln1_b = lnp[0:1, :], lnp[1:2, :]
    ln2_g, ln2_b = lnp[2:3, :], lnp[3:4, :]

    # ---------------- attention (all MXU ops bf16 x bf16 -> f32 acc) ----------------
    h = _ln(x, ln1_g, ln1_b, eps)
    qkv = (jnp.dot(h.astype(jnp.bfloat16), qkvw_ref[layer],
                   preferred_element_type=jnp.float32) + qkvb_ref[layer])  # (S, 3D)
    # Lane slices at D offsets are not 128-aligned at the toy D=32; at real
    # dims (D multiple of 128) these slices are free.
    q = qkv[:, 0:D]
    k = qkv[:, D:2 * D]
    v = qkv[:, 2 * D:3 * D]
    k_bf = k.astype(jnp.bfloat16)

    # Head split via lane masks keeps everything lane-dense at the toy dh=8.
    # TODO(synk): at real head dims (dh >= 64) replace with aligned per-head
    # lane slices — the mask trick wastes (H-1)/H of the score/PV MXU FLOPs.
    lane = jax.lax.broadcasted_iota(jnp.int32, (S, D), 1)
    attn = jnp.zeros((S, D), jnp.float32)
    for hd in range(num_heads):
        m = ((lane >= hd * dh) & (lane < (hd + 1) * dh)).astype(jnp.float32)
        s = jax.lax.dot_general((q * m).astype(jnp.bfloat16), k_bf,
                                (((1,), (1,)), ((), ())),
                                preferred_element_type=jnp.float32) * scale
        s = s - jnp.max(s, axis=-1, keepdims=True)
        p = jnp.exp(s)
        p = p * pl.reciprocal(jnp.sum(p, axis=-1, keepdims=True), approx=True)
        attn = attn + jnp.dot(p.astype(jnp.bfloat16),
                              (v * m).astype(jnp.bfloat16),
                              preferred_element_type=jnp.float32)

    x = x + (jnp.dot(attn.astype(jnp.bfloat16), projw_ref[layer],
                     preferred_element_type=jnp.float32) + projb_ref[layer])

    # ---------------- MLP ----------------
    h2 = _ln(x, ln2_g, ln2_b, eps)
    h2 = (jnp.dot(h2.astype(jnp.bfloat16), fc1w_ref[layer],
                  preferred_element_type=jnp.float32) + fc1b_ref[layer])
    h2 = _gelu_erf(h2)
    x = x + (jnp.dot(h2.astype(jnp.bfloat16), fc2w_ref[layer],
                     preferred_element_type=jnp.float32) + fc2b_ref[layer])

    x_out = x

    @pl.when(layer < last)
    def _():
        res_ref[...] = x_out                 # keep residual in VMEM only

    @pl.when(layer == last)
    def _():
        nf = nf_ref[...]                     # (2, D): final-norm gamma / beta
        o_ref[...] = _ln(x_out, nf[0:1, :], nf[1:2, :], eps).astype(o_ref.dtype)


def transformer_stack(x, bp, norm_fb, num_heads, pos=None, eps=LN_EPS):
    """All `depth` blocks + final LayerNorm (+ optional pos-embed add) in ONE
    pallas_call.  Weights use constant index_maps -> one DMA per array per call."""
    Bn, S, D = x.shape
    depth = bp['qkv_w'].shape[0]
    has_pos = pos is not None

    act_spec = lambda: pl.BlockSpec((pl.Squeezed(), S, D), lambda b, d: (b, 0, 0))

    def hoisted(a):  # full-array block, fetched once for the whole call
        nd = a.ndim
        return pl.BlockSpec(a.shape, lambda b, d, _n=nd: (0,) * _n)

    weights = [bp['ln'], bp['qkv_w'], bp['qkv_b'], bp['proj_w'], bp['proj_b'],
               bp['fc1_w'], bp['fc1_b'], bp['fc2_w'], bp['fc2_b'], norm_fb]
    in_arrays = [x] + ([pos] if has_pos else []) + weights
    in_specs = ([act_spec()] + ([hoisted(pos)] if has_pos else [])
                + [hoisted(w) for w in weights])

    return pl.pallas_call(
        functools.partial(_block_stack_kernel, num_heads=num_heads, eps=eps,
                          has_pos=has_pos),
        grid=(Bn, depth),
        out_shape=jax.ShapeDtypeStruct((Bn, S, D), jnp.bfloat16),
        in_specs=in_specs,
        out_specs=act_spec(),
        scratch_shapes=[pltpu.VMEM((S, D), jnp.float32)],   # residual stream
        compiler_params=pltpu.CompilerParams(
            dimension_semantics=("parallel", "arbitrary")),
    )(*in_arrays)


# ============================ fused decoder_pred + loss ============================

def _pred_loss_kernel(x_ref, w_ref, b_ref, t_ref, m_ref, pred_ref, loss_ref,
                      num_ref, den_ref):
    bi = pl.program_id(0)

    @pl.when(bi == 0)
    def _():
        num_ref[...] = jnp.zeros_like(num_ref)
        den_ref[...] = jnp.zeros_like(den_ref)

    xb = x_ref[...]                                    # (L+1, Dd) bf16
    xh = xb[1:, :]                                     # drop cls token
    p = (jnp.dot(xh.astype(jnp.bfloat16), w_ref[...],
                 preferred_element_type=jnp.float32) + b_ref[...])   # (L, P)
    pred_ref[...] = p                                  # lane-dense (P = 256) store

    d = p - t_ref[...]
    per = jnp.mean(d * d, axis=-1, keepdims=True)      # (L, 1) per-patch MSE
    m = m_ref[...]                                     # (L, 1)
    num_ref[...] += jnp.sum(per * m, keepdims=True)
    den_ref[...] += jnp.sum(m, keepdims=True)

    @pl.when(bi == pl.num_programs(0) - 1)
    def _():
        loss_ref[...] = num_ref[...] / den_ref[...]


def pred_and_loss(x_dec, w, b, target, mask):
    """Fused decoder_pred linear + cls-drop + per-patch MSE + masked mean."""
    Bn, S, Dd = x_dec.shape
    L = S - 1
    P = w.shape[1]
    pred, loss = pl.pallas_call(
        _pred_loss_kernel,
        grid=(Bn,),
        out_shape=(jax.ShapeDtypeStruct((Bn, L, P), jnp.float32),
                   jax.ShapeDtypeStruct((1, 1), jnp.float32)),
        in_specs=[
            pl.BlockSpec((pl.Squeezed(), S, Dd), lambda bi: (bi, 0, 0)),
            pl.BlockSpec((Dd, P), lambda bi: (0, 0)),
            pl.BlockSpec((1, P), lambda bi: (0, 0)),
            pl.BlockSpec((pl.Squeezed(), L, P), lambda bi: (bi, 0, 0)),
            pl.BlockSpec((pl.Squeezed(), L, 1), lambda bi: (bi, 0, 0)),
        ],
        out_specs=(pl.BlockSpec((pl.Squeezed(), L, P), lambda bi: (bi, 0, 0)),
                   pl.BlockSpec((1, 1), lambda bi: (0, 0))),
        scratch_shapes=[pltpu.VMEM((1, 1), jnp.float32),
                        pltpu.VMEM((1, 1), jnp.float32)],
        compiler_params=pltpu.CompilerParams(dimension_semantics=("arbitrary",)),
    )(x_dec, w, b.reshape(1, P), target, mask.reshape(Bn, L, 1))
    return pred, loss[0, 0]


# ============================ model (glue in JAX) ============================

def patchify(imgs):
    # 'b c (f pf) (h p1) (w p2) -> b (f h w) (p1 p2 pf c)'
    Bn, C, Fr, Hh, Ww = imgs.shape
    f, h, w = Fr // FRAME_PATCH, Hh // PATCH, Ww // PATCH
    x = imgs.reshape(Bn, C, f, FRAME_PATCH, h, PATCH, w, PATCH)
    x = x.transpose(0, 2, 4, 6, 5, 7, 3, 1)  # b f h w p1 p2 pf c
    return x.reshape(Bn, f * h * w, PATCH * PATCH * FRAME_PATCH * C)


def random_masking(x, mask_ratio, key):
    # data-dependent argsort/gather kept in plain JAX (no clean Pallas analogue)
    N, L, D = x.shape
    len_keep = int(L * (1 - mask_ratio))
    noise = jax.random.uniform(key, (N, L))
    ids_shuffle = jnp.argsort(noise, axis=1)
    ids_restore = jnp.argsort(ids_shuffle, axis=1)
    ids_keep = ids_shuffle[:, :len_keep]
    x_masked = jnp.take_along_axis(
        x, jnp.broadcast_to(ids_keep[..., None], (N, len_keep, D)), axis=1)
    mask = jnp.ones((N, L), jnp.float32).at[:, :len_keep].set(0.0)
    mask = jnp.take_along_axis(mask, ids_restore, axis=1)
    return x_masked, mask, ids_restore


def forward_encoder(params, imgs, mask_ratio, key):
    # TODO(synk): PatchEmbed class body is not given in the reference; implemented
    # as patchify + Linear(patch_dim -> embed_dim) "proj" (== stride=patch Conv3d).
    x = patchify(imgs)
    x = patch_embed(x, params['patch_proj_w'], params['patch_proj_b'],
                    params['pos_embed'][0, 1:, :])        # fused matmul+bias+pos
    x, mask, ids_restore = random_masking(x, mask_ratio, key)
    cls = (params['cls_token'] + params['pos_embed'][:, :1, :]).astype(jnp.bfloat16)
    cls = jnp.broadcast_to(cls, (x.shape[0], 1, EMBED_DIM))
    x = jnp.concatenate([cls, x], axis=1)
    x = transformer_stack(x, params['enc_blocks'], params['norm'], NUM_HEADS)
    return x, mask, ids_restore


def forward_decoder(params, x, ids_restore):
    x = linear(x, params['dec_embed_w'], params['dec_embed_b'])
    N, _, D = x.shape
    L = ids_restore.shape[1]
    n_mask = L + 1 - x.shape[1]
    mask_tokens = jnp.broadcast_to(params['mask_token'], (N, n_mask, D))
    x_ = jnp.concatenate([x[:, 1:, :], mask_tokens], axis=1)
    x_ = jnp.take_along_axis(
        x_, jnp.broadcast_to(ids_restore[..., None], (N, L, D)), axis=1)
    x = jnp.concatenate([x[:, :1, :], x_], axis=1)
    # "+ decoder_pos_embed" and the final decoder_norm are fused into the stack.
    x = transformer_stack(x, params['dec_blocks'], params['dec_norm'], DEC_HEADS,
                          pos=params['dec_pos_embed'][0])
    return x                                   # (B, L+1, DEC_DIM) decoder-normed


def forward(params, imgs, mask_ratio=0.75, *, key, epoch=0, data_iter=0,
            norm_pix_loss=False):
    latent, mask, ids_restore = forward_encoder(params, imgs, mask_ratio, key)
    x_dec = forward_decoder(params, latent, ids_restore)

    target = patchify(imgs)
    if norm_pix_loss:
        mean = target.mean(axis=-1, keepdims=True)
        var = target.var(axis=-1, keepdims=True, ddof=1)   # unbiased, as in torch
        target = (target - mean) / jnp.sqrt(var + 1e-6)

    # decoder_pred + cls-drop + masked MSE fused in one pallas_call
    pred, loss = pred_and_loss(x_dec, params['dec_pred_w'], params['dec_pred_b'],
                               target, mask)

    if epoch >= 0 and data_iter == 0:
        # TODO(synk): the reference additionally saves reconstructions via nibabel
        # (.nii.gz file I/O) here; file output is skipped.  Only the `mask`
        # reassignment that affects the return value is reproduced.
        mask = jnp.tile(mask[..., None], (1, 1, PATCH_DIM))
    return loss, pred, mask


# ============================ parameter init ============================

def init_params(key):
    keys = iter(jax.random.split(key, 64))

    def nrm(shape, dtype=jnp.float32, std=0.02):
        return (std * jax.random.normal(next(keys), shape)).astype(dtype)

    def zeros(shape):
        return jnp.zeros(shape, jnp.float32)

    def ones(shape):
        return jnp.ones(shape, jnp.float32)

    def stack_blocks(depth, dim, hidden):
        # per-layer params stacked on a leading depth axis (hoisted into VMEM
        # once per call); matmul weights in bf16; LN params packed into one array
        return dict(
            ln=jnp.concatenate([ones((depth, 1, dim)), zeros((depth, 1, dim)),
                                ones((depth, 1, dim)), zeros((depth, 1, dim))],
                               axis=1),                      # (depth, 4, dim)
            qkv_w=nrm((depth, dim, 3 * dim), jnp.bfloat16),
            qkv_b=zeros((depth, 1, 3 * dim)),
            proj_w=nrm((depth, dim, dim), jnp.bfloat16),
            proj_b=zeros((depth, 1, dim)),
            fc1_w=nrm((depth, dim, hidden), jnp.bfloat16),
            fc1_b=zeros((depth, 1, hidden)),
            fc2_w=nrm((depth, hidden, dim), jnp.bfloat16),
            fc2_b=zeros((depth, 1, dim)),
        )

    def norm_pack(dim):
        return jnp.concatenate([ones((1, dim)), zeros((1, dim))], axis=0)  # (2, dim)

    return dict(
        patch_proj_w=nrm((PATCH_DIM, EMBED_DIM), jnp.bfloat16),
        patch_proj_b=zeros((EMBED_DIM,)),
        cls_token=nrm((1, 1, EMBED_DIM)),
        pos_embed=nrm((1, NUM_PATCHES + 1, EMBED_DIM)),
        enc_blocks=stack_blocks(DEPTH, EMBED_DIM, EMBED_DIM * MLP_RATIO),
        norm=norm_pack(EMBED_DIM),
        dec_embed_w=nrm((EMBED_DIM, DEC_DIM), jnp.bfloat16),
        dec_embed_b=zeros((DEC_DIM,)),
        mask_token=nrm((1, 1, DEC_DIM)),
        dec_pos_embed=nrm((1, NUM_PATCHES + 1, DEC_DIM)),
        dec_blocks=stack_blocks(DEC_DEPTH, DEC_DIM, DEC_DIM * MLP_RATIO),
        dec_norm=norm_pack(DEC_DIM),
        dec_pred_w=nrm((DEC_DIM, PATCH_DIM), jnp.bfloat16),
        dec_pred_b=zeros((PATCH_DIM,)),
    )


# ================================== main ==================================

if __name__ == "__main__":
    root = jax.random.PRNGKey(0)
    pkey, xkey, mkey = jax.random.split(root, 3)
    params = init_params(pkey)
    imgs = jax.random.normal(xkey, (B, IN_CHANS, FRAMES, IMG, IMG), jnp.float32)

    fwd = jax.jit(forward, static_argnames=("mask_ratio", "epoch", "data_iter",
                                            "norm_pix_loss"))
    loss, pred, mask = fwd(params, imgs, mask_ratio=MASK_RATIO, key=mkey,
                           epoch=0, data_iter=0)
    jax.block_until_ready((loss, pred, mask))

    assert pred.shape == (B, NUM_PATCHES, PATCH_DIM), pred.shape
    assert mask.shape == (B, NUM_PATCHES, PATCH_DIM), mask.shape
    assert bool(jnp.isfinite(loss)), float(loss)
    print("KERNEL_OK")
</pallas_src>

<mosaic_0001>
module attributes {stable_mosaic.version = 11 : i64} {
  func.func @_patch_embed_kernel(%arg0: i32, %arg1: memref<16x256xf32, #tpu.memory_space<vmem>>, %arg2: memref<256x32xbf16, #tpu.memory_space<vmem>>, %arg3: memref<1x32xf32, #tpu.memory_space<vmem>>, %arg4: memref<8x32xf32, #tpu.memory_space<vmem>>, %arg5: memref<16x32xbf16, #tpu.memory_space<vmem>>) attributes {dimension_semantics = [#tpu.dimension_semantics<arbitrary>], iteration_bounds = array<i64: 1>, scalar_prefetch = 0 : i64, scratch_operands = 0 : i64, tpu.core_type = #tpu.core_type<tc>, window_params = [{pipeline_mode = #tpu.pipeline_mode<synchronous>, transform_indices = @transform_0, window_bounds = array<i64: 16, 256>}, {pipeline_mode = #tpu.pipeline_mode<synchronous>, transform_indices = @transform_1, window_bounds = array<i64: 256, 32>}, {pipeline_mode = #tpu.pipeline_mode<synchronous>, transform_indices = @transform_2, window_bounds = array<i64: 1, 32>}, {pipeline_mode = #tpu.pipeline_mode<synchronous>, transform_indices = @transform_3, window_bounds = array<i64: 8, 32>}, {pipeline_mode = #tpu.pipeline_mode<synchronous>, transform_indices = @transform_4, window_bounds = array<i64: 16, 32>}]} {
    %c0 = arith.constant 0 : index
    %c0_0 = arith.constant 0 : index
    %0 = vector.load %arg1[%c0, %c0_0] : memref<16x256xf32, #tpu.memory_space<vmem>>, vector<16x256xf32>
    %1 = arith.truncf %0 : vector<16x256xf32> to vector<16x256xbf16>
    %c0_1 = arith.constant 0 : index
    %c0_2 = arith.constant 0 : index
    %2 = vector.load %arg2[%c0_1, %c0_2] : memref<256x32xbf16, #tpu.memory_space<vmem>>, vector<256x32xbf16>
    %cst = arith.constant dense<0.000000e+00> : vector<16x32xf32>
    %3 = tpu.matmul %1, %2, %cst {dimension_numbers = #tpu.dot_dimension_numbers<[1], [0], [0], [1], [0, 0, 1, 1], [], []>} : vector<16x256xbf16>, vector<256x32xbf16>, vector<16x32xf32> -> vector<16x32xf32>
    %c0_3 = arith.constant 0 : index
    %c0_4 = arith.constant 0 : index
    %4 = vector.load %arg3[%c0_3, %c0_4] : memref<1x32xf32, #tpu.memory_space<vmem>>, vector<1x32xf32>
    %5 = vector.broadcast %4 : vector<1x32xf32> to vector<16x32xf32>
    %6 = arith.addf %3, %5 : vector<16x32xf32>
    %c0_5 = arith.constant 0 : index
    %c0_6 = arith.constant 0 : index
    %7 = vector.load %arg4[%c0_5, %c0_6] : memref<8x32xf32, #tpu.memory_space<vmem>>, vector<8x32xf32>
    %8 = tpu.concatenate %7, %7 in 0 : vector<8x32xf32>, vector<8x32xf32> -> vector<16x32xf32>
    %9 = arith.addf %6, %8 : vector<16x32xf32>
    %10 = arith.truncf %9 : vector<16x32xf32> to vector<16x32xbf16>
    %c0_7 = arith.constant 0 : index
    %c0_8 = arith.constant 0 : index
    %11 = vector.load %arg5[%c0_7, %c0_8] : memref<16x32xbf16, #tpu.memory_space<vmem>>, vector<16x32xbf16>
    tpu.vector_store %arg5[%c0_7, %c0_8], %10 {strides = array<i32>} : memref<16x32xbf16, #tpu.memory_space<vmem>>, vector<16x32xbf16>,
    return
  }
  func.func @transform_0(%arg0: i32) -> (i32, i32) {
    %c0_i32 = arith.constant 0 : i32
    %c0_i32_0 = arith.constant 0 : i32
    %c0_i32_1 = arith.constant 0 : i32
    return %c0_i32, %c0_i32_0 : i32, i32
  }
  func.func @transform_1(%arg0: i32) -> (i32, i32) {
    %c0_i32 = arith.constant 0 : i32
    %c0_i32_0 = arith.constant 0 : i32
    %c0_i32_1 = arith.constant 0 : i32
    return %c0_i32, %c0_i32_0 : i32, i32
  }
  func.func @transform_2(%arg0: i32) -> (i32, i32) {
    %c0_i32 = arith.constant 0 : i32
    %c0_i32_0 = arith.constant 0 : i32
    %c0_i32_1 = arith.constant 0 : i32
    return %c0_i32, %c0_i32_0 : i32, i32
  }
  func.func @transform_3(%arg0: i32) -> (i32, i32) {
    %c0_i32 = arith.constant 0 : i32
    %c0_i32_0 = arith.constant 0 : i32
    %c0_i32_1 = arith.constant 0 : i32
    return %c0_i32, %c0_i32_0 : i32, i32
  }
  func.func @transform_4(%arg0: i32) -> (i32, i32) {
    %c0_i32 = arith.constant 0 : i32
    %c0_i32_0 = arith.constant 0 : i32
    %c0_i32_1 = arith.constant 0 : i32
    return %c0_i32, %c0_i32_0 : i32, i32
  }
}

module attributes {stable_mosaic.version = 11 : i64} {
  func.func @_block_stack_kernel(%arg0: i32, %arg1: i32, %arg2: memref<1x3x32xbf16, #tpu.memory_space<vmem>>, %arg3: memref<2x4x32xf32, #tpu.memory_space<vmem>>, %arg4: memref<2x32x96xbf16, #tpu.memory_space<vmem>>, %arg5: memref<2x1x96xf32, #tpu.memory_space<vmem>>, %arg6: memref<2x32x32xbf16, #tpu.memory_space<vmem>>, %arg7: memref<2x1x32xf32, #tpu.memory_space<vmem>>, %arg8: memref<2x32x128xbf16, #tpu.memory_space<vmem>>, %arg9: memref<2x1x128xf32, #tpu.memory_space<vmem>>, %arg10: memref<2x128x32xbf16, #tpu.memory_space<vmem>>, %arg11: memref<2x1x32xf32, #tpu.memory_space<vmem>>, %arg12: memref<2x32xf32, #tpu.memory_space<vmem>>, %arg13: memref<1x3x32xbf16, #tpu.memory_space<vmem>>, %arg14: memref<3x32xf32, #tpu.memory_space<vmem>>) attributes {dimension_semantics = [#tpu.dimension_semantics<parallel>, #tpu.dimension_semantics<arbitrary>], iteration_bounds = array<i64: 2, 2>, scalar_prefetch = 0 : i64, scratch_operands = 1 : i64, tpu.core_type = #tpu.core_type<tc>, window_params = [{transform_indices = @transform_0, window_bounds = array<i64: 1, 3, 32>}, {pipeline_mode = #tpu.pipeline_mode<synchronous>, transform_indices = @transform_1, window_bounds = array<i64: 2, 4, 32>}, {pipeline_mode = #tpu.pipeline_mode<synchronous>, transform_indices = @transform_2, window_bounds = array<i64: 2, 32, 96>}, {pipeline_mode = #tpu.pipeline_mode<synchronous>, transform_indices = @transform_3, window_bounds = array<i64: 2, 1, 96>}, {pipeline_mode = #tpu.pipeline_mode<synchronous>, transform_indices = @transform_4, window_bounds = array<i64: 2, 32, 32>}, {pipeline_mode = #tpu.pipeline_mode<synchronous>, transform_indices = @transform_5, window_bounds = array<i64: 2, 1, 32>}, {pipeline_mode = #tpu.pipeline_mode<synchronous>, transform_indices = @transform_6, window_bounds = array<i64: 2, 32, 128>}, {pipeline_mode = #tpu.pipeline_mode<synchronous>, transform_indices = @transform_7, window_bounds = array<i64: 2, 1, 128>}, {pipeline_mode = #tpu.pipeline_mode<synchronous>, transform_indices = @transform_8, window_bounds = array<i64: 2, 128, 32>}, {pipeline_mode = #tpu.pipeline_mode<synchronous>, transform_indices = @transform_9, window_bounds = array<i64: 2, 1, 32>}, {pipeline_mode = #tpu.pipeline_mode<synchronous>, transform_indices = @transform_10, window_bounds = array<i64: 2, 32>}, {transform_indices = @transform_11, window_bounds = array<i64: 1, 3, 32>}]} {
    %c0_i32 = arith.constant 0 : i32
    %0 = arith.cmpi eq, %arg1, %c0_i32 : i32
    %1 = arith.extui %0 : i1 to i32
    %c0_i32_0 = arith.constant 0 : i32
    %2 = arith.cmpi ne, %1, %c0_i32_0 : i32
    scf.if %2 {
      %c0_76 = arith.constant 0 : index
      %c0_77 = arith.constant 0 : index
      %c0_78 = arith.constant 0 : index
      %253 = vector.load %arg2[%c0_76, %c0_77, %c0_78] : memref<1x3x32xbf16, #tpu.memory_space<vmem>>, vector<1x3x32xbf16>
      %254 = vector.shape_cast %253 : vector<1x3x32xbf16> to vector<3x32xbf16>
      %255 = arith.extf %254 : vector<3x32xbf16> to vector<3x32xf32>
      %c0_79 = arith.constant 0 : index
      %c0_80 = arith.constant 0 : index
      %256 = vector.load %arg14[%c0_79, %c0_80] : memref<3x32xf32, #tpu.memory_space<vmem>>, vector<3x32xf32>
      tpu.vector_store %arg14[%c0_79, %c0_80], %255 {strides = array<i32>} : memref<3x32xf32, #tpu.memory_space<vmem>>, vector<3x32xf32>,
    } else {
    }
    %c0 = arith.constant 0 : index
    %c0_1 = arith.constant 0 : index
    %3 = vector.load %arg14[%c0, %c0_1] : memref<3x32xf32, #tpu.memory_space<vmem>>, vector<3x32xf32>
    %4 = arith.index_cast %arg1 : i32 to index
    %c0_2 = arith.constant 0 : index
    %c0_3 = arith.constant 0 : index
    %5 = vector.load %arg3[%4, %c0_2, %c0_3] : memref<2x4x32xf32, #tpu.memory_space<vmem>>, vector<1x4x32xf32>
    %6 = vector.shape_cast %5 : vector<1x4x32xf32> to vector<4x32xf32>
    %7 = vector.extract_strided_slice %6 {offsets = [0, 0], sizes = [1, 32], strides = [1, 1]} : vector<4x32xf32> to vector<1x32xf32>
    %8 = vector.extract_strided_slice %6 {offsets = [1, 0], sizes = [1, 32], strides = [1, 1]} : vector<4x32xf32> to vector<1x32xf32>
    %9 = vector.extract_strided_slice %6 {offsets = [2, 0], sizes = [1, 32], strides = [1, 1]} : vector<4x32xf32> to vector<1x32xf32>
    %10 = vector.extract_strided_slice %6 {offsets = [3, 0], sizes = [1, 32], strides = [1, 1]} : vector<4x32xf32> to vector<1x32xf32>
    %cst = arith.constant dense<0.000000e+00> : vector<3xf32>
    %11 = vector.multi_reduction <add>, %3, %cst [1] : vector<3x32xf32> to vector<3xf32>
    %12 = vector.shape_cast %11 : vector<3xf32> to vector<3x1xf32>
    %cst_4 = arith.constant 3.200000e+01 : f32
    %13 = vector.broadcast %cst_4 : f32 to vector<3x1xf32>
    %14 = arith.divf %12, %13 : vector<3x1xf32>
    %15 = vector.broadcast %14 : vector<3x1xf32> to vector<3x32xf32>
    %16 = arith.subf %3, %15 : vector<3x32xf32>
    %17 = arith.mulf %16, %16 : vector<3x32xf32>
    %cst_5 = arith.constant dense<0.000000e+00> : vector<3xf32>
    %18 = vector.multi_reduction <add>, %17, %cst_5 [1] : vector<3x32xf32> to vector<3xf32>
    %19 = vector.shape_cast %18 : vector<3xf32> to vector<3x1xf32>
    %cst_6 = arith.constant 3.200000e+01 : f32
    %20 = vector.broadcast %cst_6 : f32 to vector<3x1xf32>
    %21 = arith.divf %19, %20 : vector<3x1xf32>
    %cst_7 = arith.constant 9.99999974E-6 : f32
    %22 = vector.broadcast %cst_7 : f32 to vector<3x1xf32>
    %23 = arith.addf %21, %22 : vector<3x1xf32>
    %24 = math.rsqrt %23 : vector<3x1xf32>
    %25 = vector.broadcast %24 : vector<3x1xf32> to vector<3x32xf32>
    %26 = arith.mulf %16, %25 : vector<3x32xf32>
    %27 = vector.broadcast %7 : vector<1x32xf32> to vector<3x32xf32>
    %28 = arith.mulf %26, %27 : vector<3x32xf32>
    %29 = vector.broadcast %8 : vector<1x32xf32> to vector<3x32xf32>
    %30 = arith.addf %28, %29 : vector<3x32xf32>
    %31 = arith.truncf %30 : vector<3x32xf32> to vector<3x32xbf16>
    %32 = arith.index_cast %arg1 : i32 to index
    %c0_8 = arith.constant 0 : index
    %c0_9 = arith.constant 0 : index
    %33 = vector.load %arg4[%32, %c0_8, %c0_9] : memref<2x32x96xbf16, #tpu.memory_space<vmem>>, vector<1x32x96xbf16>
    %34 = vector.shape_cast %33 : vector<1x32x96xbf16> to vector<32x96xbf16>
    %cst_10 = arith.constant dense<0.000000e+00> : vector<3x96xf32>
    %35 = tpu.matmul %31, %34, %cst_10 {dimension_numbers = #tpu.dot_dimension_numbers<[1], [0], [0], [1], [0, 0, 1, 1], [], []>} : vector<3x32xbf16>, vector<32x96xbf16>, vector<3x96xf32> -> vector<3x96xf32>
    %36 = arith.index_cast %arg1 : i32 to index
    %c0_11 = arith.constant 0 : index
    %c0_12 = arith.constant 0 : index
    %37 = vector.load %arg5[%36, %c0_11, %c0_12] : memref<2x1x96xf32, #tpu.memory_space<vmem>>, vector<1x1x96xf32>
    %38 = vector.shape_cast %37 : vector<1x1x96xf32> to vector<1x96xf32>
    %39 = vector.broadcast %38 : vector<1x96xf32> to vector<3x96xf32>
    %40 = arith.addf %35, %39 : vector<3x96xf32>
    %41 = vector.extract_strided_slice %40 {offsets = [0, 0], sizes = [3, 32], strides = [1, 1]} : vector<3x96xf32> to vector<3x32xf32>
    %42 = vector.extract_strided_slice %40 {offsets = [0, 32], sizes = [3, 32], strides = [1, 1]} : vector<3x96xf32> to vector<3x32xf32>
    %43 = vector.extract_strided_slice %40 {offsets = [0, 64], sizes = [3, 32], strides = [1, 1]} : vector<3x96xf32> to vector<3x32xf32>
    %44 = arith.truncf %42 : vector<3x32xf32> to vector<3x32xbf16>
    %45 = tpu.iota {dimensions = array<i32: 1>} : vector<3x32xi32>
    %cst_13 = arith.constant 0.000000e+00 : f32
    %46 = vector.broadcast %cst_13 : f32 to vector<3x32xf32>
    %c0_i32_14 = arith.constant 0 : i32
    %47 = vector.broadcast %c0_i32_14 : i32 to vector<3x32xi32>
    %48 = arith.cmpi sge, %45, %47 : vector<3x32xi32>
    %c8_i32 = arith.constant 8 : i32
    %49 = vector.broadcast %c8_i32 : i32 to vector<3x32xi32>
    %50 = arith.cmpi slt, %45, %49 : vector<3x32xi32>
    %51 = arith.andi %48, %50 : vector<3x32xi1>
    %52 = arith.extui %51 : vector<3x32xi1> to vector<3x32xi32>
    %53 = arith.sitofp %52 : vector<3x32xi32> to vector<3x32xf32>
    %54 = arith.mulf %41, %53 : vector<3x32xf32>
    %55 = arith.truncf %54 : vector<3x32xf32> to vector<3x32xbf16>
    %cst_15 = arith.constant dense<0.000000e+00> : vector<3x3xf32>
    %56 = tpu.matmul %55, %44, %cst_15 {dimension_numbers = #tpu.dot_dimension_numbers<[1], [1], [0], [0], [0, 0, 1, 0], [], []>} : vector<3x32xbf16>, vector<3x32xbf16>, vector<3x3xf32> -> vector<3x3xf32>
    %cst_16 = arith.constant 0.353553385 : f32
    %57 = vector.broadcast %cst_16 : f32 to vector<3x3xf32>
    %58 = arith.mulf %56, %57 : vector<3x3xf32>
    %cst_17 = arith.constant dense<0xFF800000> : vector<3xf32>
    %59 = vector.multi_reduction <maximumf>, %58, %cst_17 [1] : vector<3x3xf32> to vector<3xf32>
    %60 = vector.shape_cast %59 : vector<3xf32> to vector<3x1xf32>
    %61 = vector.broadcast %60 : vector<3x1xf32> to vector<3x3xf32>
    %62 = arith.subf %58, %61 : vector<3x3xf32>
    %63 = math.exp %62 : vector<3x3xf32>
    %cst_18 = arith.constant dense<0.000000e+00> : vector<3xf32>
    %64 = vector.multi_reduction <add>, %63, %cst_18 [1] : vector<3x3xf32> to vector<3xf32>
    %65 = vector.shape_cast %64 : vector<3xf32> to vector<3x1xf32>
    %66 = tpu.reciprocal %65 {approx = true} : vector<3x1xf32> -> vector<3x1xf32>
    %67 = vector.broadcast %66 : vector<3x1xf32> to vector<3x3xf32>
    %68 = arith.mulf %63, %67 : vector<3x3xf32>
    %69 = arith.truncf %68 : vector<3x3xf32> to vector<3x3xbf16>
    %70 = arith.mulf %43, %53 : vector<3x32xf32>
    %71 = arith.truncf %70 : vector<3x32xf32> to vector<3x32xbf16>
    %cst_19 = arith.constant dense<0.000000e+00> : vector<3x32xf32>
    %72 = tpu.matmul %69, %71, %cst_19 {dimension_numbers = #tpu.dot_dimension_numbers<[1], [0], [0], [1], [0, 0, 1, 1], [], []>} : vector<3x3xbf16>, vector<3x32xbf16>, vector<3x32xf32> -> vector<3x32xf32>
    %73 = arith.addf %46, %72 : vector<3x32xf32>
    %c8_i32_20 = arith.constant 8 : i32
    %74 = vector.broadcast %c8_i32_20 : i32 to vector<3x32xi32>
    %75 = arith.cmpi sge, %45, %74 : vector<3x32xi32>
    %c16_i32 = arith.constant 16 : i32
    %76 = vector.broadcast %c16_i32 : i32 to vector<3x32xi32>
    %77 = arith.cmpi slt, %45, %76 : vector<3x32xi32>
    %78 = arith.andi %75, %77 : vector<3x32xi1>
    %79 = arith.extui %78 : vector<3x32xi1> to vector<3x32xi32>
    %80 = arith.sitofp %79 : vector<3x32xi32> to vector<3x32xf32>
    %81 = arith.mulf %41, %80 : vector<3x32xf32>
    %82 = arith.truncf %81 : vector<3x32xf32> to vector<3x32xbf16>
    %cst_21 = arith.constant dense<0.000000e+00> : vector<3x3xf32>
    %83 = tpu.matmul %82, %44, %cst_21 {dimension_numbers = #tpu.dot_dimension_numbers<[1], [1], [0], [0], [0, 0, 1, 0], [], []>} : vector<3x32xbf16>, vector<3x32xbf16>, vector<3x3xf32> -> vector<3x3xf32>
    %cst_22 = arith.constant 0.353553385 : f32
    %84 = vector.broadcast %cst_22 : f32 to vector<3x3xf32>
    %85 = arith.mulf %83, %84 : vector<3x3xf32>
    %cst_23 = arith.constant dense<0xFF800000> : vector<3xf32>
    %86 = vector.multi_reduction <maximumf>, %85, %cst_23 [1] : vector<3x3xf32> to vector<3xf32>
    %87 = vector.shape_cast %86 : vector<3xf32> to vector<3x1xf32>
    %88 = vector.broadcast %87 : vector<3x1xf32> to vector<3x3xf32>
    %89 = arith.subf %85, %88 : vector<3x3xf32>
    %90 = math.exp %89 : vector<3x3xf32>
    %cst_24 = arith.constant dense<0.000000e+00> : vector<3xf32>
    %91 = vector.multi_reduction <add>, %90, %cst_24 [1] : vector<3x3xf32> to vector<3xf32>
    %92 = vector.shape_cast %91 : vector<3xf32> to vector<3x1xf32>
    %93 = tpu.reciprocal %92 {approx = true} : vector<3x1xf32> -> vector<3x1xf32>
    %94 = vector.broadcast %93 : vector<3x1xf32> to vector<3x3xf32>
    %95 = arith.mulf %90, %94 : vector<3x3xf32>
    %96 = arith.truncf %95 : vector<3x3xf32> to vector<3x3xbf16>
    %97 = arith.mulf %43, %80 : vector<3x32xf32>
    %98 = arith.truncf %97 : vector<3x32xf32> to vector<3x32xbf16>
    %cst_25 = arith.constant dense<0.000000e+00> : vector<3x32xf32>
    %99 = tpu.matmul %96, %98, %cst_25 {dimension_numbers = #tpu.dot_dimension_numbers<[1], [0], [0], [1], [0, 0, 1, 1], [], []>} : vector<3x3xbf16>, vector<3x32xbf16>, vector<3x32xf32> -> vector<3x32xf32>
    %100 = arith.addf %73, %99 : vector<3x32xf32>
    %c16_i32_26 = arith.constant 16 : i32
    %101 = vector.broadcast %c16_i32_26 : i32 to vector<3x32xi32>
    %102 = arith.cmpi sge, %45, %101 : vector<3x32xi32>
    %c24_i32 = arith.constant 24 : i32
    %103 = vector.broadcast %c24_i32 : i32 to vector<3x32xi32>
    %104 = arith.cmpi slt, %45, %103 : vector<3x32xi32>
    %105 = arith.andi %102, %104 : vector<3x32xi1>
    %106 = arith.extui %105 : vector<3x32xi1> to vector<3x32xi32>
    %107 = arith.sitofp %106 : vector<3x32xi32> to vector<3x32xf32>
    %108 = arith.mulf %41, %107 : vector<3x32xf32>
    %109 = arith.truncf %108 : vector<3x32xf32> to vector<3x32xbf16>
    %cst_27 = arith.constant dense<0.000000e+00> : vector<3x3xf32>
    %110 = tpu.matmul %109, %44, %cst_27 {dimension_numbers = #tpu.dot_dimension_numbers<[1], [1], [0], [0], [0, 0, 1, 0], [], []>} : vector<3x32xbf16>, vector<3x32xbf16>, vector<3x3xf32> -> vector<3x3xf32>
    %cst_28 = arith.constant 0.353553385 : f32
    %111 = vector.broadcast %cst_28 : f32 to vector<3x3xf32>
    %112 = arith.mulf %110, %111 : vector<3x3xf32>
    %cst_29 = arith.constant dense<0xFF800000> : vector<3xf32>
    %113 = vector.multi_reduction <maximumf>, %112, %cst_29 [1] : vector<3x3xf32> to vector<3xf32>
    %114 = vector.shape_cast %113 : vector<3xf32> to vector<3x1xf32>
    %115 = vector.broadcast %114 : vector<3x1xf32> to vector<3x3xf32>
    %116 = arith.subf %112, %115 : vector<3x3xf32>
    %117 = math.exp %116 : vector<3x3xf32>
    %cst_30 = arith.constant dense<0.000000e+00> : vector<3xf32>
    %118 = vector.multi_reduction <add>, %117, %cst_30 [1] : vector<3x3xf32> to vector<3xf32>
    %119 = vector.shape_cast %118 : vector<3xf32> to vector<3x1xf32>
    %120 = tpu.reciprocal %119 {approx = true} : vector<3x1xf32> -> vector<3x1xf32>
    %121 = vector.broadcast %120 : vector<3x1xf32> to vector<3x3xf32>
    %122 = arith.mulf %117, %121 : vector<3x3xf32>
    %123 = arith.truncf %122 : vector<3x3xf32> to vector<3x3xbf16>
    %124 = arith.mulf %43, %107 : vector<3x32xf32>
    %125 = arith.truncf %124 : vector<3x32xf32> to vector<3x32xbf16>
    %cst_31 = arith.constant dense<0.000000e+00> : vector<3x32xf32>
    %126 = tpu.matmul %123, %125, %cst_31 {dimension_numbers = #tpu.dot_dimension_numbers<[1], [0], [0], [1], [0, 0, 1, 1], [], []>} : vector<3x3xbf16>, vector<3x32xbf16>, vector<3x32xf32> -> vector<3x32xf32>
    %127 = arith.addf %100, %126 : vector<3x32xf32>
    %c24_i32_32 = arith.constant 24 : i32
    %128 = vector.broadcast %c24_i32_32 : i32 to vector<3x32xi32>
    %129 = arith.cmpi sge, %45, %128 : vector<3x32xi32>
    %c32_i32 = arith.constant 32 : i32
    %130 = vector.broadcast %c32_i32 : i32 to vector<3x32xi32>
    %131 = arith.cmpi slt, %45, %130 : vector<3x32xi32>
    %132 = arith.andi %129, %131 : vector<3x32xi1>
    %133 = arith.extui %132 : vector<3x32xi1> to vector<3x32xi32>
    %134 = arith.sitofp %133 : vector<3x32xi32> to vector<3x32xf32>
    %135 = arith.mulf %41, %134 : vector<3x32xf32>
    %136 = arith.truncf %135 : vector<3x32xf32> to vector<3x32xbf16>
    %cst_33 = arith.constant dense<0.000000e+00> : vector<3x3xf32>
    %137 = tpu.matmul %136, %44, %cst_33 {dimension_numbers = #tpu.dot_dimension_numbers<[1], [1], [0], [0], [0, 0, 1, 0], [], []>} : vector<3x32xbf16>, vector<3x32xbf16>, vector<3x3xf32> -> vector<3x3xf32>
    %cst_34 = arith.constant 0.353553385 : f32
    %138 = vector.broadcast %cst_34 : f32 to vector<3x3xf32>
    %139 = arith.mulf %137, %138 : vector<3x3xf32>
    %cst_35 = arith.constant dense<0xFF800000> : vector<3xf32>
    %140 = vector.multi_reduction <maximumf>, %139, %cst_35 [1] : vector<3x3xf32> to vector<3xf32>
    %141 = vector.shape_cast %140 : vector<3xf32> to vector<3x1xf32>
    %142 = vector.broadcast %141 : vector<3x1xf32> to vector<3x3xf32>
    %143 = arith.subf %139, %142 : vector<3x3xf32>
    %144 = math.exp %143 : vector<3x3xf32>
    %cst_36 = arith.constant dense<0.000000e+00> : vector<3xf32>
    %145 = vector.multi_reduction <add>, %144, %cst_36 [1] : vector<3x3xf32> to vector<3xf32>
    %146 = vector.shape_cast %145 : vector<3xf32> to vector<3x1xf32>
    %147 = tpu.reciprocal %146 {approx = true} : vector<3x1xf32> -> vector<3x1xf32>
    %148 = vector.broadcast %147 : vector<3x1xf32> to vector<3x3xf32>
    %149 = arith.mulf %144, %148 : vector<3x3xf32>
    %150 = arith.truncf %149 : vector<3x3xf32> to vector<3x3xbf16>
    %151 = arith.mulf %43, %134 : vector<3x32xf32>
    %152 = arith.truncf %151 : vector<3x32xf32> to vector<3x32xbf16>
    %cst_37 = arith.constant dense<0.000000e+00> : vector<3x32xf32>
    %153 = tpu.matmul %150, %152, %cst_37 {dimension_numbers = #tpu.dot_dimension_numbers<[1], [0], [0], [1], [0, 0, 1, 1], [], []>} : vector<3x3xbf16>, vector<3x32xbf16>, vector<3x32xf32> -> vector<3x32xf32>
    %154 = arith.addf %127, %153 : vector<3x32xf32>
    %155 = arith.truncf %154 : vector<3x32xf32> to vector<3x32xbf16>
    %156 = arith.index_cast %arg1 : i32 to index
    %c0_38 = arith.constant 0 : index
    %c0_39 = arith.constant 0 : index
    %157 = vector.load %arg6[%156, %c0_38, %c0_39] : memref<2x32x32xbf16, #tpu.memory_space<vmem>>, vector<1x32x32xbf16>
    %158 = vector.shape_cast %157 : vector<1x32x32xbf16> to vector<32x32xbf16>
    %cst_40 = arith.constant dense<0.000000e+00> : vector<3x32xf32>
    %159 = tpu.matmul %155, %158, %cst_40 {dimension_numbers = #tpu.dot_dimension_numbers<[1], [0], [0], [1], [0, 0, 1, 1], [], []>} : vector<3x32xbf16>, vector<32x32xbf16>, vector<3x32xf32> -> vector<3x32xf32>
    %160 = arith.index_cast %arg1 : i32 to index
    %c0_41 = arith.constant 0 : index
    %c0_42 = arith.constant 0 : index
    %161 = vector.load %arg7[%160, %c0_41, %c0_42] : memref<2x1x32xf32, #tpu.memory_space<vmem>>, vector<1x1x32xf32>
    %162 = vector.shape_cast %161 : vector<1x1x32xf32> to vector<1x32xf32>
    %163 = vector.broadcast %162 : vector<1x32xf32> to vector<3x32xf32>
    %164 = arith.addf %159, %163 : vector<3x32xf32>
    %165 = arith.addf %3, %164 : vector<3x32xf32>
    %cst_43 = arith.constant dense<0.000000e+00> : vector<3xf32>
    %166 = vector.multi_reduction <add>, %165, %cst_43 [1] : vector<3x32xf32> to vector<3xf32>
    %167 = vector.shape_cast %166 : vector<3xf32> to vector<3x1xf32>
    %cst_44 = arith.constant 3.200000e+01 : f32
    %168 = vector.broadcast %cst_44 : f32 to vector<3x1xf32>
    %169 = arith.divf %167, %168 : vector<3x1xf32>
    %170 = vector.broadcast %169 : vector<3x1xf32> to vector<3x32xf32>
    %171 = arith.subf %165, %170 : vector<3x32xf32>
    %172 = arith.mulf %171, %171 : vector<3x32xf32>
    %cst_45 = arith.constant dense<0.000000e+00> : vector<3xf32>
    %173 = vector.multi_reduction <add>, %172, %cst_45 [1] : vector<3x32xf32> to vector<3xf32>
    %174 = vector.shape_cast %173 : vector<3xf32> to vector<3x1xf32>
    %cst_46 = arith.constant 3.200000e+01 : f32
    %175 = vector.broadcast %cst_46 : f32 to vector<3x1xf32>
    %176 = arith.divf %174, %175 : vector<3x1xf32>
    %cst_47 = arith.constant 9.99999974E-6 : f32
    %177 = vector.broadcast %cst_47 : f32 to vector<3x1xf32>
    %178 = arith.addf %176, %177 : vector<3x1xf32>
    %179 = math.rsqrt %178 : vector<3x1xf32>
    %180 = vector.broadcast %179 : vector<3x1xf32> to vector<3x32xf32>
    %181 = arith.mulf %171, %180 : vector<3x32xf32>
    %182 = vector.broadcast %9 : vector<1x32xf32> to vector<3x32xf32>
    %183 = arith.mulf %181, %182 : vector<3x32xf32>
    %184 = vector.broadcast %10 : vector<1x32xf32> to vector<3x32xf32>
    %185 = arith.addf %183, %184 : vector<3x32xf32>
    %186 = arith.truncf %185 : vector<3x32xf32> to vector<3x32xbf16>
    %187 = arith.index_cast %arg1 : i32 to index
    %c0_48 = arith.constant 0 : index
    %c0_49 = arith.constant 0 : index
    %188 = vector.load %arg8[%187, %c0_48, %c0_49] : memref<2x32x128xbf16, #tpu.memory_space<vmem>>, vector<1x32x128xbf16>
    %189 = vector.shape_cast %188 : vector<1x32x128xbf16> to vector<32x128xbf16>
    %cst_50 = arith.constant dense<0.000000e+00> : vector<3x128xf32>
    %190 = tpu.matmul %186, %189, %cst_50 {dimension_numbers = #tpu.dot_dimension_numbers<[1], [0], [0], [1], [0, 0, 1, 1], [], []>} : vector<3x32xbf16>, vector<32x128xbf16>, vector<3x128xf32> -> vector<3x128xf32>
    %191 = arith.index_cast %arg1 : i32 to index
    %c0_51 = arith.constant 0 : index
    %c0_52 = arith.constant 0 : index
    %192 = vector.load %arg9[%191, %c0_51, %c0_52] : memref<2x1x128xf32, #tpu.memory_space<vmem>>, vector<1x1x128xf32>
    %193 = vector.shape_cast %192 : vector<1x1x128xf32> to vector<1x128xf32>
    %194 = vector.broadcast %193 : vector<1x128xf32> to vector<3x128xf32>
    %195 = arith.addf %190, %194 : vector<3x128xf32>
    %cst_53 = arith.constant 5.000000e-01 : f32
    %196 = vector.broadcast %cst_53 : f32 to vector<3x128xf32>
    %197 = arith.mulf %196, %195 : vector<3x128xf32>
    %cst_54 = arith.constant 0.707106769 : f32
    %198 = vector.broadcast %cst_54 : f32 to vector<3x128xf32>
    %199 = arith.mulf %195, %198 : vector<3x128xf32>
    %200 = math.absf %199 : vector<3x128xf32>
    %cst_55 = arith.constant 0.327591091 : f32
    %201 = vector.broadcast %cst_55 : f32 to vector<3x128xf32>
    %202 = arith.mulf %201, %200 : vector<3x128xf32>
    %cst_56 = arith.constant 1.000000e+00 : f32
    %203 = vector.broadcast %cst_56 : f32 to vector<3x128xf32>
    %204 = arith.addf %203, %202 : vector<3x128xf32>
    %cst_57 = arith.constant 1.000000e+00 : f32
    %205 = vector.broadcast %cst_57 : f32 to vector<3x128xf32>
    %206 = arith.divf %205, %204 : vector<3x128xf32>
    %cst_58 = arith.constant 1.06140542 : f32
    %207 = vector.broadcast %cst_58 : f32 to vector<3x128xf32>
    %208 = arith.mulf %207, %206 : vector<3x128xf32>
    %cst_59 = arith.constant -1.45315206 : f32
    %209 = vector.broadcast %cst_59 : f32 to vector<3x128xf32>
    %210 = arith.addf %208, %209 : vector<3x128xf32>
    %211 = arith.mulf %210, %206 : vector<3x128xf32>
    %cst_60 = arith.constant 1.42141378 : f32
    %212 = vector.broadcast %cst_60 : f32 to vector<3x128xf32>
    %213 = arith.addf %211, %212 : vector<3x128xf32>
    %214 = arith.mulf %213, %206 : vector<3x128xf32>
    %cst_61 = arith.constant -0.284496725 : f32
    %215 = vector.broadcast %cst_61 : f32 to vector<3x128xf32>
    %216 = arith.addf %214, %215 : vector<3x128xf32>
    %217 = arith.mulf %216, %206 : vector<3x128xf32>
    %cst_62 = arith.constant 0.254829586 : f32
    %218 = vector.broadcast %cst_62 : f32 to vector<3x128xf32>
    %219 = arith.addf %217, %218 : vector<3x128xf32>
    %220 = arith.mulf %219, %206 : vector<3x128xf32>
    %cst_63 = arith.constant 0.000000e+00 : f32
    %221 = vector.broadcast %cst_63 : f32 to vector<3x128xf32>
    %222 = arith.subf %221, %200 : vector<3x128xf32>
    %223 = arith.mulf %222, %200 : vector<3x128xf32>
    %224 = math.exp %223 : vector<3x128xf32>
    %225 = arith.mulf %220, %224 : vector<3x128xf32>
    %cst_64 = arith.constant 1.000000e+00 : f32
    %226 = vector.broadcast %cst_64 : f32 to vector<3x128xf32>
    %227 = arith.subf %226, %225 : vector<3x128xf32>
    %cst_65 = arith.constant 0.000000e+00 : f32
    %228 = vector.broadcast %cst_65 : f32 to vector<3x128xf32>
    %229 = arith.cmpf oge, %199, %228 : vector<3x128xf32>
    %cst_66 = arith.constant 0.000000e+00 : f32
    %230 = vector.broadcast %cst_66 : f32 to vector<3x128xf32>
    %231 = arith.subf %230, %227 : vector<3x128xf32>
    %232 = arith.select %229, %227, %231 : vector<3x128xi1>, vector<3x128xf32>
    %cst_67 = arith.constant 1.000000e+00 : f32
    %233 = vector.broadcast %cst_67 : f32 to vector<3x128xf32>
    %234 = arith.addf %233, %232 : vector<3x128xf32>
    %235 = arith.mulf %197, %234 : vector<3x128xf32>
    %236 = arith.truncf %235 : vector<3x128xf32> to vector<3x128xbf16>
    %237 = arith.index_cast %arg1 : i32 to index
    %c0_68 = arith.constant 0 : index
    %c0_69 = arith.constant 0 : index
    %238 = vector.load %arg10[%237, %c0_68, %c0_69] : memref<2x128x32xbf16, #tpu.memory_space<vmem>>, vector<1x128x32xbf16>
    %239 = vector.shape_cast %238 : vector<1x128x32xbf16> to vector<128x32xbf16>
    %cst_70 = arith.constant dense<0.000000e+00> : vector<3x32xf32>
    %240 = tpu.matmul %236, %239, %cst_70 {dimension_numbers = #tpu.dot_dimension_numbers<[1], [0], [0], [1], [0, 0, 1, 1], [], []>} : vector<3x128xbf16>, vector<128x32xbf16>, vector<3x32xf32> -> vector<3x32xf32>
    %241 = arith.index_cast %arg1 : i32 to index
    %c0_71 = arith.constant 0 : index
    %c0_72 = arith.constant 0 : index
    %242 = vector.load %arg11[%241, %c0_71, %c0_72] : memref<2x1x32xf32, #tpu.memory_space<vmem>>, vector<1x1x32xf32>
    %243 = vector.shape_cast %242 : vector<1x1x32xf32> to vector<1x32xf32>
    %244 = vector.broadcast %243 : vector<1x32xf32> to vector<3x32xf32>
    %245 = arith.addf %240, %244 : vector<3x32xf32>
    %246 = arith.addf %165, %245 : vector<3x32xf32>
    %c1_i32 = arith.constant 1 : i32
    %247 = arith.cmpi slt, %arg1, %c1_i32 : i32
    %248 = arith.extui %247 : i1 to i32
    %c0_i32_73 = arith.constant 0 : i32
    %249 = arith.cmpi ne, %248, %c0_i32_73 : i32
    scf.if %249 {
      %c0_76 = arith.constant 0 : index
      %c0_77 = arith.constant 0 : index
      %253 = vector.load %arg14[%c0_76, %c0_77] : memref<3x32xf32, #tpu.memory_space<vmem>>, vector<3x32xf32>
      tpu.vector_store %arg14[%c0_76, %c0_77], %246 {strides = array<i32>} : memref<3x32xf32, #tpu.memory_space<vmem>>, vector<3x32xf32>,
    } else {
    }
    %c1_i32_74 = arith.constant 1 : i32
    %250 = arith.cmpi eq, %arg1, %c1_i32_74 : i32
    %251 = arith.extui %250 : i1 to i32
    %c0_i32_75 = arith.constant 0 : i32
    %252 = arith.cmpi ne, %251, %c0_i32_75 : i32
    scf.if %252 {
      %c0_76 = arith.constant 0 : index
      %c0_77 = arith.constant 0 : index
      %253 = vector.load %arg12[%c0_76, %c0_77] : memref<2x32xf32, #tpu.memory_space<vmem>>, vector<2x32xf32>
      %254 = vector.extract_strided_slice %253 {offsets = [0, 0], sizes = [1, 32], strides = [1, 1]} : vector<2x32xf32> to vector<1x32xf32>
      %255 = vector.extract_strided_slice %253 {offsets = [1, 0], sizes = [1, 32], strides = [1, 1]} : vector<2x32xf32> to vector<1x32xf32>
      %cst_78 = arith.constant dense<0.000000e+00> : vector<3xf32>
      %256 = vector.multi_reduction <add>, %246, %cst_78 [1] : vector<3x32xf32> to vector<3xf32>
      %257 = vector.shape_cast %256 : vector<3xf32> to vector<3x1xf32>
      %cst_79 = arith.constant 3.200000e+01 : f32
      %258 = vector.broadcast %cst_79 : f32 to vector<3x1xf32>
      %259 = arith.divf %257, %258 : vector<3x1xf32>
      %260 = vector.broadcast %259 : vector<3x1xf32> to vector<3x32xf32>
      %261 = arith.subf %246, %260 : vector<3x32xf32>
      %262 = arith.mulf %261, %261 : vector<3x32xf32>
      %cst_80 = arith.constant dense<0.000000e+00> : vector<3xf32>
      %263 = vector.multi_reduction <add>, %262, %cst_80 [1] : vector<3x32xf32> to vector<3xf32>
      %264 = vector.shape_cast %263 : vector<3xf32> to vector<3x1xf32>
      %cst_81 = arith.constant 3.200000e+01 : f32
      %265 = vector.broadcast %cst_81 : f32 to vector<3x1xf32>
      %266 = arith.divf %264, %265 : vector<3x1xf32>
      %cst_82 = arith.constant 9.99999974E-6 : f32
      %267 = vector.broadcast %cst_82 : f32 to vector<3x1xf32>
      %268 = arith.addf %266, %267 : vector<3x1xf32>
      %269 = math.rsqrt %268 : vector<3x1xf32>
      %270 = vector.broadcast %269 : vector<3x1xf32> to vector<3x32xf32>
      %271 = arith.mulf %261, %270 : vector<3x32xf32>
      %272 = vector.broadcast %254 : vector<1x32xf32> to vector<3x32xf32>
      %273 = arith.mulf %271, %272 : vector<3x32xf32>
      %274 = vector.broadcast %255 : vector<1x32xf32> to vector<3x32xf32>
      %275 = arith.addf %273, %274 : vector<3x32xf32>
      %276 = arith.truncf %275 : vector<3x32xf32> to vector<3x32xbf16>
      %c0_83 = arith.constant 0 : index
      %c0_84 = arith.constant 0 : index
      %c0_85 = arith.constant 0 : index
      %277 = vector.load %arg13[%c0_83, %c0_84, %c0_85] : memref<1x3x32xbf16, #tpu.memory_space<vmem>>, vector<1x3x32xbf16>
      %278 = vector.shape_cast %277 : vector<1x3x32xbf16> to vector<3x32xbf16>
      %279 = vector.shape_cast %276 : vector<3x32xbf16> to vector<1x3x32xbf16>
      tpu.vector_store %arg13[%c0_83, %c0_84, %c0_85], %279 {strides = array<i32>} : memref<1x3x32xbf16, #tpu.memory_space<vmem>>, vector<1x3x32xbf16>,
    } else {
    }
    return
  }
  func.func @transform_0(%arg0: i32, %arg1: i32) -> (i32, i32, i32) {
    %c0_i32 = arith.constant 0 : i32
    %c0_i32_0 = arith.constant 0 : i32
    %c0_i32_1 = arith.constant 0 : i32
    return %arg0, %c0_i32, %c0_i32_0 : i32, i32, i32
  }
  func.func @transform_1(%arg0: i32, %arg1: i32) -> (i32, i32, i32) {
    %c0_i32 = arith.constant 0 : i32
    %c0_i32_0 = arith.constant 0 : i32
    %c0_i32_1 = arith.constant 0 : i32
    %c0_i32_2 = arith.constant 0 : i32
    return %c0_i32, %c0_i32_0, %c0_i32_1 : i32, i32, i32
  }
  func.func @transform_2(%arg0: i32, %arg1: i32) -> (i32, i32, i32) {
    %c0_i32 = arith.constant 0 : i32
    %c0_i32_0 = arith.constant 0 : i32
    %c0_i32_1 = arith.constant 0 : i32
    %c0_i32_2 = arith.constant 0 : i32
    return %c0_i32, %c0_i32_0, %c0_i32_1 : i32, i32, i32
  }
  func.func @transform_3(%arg0: i32, %arg1: i32) -> (i32, i32, i32) {
    %c0_i32 = arith.constant 0 : i32
    %c0_i32_0 = arith.constant 0 : i32
    %c0_i32_1 = arith.constant 0 : i32
    %c0_i32_2 = arith.constant 0 : i32
    return %c0_i32, %c0_i32_0, %c0_i32_1 : i32, i32, i32
  }
  func.func @transform_4(%arg0: i32, %arg1: i32) -> (i32, i32, i32) {
    %c0_i32 = arith.constant 0 : i32
    %c0_i32_0 = arith.constant 0 : i32
    %c0_i32_1 = arith.constant 0 : i32
    %c0_i32_2 = arith.constant 0 : i32
    return %c0_i32, %c0_i32_0, %c0_i32_1 : i32, i32, i32
  }
  func.func @transform_5(%arg0: i32, %arg1: i32) -> (i32, i32, i32) {
    %c0_i32 = arith.constant 0 : i32
    %c0_i32_0 = arith.constant 0 : i32
    %c0_i32_1 = arith.constant 0 : i32
    %c0_i32_2 = arith.constant 0 : i32
    return %c0_i32, %c0_i32_0, %c0_i32_1 : i32, i32, i32
  }
  func.func @transform_6(%arg0: i32, %arg1: i32) -> (i32, i32, i32) {
    %c0_i32 = arith.constant 0 : i32
    %c0_i32_0 = arith.constant 0 : i32
    %c0_i32_1 = arith.constant 0 : i32
    %c0_i32_2 = arith.constant 0 : i32
    return %c0_i32, %c0_i32_0, %c0_i32_1 : i32, i32, i32
  }
  func.func @transform_7(%arg0: i32, %arg1: i32) -> (i32, i32, i32) {
    %c0_i32 = arith.constant 0 : i32
    %c0_i32_0 = arith.constant 0 : i32
    %c0_i32_1 = arith.constant 0 : i32
    %c0_i32_2 = arith.constant 0 : i32
    return %c0_i32, %c0_i32_0, %c0_i32_1 : i32, i32, i32
  }
  func.func @transform_8(%arg0: i32, %arg1: i32) -> (i32, i32, i32) {
    %c0_i32 = arith.constant 0 : i32
    %c0_i32_0 = arith.constant 0 : i32
    %c0_i32_1 = arith.constant 0 : i32
    %c0_i32_2 = arith.constant 0 : i32
    return %c0_i32, %c0_i32_0, %c0_i32_1 : i32, i32, i32
  }
  func.func @transform_9(%arg0: i32, %arg1: i32) -> (i32, i32, i32) {
    %c0_i32 = arith.constant 0 : i32
    %c0_i32_0 = arith.constant 0 : i32
    %c0_i32_1 = arith.constant 0 : i32
    %c0_i32_2 = arith.constant 0 : i32
    return %c0_i32, %c0_i32_0, %c0_i32_1 : i32, i32, i32
  }
  func.func @transform_10(%arg0: i32, %arg1: i32) -> (i32, i32) {
    %c0_i32 = arith.constant 0 : i32
    %c0_i32_0 = arith.constant 0 : i32
    %c0_i32_1 = arith.constant 0 : i32
    return %c0_i32, %c0_i32_0 : i32, i32
  }
  func.func @transform_11(%arg0: i32, %arg1: i32) -> (i32, i32, i32) {
    %c0_i32 = arith.constant 0 : i32
    %c0_i32_0 = arith.constant 0 : i32
    %c0_i32_1 = arith.constant 0 : i32
    return %arg0, %c0_i32, %c0_i32_0 : i32, i32, i32
  }
}

module attributes {stable_mosaic.version = 11 : i64} {
  func.func @_linear_kernel(%arg0: i32, %arg1: memref<6x32xbf16, #tpu.memory_space<vmem>>, %arg2: memref<32x32xbf16, #tpu.memory_space<vmem>>, %arg3: memref<1x32xf32, #tpu.memory_space<vmem>>, %arg4: memref<6x32xf32, #tpu.memory_space<vmem>>) attributes {dimension_semantics = [#tpu.dimension_semantics<arbitrary>], iteration_bounds = array<i64: 1>, scalar_prefetch = 0 : i64, scratch_operands = 0 : i64, tpu.core_type = #tpu.core_type<tc>, window_params = [{pipeline_mode = #tpu.pipeline_mode<synchronous>, transform_indices = @transform_0, window_bounds = array<i64: 6, 32>}, {pipeline_mode = #tpu.pipeline_mode<synchronous>, transform_indices = @transform_1, window_bounds = array<i64: 32, 32>}, {pipeline_mode = #tpu.pipeline_mode<synchronous>, transform_indices = @transform_2, window_bounds = array<i64: 1, 32>}, {pipeline_mode = #tpu.pipeline_mode<synchronous>, transform_indices = @transform_3, window_bounds = array<i64: 6, 32>}]} {
    %c0 = arith.constant 0 : index
    %c0_0 = arith.constant 0 : index
    %0 = vector.load %arg1[%c0, %c0_0] : memref<6x32xbf16, #tpu.memory_space<vmem>>, vector<6x32xbf16>
    %c0_1 = arith.constant 0 : index
    %c0_2 = arith.constant 0 : index
    %1 = vector.load %arg2[%c0_1, %c0_2] : memref<32x32xbf16, #tpu.memory_space<vmem>>, vector<32x32xbf16>
    %cst = arith.constant dense<0.000000e+00> : vector<6x32xf32>
    %2 = tpu.matmul %0, %1, %cst {dimension_numbers = #tpu.dot_dimension_numbers<[1], [0], [0], [1], [0, 0, 1, 1], [], []>} : vector<6x32xbf16>, vector<32x32xbf16>, vector<6x32xf32> -> vector<6x32xf32>
    %c0_3 = arith.constant 0 : index
    %c0_4 = arith.constant 0 : index
    %3 = vector.load %arg3[%c0_3, %c0_4] : memref<1x32xf32, #tpu.memory_space<vmem>>, vector<1x32xf32>
    %4 = vector.broadcast %3 : vector<1x32xf32> to vector<6x32xf32>
    %5 = arith.addf %2, %4 : vector<6x32xf32>
    %c0_5 = arith.constant 0 : index
    %c0_6 = arith.constant 0 : index
    %6 = vector.load %arg4[%c0_5, %c0_6] : memref<6x32xf32, #tpu.memory_space<vmem>>, vector<6x32xf32>
    tpu.vector_store %arg4[%c0_5, %c0_6], %5 {strides = array<i32>} : memref<6x32xf32, #tpu.memory_space<vmem>>, vector<6x32xf32>,
    return
  }
  func.func @transform_0(%arg0: i32) -> (i32, i32) {
    %c0_i32 = arith.constant 0 : i32
    %c0_i32_0 = arith.constant 0 : i32
    %c0_i32_1 = arith.constant 0 : i32
    return %c0_i32, %c0_i32_0 : i32, i32
  }
  func.func @transform_1(%arg0: i32) -> (i32, i32) {
    %c0_i32 = arith.constant 0 : i32
    %c0_i32_0 = arith.constant 0 : i32
    %c0_i32_1 = arith.constant 0 : i32
    return %c0_i32, %c0_i32_0 : i32, i32
  }
  func.func @transform_2(%arg0: i32) -> (i32, i32) {
    %c0_i32 = arith.constant 0 : i32
    %c0_i32_0 = arith.constant 0 : i32
    %c0_i32_1 = arith.constant 0 : i32
    return %c0_i32, %c0_i32_0 : i32, i32
  }
  func.func @transform_3(%arg0: i32) -> (i32, i32) {
    %c0_i32 = arith.constant 0 : i32
    %c0_i32_0 = arith.constant 0 : i32
    %c0_i32_1 = arith.constant 0 : i32
    return %c0_i32, %c0_i32_0 : i32, i32
  }
}

module attributes {stable_mosaic.version = 11 : i64} {
  func.func @_block_stack_kernel(%arg0: i32, %arg1: i32, %arg2: memref<1x9x32xf32, #tpu.memory_space<vmem>>, %arg3: memref<9x32xf32, #tpu.memory_space<vmem>>, %arg4: memref<1x4x32xf32, #tpu.memory_space<vmem>>, %arg5: memref<1x32x96xbf16, #tpu.memory_space<vmem>>, %arg6: memref<1x1x96xf32, #tpu.memory_space<vmem>>, %arg7: memref<1x32x32xbf16, #tpu.memory_space<vmem>>, %arg8: memref<1x1x32xf32, #tpu.memory_space<vmem>>, %arg9: memref<1x32x128xbf16, #tpu.memory_space<vmem>>, %arg10: memref<1x1x128xf32, #tpu.memory_space<vmem>>, %arg11: memref<1x128x32xbf16, #tpu.memory_space<vmem>>, %arg12: memref<1x1x32xf32, #tpu.memory_space<vmem>>, %arg13: memref<2x32xf32, #tpu.memory_space<vmem>>, %arg14: memref<1x9x32xbf16, #tpu.memory_space<vmem>>, %arg15: memref<9x32xf32, #tpu.memory_space<vmem>>) attributes {dimension_semantics = [#tpu.dimension_semantics<parallel>, #tpu.dimension_semantics<arbitrary>], iteration_bounds = array<i64: 2, 1>, scalar_prefetch = 0 : i64, scratch_operands = 1 : i64, tpu.core_type = #tpu.core_type<tc>, window_params = [{transform_indices = @transform_0, window_bounds = array<i64: 1, 9, 32>}, {pipeline_mode = #tpu.pipeline_mode<synchronous>, transform_indices = @transform_1, window_bounds = array<i64: 9, 32>}, {pipeline_mode = #tpu.pipeline_mode<synchronous>, transform_indices = @transform_2, window_bounds = array<i64: 1, 4, 32>}, {pipeline_mode = #tpu.pipeline_mode<synchronous>, transform_indices = @transform_3, window_bounds = array<i64: 1, 32, 96>}, {pipeline_mode = #tpu.pipeline_mode<synchronous>, transform_indices = @transform_4, window_bounds = array<i64: 1, 1, 96>}, {pipeline_mode = #tpu.pipeline_mode<synchronous>, transform_indices = @transform_5, window_bounds = array<i64: 1, 32, 32>}, {pipeline_mode = #tpu.pipeline_mode<synchronous>, transform_indices = @transform_6, window_bounds = array<i64: 1, 1, 32>}, {pipeline_mode = #tpu.pipeline_mode<synchronous>, transform_indices = @transform_7, window_bounds = array<i64: 1, 32, 128>}, {pipeline_mode = #tpu.pipeline_mode<synchronous>, transform_indices = @transform_8, window_bounds = array<i64: 1, 1, 128>}, {pipeline_mode = #tpu.pipeline_mode<synchronous>, transform_indices = @transform_9, window_bounds = array<i64: 1, 128, 32>}, {pipeline_mode = #tpu.pipeline_mode<synchronous>, transform_indices = @transform_10, window_bounds = array<i64: 1, 1, 32>}, {pipeline_mode = #tpu.pipeline_mode<synchronous>, transform_indices = @transform_11, window_bounds = array<i64: 2, 32>}, {transform_indices = @transform_12, window_bounds = array<i64: 1, 9, 32>}]} {
    %c0_i32 = arith.constant 0 : i32
    %0 = arith.cmpi eq, %arg1, %c0_i32 : i32
    %1 = arith.extui %0 : i1 to i32
    %c0_i32_0 = arith.constant 0 : i32
    %2 = arith.cmpi ne, %1, %c0_i32_0 : i32
    scf.if %2 {
      %c0_77 = arith.constant 0 : index
      %c0_78 = arith.constant 0 : index
      %c0_79 = arith.constant 0 : index
      %253 = vector.load %arg2[%c0_77, %c0_78, %c0_79] : memref<1x9x32xf32, #tpu.memory_space<vmem>>, vector<1x9x32xf32>
      %254 = vector.shape_cast %253 : vector<1x9x32xf32> to vector<9x32xf32>
      %c0_80 = arith.constant 0 : index
      %c0_81 = arith.constant 0 : index
      %255 = vector.load %arg3[%c0_80, %c0_81] : memref<9x32xf32, #tpu.memory_space<vmem>>, vector<9x32xf32>
      %256 = arith.addf %254, %255 : vector<9x32xf32>
      %c0_82 = arith.constant 0 : index
      %c0_83 = arith.constant 0 : index
      %257 = vector.load %arg15[%c0_82, %c0_83] : memref<9x32xf32, #tpu.memory_space<vmem>>, vector<9x32xf32>
      tpu.vector_store %arg15[%c0_82, %c0_83], %256 {strides = array<i32>} : memref<9x32xf32, #tpu.memory_space<vmem>>, vector<9x32xf32>,
    } else {
    }
    %c0 = arith.constant 0 : index
    %c0_1 = arith.constant 0 : index
    %3 = vector.load %arg15[%c0, %c0_1] : memref<9x32xf32, #tpu.memory_space<vmem>>, vector<9x32xf32>
    %4 = arith.index_cast %arg1 : i32 to index
    %c0_2 = arith.constant 0 : index
    %c0_3 = arith.constant 0 : index
    %5 = vector.load %arg4[%4, %c0_2, %c0_3] : memref<1x4x32xf32, #tpu.memory_space<vmem>>, vector<1x4x32xf32>
    %6 = vector.shape_cast %5 : vector<1x4x32xf32> to vector<4x32xf32>
    %7 = vector.extract_strided_slice %6 {offsets = [0, 0], sizes = [1, 32], strides = [1, 1]} : vector<4x32xf32> to vector<1x32xf32>
    %8 = vector.extract_strided_slice %6 {offsets = [1, 0], sizes = [1, 32], strides = [1, 1]} : vector<4x32xf32> to vector<1x32xf32>
    %9 = vector.extract_strided_slice %6 {offsets = [2, 0], sizes = [1, 32], strides = [1, 1]} : vector<4x32xf32> to vector<1x32xf32>
    %10 = vector.extract_strided_slice %6 {offsets = [3, 0], sizes = [1, 32], strides = [1, 1]} : vector<4x32xf32> to vector<1x32xf32>
    %cst = arith.constant dense<0.000000e+00> : vector<9xf32>
    %11 = vector.multi_reduction <add>, %3, %cst [1] : vector<9x32xf32> to vector<9xf32>
    %12 = vector.shape_cast %11 : vector<9xf32> to vector<9x1xf32>
    %cst_4 = arith.constant 3.200000e+01 : f32
    %13 = vector.broadcast %cst_4 : f32 to vector<9x1xf32>
    %14 = arith.divf %12, %13 : vector<9x1xf32>
    %15 = vector.broadcast %14 : vector<9x1xf32> to vector<9x32xf32>
    %16 = arith.subf %3, %15 : vector<9x32xf32>
    %17 = arith.mulf %16, %16 : vector<9x32xf32>
    %cst_5 = arith.constant dense<0.000000e+00> : vector<9xf32>
    %18 = vector.multi_reduction <add>, %17, %cst_5 [1] : vector<9x32xf32> to vector<9xf32>
    %19 = vector.shape_cast %18 : vector<9xf32> to vector<9x1xf32>
    %cst_6 = arith.constant 3.200000e+01 : f32
    %20 = vector.broadcast %cst_6 : f32 to vector<9x1xf32>
    %21 = arith.divf %19, %20 : vector<9x1xf32>
    %cst_7 = arith.constant 9.99999974E-6 : f32
    %22 = vector.broadcast %cst_7 : f32 to vector<9x1xf32>
    %23 = arith.addf %21, %22 : vector<9x1xf32>
    %24 = math.rsqrt %23 : vector<9x1xf32>
    %25 = vector.broadcast %24 : vector<9x1xf32> to vector<9x32xf32>
    %26 = arith.mulf %16, %25 : vector<9x32xf32>
    %27 = vector.broadcast %7 : vector<1x32xf32> to vector<9x32xf32>
    %28 = arith.mulf %26, %27 : vector<9x32xf32>
    %29 = vector.broadcast %8 : vector<1x32xf32> to vector<9x32xf32>
    %30 = arith.addf %28, %29 : vector<9x32xf32>
    %31 = arith.truncf %30 : vector<9x32xf32> to vector<9x32xbf16>
    %32 = arith.index_cast %arg1 : i32 to index
    %c0_8 = arith.constant 0 : index
    %c0_9 = arith.constant 0 : index
    %33 = vector.load %arg5[%32, %c0_8, %c0_9] : memref<1x32x96xbf16, #tpu.memory_space<vmem>>, vector<1x32x96xbf16>
    %34 = vector.shape_cast %33 : vector<1x32x96xbf16> to vector<32x96xbf16>
    %cst_10 = arith.constant dense<0.000000e+00> : vector<9x96xf32>
    %35 = tpu.matmul %31, %34, %cst_10 {dimension_numbers = #tpu.dot_dimension_numbers<[1], [0], [0], [1], [0, 0, 1, 1], [], []>} : vector<9x32xbf16>, vector<32x96xbf16>, vector<9x96xf32> -> vector<9x96xf32>
    %36 = arith.index_cast %arg1 : i32 to index
    %c0_11 = arith.constant 0 : index
    %c0_12 = arith.constant 0 : index
    %37 = vector.load %arg6[%36, %c0_11, %c0_12] : memref<1x1x96xf32, #tpu.memory_space<vmem>>, vector<1x1x96xf32>
    %38 = vector.shape_cast %37 : vector<1x1x96xf32> to vector<1x96xf32>
    %39 = vector.broadcast %38 : vector<1x96xf32> to vector<9x96xf32>
    %40 = arith.addf %35, %39 : vector<9x96xf32>
    %41 = vector.extract_strided_slice %40 {offsets = [0, 0], sizes = [9, 32], strides = [1, 1]} : vector<9x96xf32> to vector<9x32xf32>
    %42 = vector.extract_strided_slice %40 {offsets = [0, 32], sizes = [9, 32], strides = [1, 1]} : vector<9x96xf32> to vector<9x32xf32>
    %43 = vector.extract_strided_slice %40 {offsets = [0, 64], sizes = [9, 32], strides = [1, 1]} : vector<9x96xf32> to vector<9x32xf32>
    %44 = arith.truncf %42 : vector<9x32xf32> to vector<9x32xbf16>
    %45 = tpu.iota {dimensions = array<i32: 1>} : vector<9x32xi32>
    %cst_13 = arith.constant 0.000000e+00 : f32
    %46 = vector.broadcast %cst_13 : f32 to vector<9x32xf32>
    %c0_i32_14 = arith.constant 0 : i32
    %47 = vector.broadcast %c0_i32_14 : i32 to vector<9x32xi32>
    %48 = arith.cmpi sge, %45, %47 : vector<9x32xi32>
    %c8_i32 = arith.constant 8 : i32
    %49 = vector.broadcast %c8_i32 : i32 to vector<9x32xi32>
    %50 = arith.cmpi slt, %45, %49 : vector<9x32xi32>
    %51 = arith.andi %48, %50 : vector<9x32xi1>
    %52 = arith.extui %51 : vector<9x32xi1> to vector<9x32xi32>
    %53 = arith.sitofp %52 : vector<9x32xi32> to vector<9x32xf32>
    %54 = arith.mulf %41, %53 : vector<9x32xf32>
    %55 = arith.truncf %54 : vector<9x32xf32> to vector<9x32xbf16>
    %cst_15 = arith.constant dense<0.000000e+00> : vector<9x9xf32>
    %56 = tpu.matmul %55, %44, %cst_15 {dimension_numbers = #tpu.dot_dimension_numbers<[1], [1], [0], [0], [0, 0, 1, 0], [], []>} : vector<9x32xbf16>, vector<9x32xbf16>, vector<9x9xf32> -> vector<9x9xf32>
    %cst_16 = arith.constant 0.353553385 : f32
    %57 = vector.broadcast %cst_16 : f32 to vector<9x9xf32>
    %58 = arith.mulf %56, %57 : vector<9x9xf32>
    %cst_17 = arith.constant dense<0xFF800000> : vector<9xf32>
    %59 = vector.multi_reduction <maximumf>, %58, %cst_17 [1] : vector<9x9xf32> to vector<9xf32>
    %60 = vector.shape_cast %59 : vector<9xf32> to vector<9x1xf32>
    %61 = vector.broadcast %60 : vector<9x1xf32> to vector<9x9xf32>
    %62 = arith.subf %58, %61 : vector<9x9xf32>
    %63 = math.exp %62 : vector<9x9xf32>
    %cst_18 = arith.constant dense<0.000000e+00> : vector<9xf32>
    %64 = vector.multi_reduction <add>, %63, %cst_18 [1] : vector<9x9xf32> to vector<9xf32>
    %65 = vector.shape_cast %64 : vector<9xf32> to vector<9x1xf32>
    %66 = tpu.reciprocal %65 {approx = true} : vector<9x1xf32> -> vector<9x1xf32>
    %67 = vector.broadcast %66 : vector<9x1xf32> to vector<9x9xf32>
    %68 = arith.mulf %63, %67 : vector<9x9xf32>
    %69 = arith.truncf %68 : vector<9x9xf32> to vector<9x9xbf16>
    %70 = arith.mulf %43, %53 : vector<9x32xf32>
    %71 = arith.truncf %70 : vector<9x32xf32> to vector<9x32xbf16>
    %cst_19 = arith.constant dense<0.000000e+00> : vector<9x32xf32>
    %72 = tpu.matmul %69, %71, %cst_19 {dimension_numbers = #tpu.dot_dimension_numbers<[1], [0], [0], [1], [0, 0, 1, 1], [], []>} : vector<9x9xbf16>, vector<9x32xbf16>, vector<9x32xf32> -> vector<9x32xf32>
    %73 = arith.addf %46, %72 : vector<9x32xf32>
    %c8_i32_20 = arith.constant 8 : i32
    %74 = vector.broadcast %c8_i32_20 : i32 to vector<9x32xi32>
    %75 = arith.cmpi sge, %45, %74 : vector<9x32xi32>
    %c16_i32 = arith.constant 16 : i32
    %76 = vector.broadcast %c16_i32 : i32 to vector<9x32xi32>
    %77 = arith.cmpi slt, %45, %76 : vector<9x32xi32>
    %78 = arith.andi %75, %77 : vector<9x32xi1>
    %79 = arith.extui %78 : vector<9x32xi1> to vector<9x32xi32>
    %80 = arith.sitofp %79 : vector<9x32xi32> to vector<9x32xf32>
    %81 = arith.mulf %41, %80 : vector<9x32xf32>
    %82 = arith.truncf %81 : vector<9x32xf32> to vector<9x32xbf16>
    %cst_21 = arith.constant dense<0.000000e+00> : vector<9x9xf32>
    %83 = tpu.matmul %82, %44, %cst_21 {dimension_numbers = #tpu.dot_dimension_numbers<[1], [1], [0], [0], [0, 0, 1, 0], [], []>} : vector<9x32xbf16>, vector<9x32xbf16>, vector<9x9xf32> -> vector<9x9xf32>
    %cst_22 = arith.constant 0.353553385 : f32
    %84 = vector.broadcast %cst_22 : f32 to vector<9x9xf32>
    %85 = arith.mulf %83, %84 : vector<9x9xf32>
    %cst_23 = arith.constant dense<0xFF800000> : vector<9xf32>
    %86 = vector.multi_reduction <maximumf>, %85, %cst_23 [1] : vector<9x9xf32> to vector<9xf32>
    %87 = vector.shape_cast %86 : vector<9xf32> to vector<9x1xf32>
    %88 = vector.broadcast %87 : vector<9x1xf32> to vector<9x9xf32>
    %89 = arith.subf %85, %88 : vector<9x9xf32>
    %90 = math.exp %89 : vector<9x9xf32>
    %cst_24 = arith.constant dense<0.000000e+00> : vector<9xf32>
    %91 = vector.multi_reduction <add>, %90, %cst_24 [1] : vector<9x9xf32> to vector<9xf32>
    %92 = vector.shape_cast %91 : vector<9xf32> to vector<9x1xf32>
    %93 = tpu.reciprocal %92 {approx = true} : vector<9x1xf32> -> vector<9x1xf32>
    %94 = vector.broadcast %93 : vector<9x1xf32> to vector<9x9xf32>
    %95 = arith.mulf %90, %94 : vector<9x9xf32>
    %96 = arith.truncf %95 : vector<9x9xf32> to vector<9x9xbf16>
    %97 = arith.mulf %43, %80 : vector<9x32xf32>
    %98 = arith.truncf %97 : vector<9x32xf32> to vector<9x32xbf16>
    %cst_25 = arith.constant dense<0.000000e+00> : vector<9x32xf32>
    %99 = tpu.matmul %96, %98, %cst_25 {dimension_numbers = #tpu.dot_dimension_numbers<[1], [0], [0], [1], [0, 0, 1, 1], [], []>} : vector<9x9xbf16>, vector<9x32xbf16>, vector<9x32xf32> -> vector<9x32xf32>
    %100 = arith.addf %73, %99 : vector<9x32xf32>
    %c16_i32_26 = arith.constant 16 : i32
    %101 = vector.broadcast %c16_i32_26 : i32 to vector<9x32xi32>
    %102 = arith.cmpi sge, %45, %101 : vector<9x32xi32>
    %c24_i32 = arith.constant 24 : i32
    %103 = vector.broadcast %c24_i32 : i32 to vector<9x32xi32>
    %104 = arith.cmpi slt, %45, %103 : vector<9x32xi32>
    %105 = arith.andi %102, %104 : vector<9x32xi1>
    %106 = arith.extui %105 : vector<9x32xi1> to vector<9x32xi32>
    %107 = arith.sitofp %106 : vector<9x32xi32> to vector<9x32xf32>
    %108 = arith.mulf %41, %107 : vector<9x32xf32>
    %109 = arith.truncf %108 : vector<9x32xf32> to vector<9x32xbf16>
    %cst_27 = arith.constant dense<0.000000e+00> : vector<9x9xf32>
    %110 = tpu.matmul %109, %44, %cst_27 {dimension_numbers = #tpu.dot_dimension_numbers<[1], [1], [0], [0], [0, 0, 1, 0], [], []>} : vector<9x32xbf16>, vector<9x32xbf16>, vector<9x9xf32> -> vector<9x9xf32>
    %cst_28 = arith.constant 0.353553385 : f32
    %111 = vector.broadcast %cst_28 : f32 to vector<9x9xf32>
    %112 = arith.mulf %110, %111 : vector<9x9xf32>
    %cst_29 = arith.constant dense<0xFF800000> : vector<9xf32>
    %113 = vector.multi_reduction <maximumf>, %112, %cst_29 [1] : vector<9x9xf32> to vector<9xf32>
    %114 = vector.shape_cast %113 : vector<9xf32> to vector<9x1xf32>
    %115 = vector.broadcast %114 : vector<9x1xf32> to vector<9x9xf32>
    %116 = arith.subf %112, %115 : vector<9x9xf32>
    %117 = math.exp %116 : vector<9x9xf32>
    %cst_30 = arith.constant dense<0.000000e+00> : vector<9xf32>
    %118 = vector.multi_reduction <add>, %117, %cst_30 [1] : vector<9x9xf32> to vector<9xf32>
    %119 = vector.shape_cast %118 : vector<9xf32> to vector<9x1xf32>
    %120 = tpu.reciprocal %119 {approx = true} : vector<9x1xf32> -> vector<9x1xf32>
    %121 = vector.broadcast %120 : vector<9x1xf32> to vector<9x9xf32>
    %122 = arith.mulf %117, %121 : vector<9x9xf32>
    %123 = arith.truncf %122 : vector<9x9xf32> to vector<9x9xbf16>
    %124 = arith.mulf %43, %107 : vector<9x32xf32>
    %125 = arith.truncf %124 : vector<9x32xf32> to vector<9x32xbf16>
    %cst_31 = arith.constant dense<0.000000e+00> : vector<9x32xf32>
    %126 = tpu.matmul %123, %125, %cst_31 {dimension_numbers = #tpu.dot_dimension_numbers<[1], [0], [0], [1], [0, 0, 1, 1], [], []>} : vector<9x9xbf16>, vector<9x32xbf16>, vector<9x32xf32> -> vector<9x32xf32>
    %127 = arith.addf %100, %126 : vector<9x32xf32>
    %c24_i32_32 = arith.constant 24 : i32
    %128 = vector.broadcast %c24_i32_32 : i32 to vector<9x32xi32>
    %129 = arith.cmpi sge, %45, %128 : vector<9x32xi32>
    %c32_i32 = arith.constant 32 : i32
    %130 = vector.broadcast %c32_i32 : i32 to vector<9x32xi32>
    %131 = arith.cmpi slt, %45, %130 : vector<9x32xi32>
    %132 = arith.andi %129, %131 : vector<9x32xi1>
    %133 = arith.extui %132 : vector<9x32xi1> to vector<9x32xi32>
    %134 = arith.sitofp %133 : vector<9x32xi32> to vector<9x32xf32>
    %135 = arith.mulf %41, %134 : vector<9x32xf32>
    %136 = arith.truncf %135 : vector<9x32xf32> to vector<9x32xbf16>
    %cst_33 = arith.constant dense<0.000000e+00> : vector<9x9xf32>
    %137 = tpu.matmul %136, %44, %cst_33 {dimension_numbers = #tpu.dot_dimension_numbers<[1], [1], [0], [0], [0, 0, 1, 0], [], []>} : vector<9x32xbf16>, vector<9x32xbf16>, vector<9x9xf32> -> vector<9x9xf32>
    %cst_34 = arith.constant 0.353553385 : f32
    %138 = vector.broadcast %cst_34 : f32 to vector<9x9xf32>
    %139 = arith.mulf %137, %138 : vector<9x9xf32>
    %cst_35 = arith.constant dense<0xFF800000> : vector<9xf32>
    %140 = vector.multi_reduction <maximumf>, %139, %cst_35 [1] : vector<9x9xf32> to vector<9xf32>
    %141 = vector.shape_cast %140 : vector<9xf32> to vector<9x1xf32>
    %142 = vector.broadcast %141 : vector<9x1xf32> to vector<9x9xf32>
    %143 = arith.subf %139, %142 : vector<9x9xf32>
    %144 = math.exp %143 : vector<9x9xf32>
    %cst_36 = arith.constant dense<0.000000e+00> : vector<9xf32>
    %145 = vector.multi_reduction <add>, %144, %cst_36 [1] : vector<9x9xf32> to vector<9xf32>
    %146 = vector.shape_cast %145 : vector<9xf32> to vector<9x1xf32>
    %147 = tpu.reciprocal %146 {approx = true} : vector<9x1xf32> -> vector<9x1xf32>
    %148 = vector.broadcast %147 : vector<9x1xf32> to vector<9x9xf32>
    %149 = arith.mulf %144, %148 : vector<9x9xf32>
    %150 = arith.truncf %149 : vector<9x9xf32> to vector<9x9xbf16>
    %151 = arith.mulf %43, %134 : vector<9x32xf32>
    %152 = arith.truncf %151 : vector<9x32xf32> to vector<9x32xbf16>
    %cst_37 = arith.constant dense<0.000000e+00> : vector<9x32xf32>
    %153 = tpu.matmul %150, %152, %cst_37 {dimension_numbers = #tpu.dot_dimension_numbers<[1], [0], [0], [1], [0, 0, 1, 1], [], []>} : vector<9x9xbf16>, vector<9x32xbf16>, vector<9x32xf32> -> vector<9x32xf32>
    %154 = arith.addf %127, %153 : vector<9x32xf32>
    %155 = arith.truncf %154 : vector<9x32xf32> to vector<9x32xbf16>
    %156 = arith.index_cast %arg1 : i32 to index
    %c0_38 = arith.constant 0 : index
    %c0_39 = arith.constant 0 : index
    %157 = vector.load %arg7[%156, %c0_38, %c0_39] : memref<1x32x32xbf16, #tpu.memory_space<vmem>>, vector<1x32x32xbf16>
    %158 = vector.shape_cast %157 : vector<1x32x32xbf16> to vector<32x32xbf16>
    %cst_40 = arith.constant dense<0.000000e+00> : vector<9x32xf32>
    %159 = tpu.matmul %155, %158, %cst_40 {dimension_numbers = #tpu.dot_dimension_numbers<[1], [0], [0], [1], [0, 0, 1, 1], [], []>} : vector<9x32xbf16>, vector<32x32xbf16>, vector<9x32xf32> -> vector<9x32xf32>
    %160 = arith.index_cast %arg1 : i32 to index
    %c0_41 = arith.constant 0 : index
    %c0_42 = arith.constant 0 : index
    %161 = vector.load %arg8[%160, %c0_41, %c0_42] : memref<1x1x32xf32, #tpu.memory_space<vmem>>, vector<1x1x32xf32>
    %162 = vector.shape_cast %161 : vector<1x1x32xf32> to vector<1x32xf32>
    %163 = vector.broadcast %162 : vector<1x32xf32> to vector<9x32xf32>
    %164 = arith.addf %159, %163 : vector<9x32xf32>
    %165 = arith.addf %3, %164 : vector<9x32xf32>
    %cst_43 = arith.constant dense<0.000000e+00> : vector<9xf32>
    %166 = vector.multi_reduction <add>, %165, %cst_43 [1] : vector<9x32xf32> to vector<9xf32>
    %167 = vector.shape_cast %166 : vector<9xf32> to vector<9x1xf32>
    %cst_44 = arith.constant 3.200000e+01 : f32
    %168 = vector.broadcast %cst_44 : f32 to vector<9x1xf32>
    %169 = arith.divf %167, %168 : vector<9x1xf32>
    %170 = vector.broadcast %169 : vector<9x1xf32> to vector<9x32xf32>
    %171 = arith.subf %165, %170 : vector<9x32xf32>
    %172 = arith.mulf %171, %171 : vector<9x32xf32>
    %cst_45 = arith.constant dense<0.000000e+00> : vector<9xf32>
    %173 = vector.multi_reduction <add>, %172, %cst_45 [1] : vector<9x32xf32> to vector<9xf32>
    %174 = vector.shape_cast %173 : vector<9xf32> to vector<9x1xf32>
    %cst_46 = arith.constant 3.200000e+01 : f32
    %175 = vector.broadcast %cst_46 : f32 to vector<9x1xf32>
    %176 = arith.divf %174, %175 : vector<9x1xf32>
    %cst_47 = arith.constant 9.99999974E-6 : f32
    %177 = vector.broadcast %cst_47 : f32 to vector<9x1xf32>
    %178 = arith.addf %176, %177 : vector<9x1xf32>
    %179 = math.rsqrt %178 : vector<9x1xf32>
    %180 = vector.broadcast %179 : vector<9x1xf32> to vector<9x32xf32>
    %181 = arith.mulf %171, %180 : vector<9x32xf32>
    %182 = vector.broadcast %9 : vector<1x32xf32> to vector<9x32xf32>
    %183 = arith.mulf %181, %182 : vector<9x32xf32>
    %184 = vector.broadcast %10 : vector<1x32xf32> to vector<9x32xf32>
    %185 = arith.addf %183, %184 : vector<9x32xf32>
    %186 = arith.truncf %185 : vector<9x32xf32> to vector<9x32xbf16>
    %187 = arith.index_cast %arg1 : i32 to index
    %c0_48 = arith.constant 0 : index
    %c0_49 = arith.constant 0 : index
    %188 = vector.load %arg9[%187, %c0_48, %c0_49] : memref<1x32x128xbf16, #tpu.memory_space<vmem>>, vector<1x32x128xbf16>
    %189 = vector.shape_cast %188 : vector<1x32x128xbf16> to vector<32x128xbf16>
    %cst_50 = arith.constant dense<0.000000e+00> : vector<9x128xf32>
    %190 = tpu.matmul %186, %189, %cst_50 {dimension_numbers = #tpu.dot_dimension_numbers<[1], [0], [0], [1], [0, 0, 1, 1], [], []>} : vector<9x32xbf16>, vector<32x128xbf16>, vector<9x128xf32> -> vector<9x128xf32>
    %191 = arith.index_cast %arg1 : i32 to index
    %c0_51 = arith.constant 0 : index
    %c0_52 = arith.constant 0 : index
    %192 = vector.load %arg10[%191, %c0_51, %c0_52] : memref<1x1x128xf32, #tpu.memory_space<vmem>>, vector<1x1x128xf32>
    %193 = vector.shape_cast %192 : vector<1x1x128xf32> to vector<1x128xf32>
    %194 = vector.broadcast %193 : vector<1x128xf32> to vector<9x128xf32>
    %195 = arith.addf %190, %194 : vector<9x128xf32>
    %cst_53 = arith.constant 5.000000e-01 : f32
    %196 = vector.broadcast %cst_53 : f32 to vector<9x128xf32>
    %197 = arith.mulf %196, %195 : vector<9x128xf32>
    %cst_54 = arith.constant 0.707106769 : f32
    %198 = vector.broadcast %cst_54 : f32 to vector<9x128xf32>
    %199 = arith.mulf %195, %198 : vector<9x128xf32>
    %200 = math.absf %199 : vector<9x128xf32>
    %cst_55 = arith.constant 0.327591091 : f32
    %201 = vector.broadcast %cst_55 : f32 to vector<9x128xf32>
    %202 = arith.mulf %201, %200 : vector<9x128xf32>
    %cst_56 = arith.constant 1.000000e+00 : f32
    %203 = vector.broadcast %cst_56 : f32 to vector<9x128xf32>
    %204 = arith.addf %203, %202 : vector<9x128xf32>
    %cst_57 = arith.constant 1.000000e+00 : f32
    %205 = vector.broadcast %cst_57 : f32 to vector<9x128xf32>
    %206 = arith.divf %205, %204 : vector<9x128xf32>
    %cst_58 = arith.constant 1.06140542 : f32
    %207 = vector.broadcast %cst_58 : f32 to vector<9x128xf32>
    %208 = arith.mulf %207, %206 : vector<9x128xf32>
    %cst_59 = arith.constant -1.45315206 : f32
    %209 = vector.broadcast %cst_59 : f32 to vector<9x128xf32>
    %210 = arith.addf %208, %209 : vector<9x128xf32>
    %211 = arith.mulf %210, %206 : vector<9x128xf32>
    %cst_60 = arith.constant 1.42141378 : f32
    %212 = vector.broadcast %cst_60 : f32 to vector<9x128xf32>
    %213 = arith.addf %211, %212 : vector<9x128xf32>
    %214 = arith.mulf %213, %206 : vector<9x128xf32>
    %cst_61 = arith.constant -0.284496725 : f32
    %215 = vector.broadcast %cst_61 : f32 to vector<9x128xf32>
    %216 = arith.addf %214, %215 : vector<9x128xf32>
    %217 = arith.mulf %216, %206 : vector<9x128xf32>
    %cst_62 = arith.constant 0.254829586 : f32
    %218 = vector.broadcast %cst_62 : f32 to vector<9x128xf32>
    %219 = arith.addf %217, %218 : vector<9x128xf32>
    %220 = arith.mulf %219, %206 : vector<9x128xf32>
    %cst_63 = arith.constant 0.000000e+00 : f32
    %221 = vector.broadcast %cst_63 : f32 to vector<9x128xf32>
    %222 = arith.subf %221, %200 : vector<9x128xf32>
    %223 = arith.mulf %222, %200 : vector<9x128xf32>
    %224 = math.exp %223 : vector<9x128xf32>
    %225 = arith.mulf %220, %224 : vector<9x128xf32>
    %cst_64 = arith.constant 1.000000e+00 : f32
    %226 = vector.broadcast %cst_64 : f32 to vector<9x128xf32>
    %227 = arith.subf %226, %225 : vector<9x128xf32>
    %cst_65 = arith.constant 0.000000e+00 : f32
    %228 = vector.broadcast %cst_65 : f32 to vector<9x128xf32>
    %229 = arith.cmpf oge, %199, %228 : vector<9x128xf32>
    %cst_66 = arith.constant 0.000000e+00 : f32
    %230 = vector.broadcast %cst_66 : f32 to vector<9x128xf32>
    %231 = arith.subf %230, %227 : vector<9x128xf32>
    %232 = arith.select %229, %227, %231 : vector<9x128xi1>, vector<9x128xf32>
    %cst_67 = arith.constant 1.000000e+00 : f32
    %233 = vector.broadcast %cst_67 : f32 to vector<9x128xf32>
    %234 = arith.addf %233, %232 : vector<9x128xf32>
    %235 = arith.mulf %197, %234 : vector<9x128xf32>
    %236 = arith.truncf %235 : vector<9x128xf32> to vector<9x128xbf16>
    %237 = arith.index_cast %arg1 : i32 to index
    %c0_68 = arith.constant 0 : index
    %c0_69 = arith.constant 0 : index
    %238 = vector.load %arg11[%237, %c0_68, %c0_69] : memref<1x128x32xbf16, #tpu.memory_space<vmem>>, vector<1x128x32xbf16>
    %239 = vector.shape_cast %238 : vector<1x128x32xbf16> to vector<128x32xbf16>
    %cst_70 = arith.constant dense<0.000000e+00> : vector<9x32xf32>
    %240 = tpu.matmul %236, %239, %cst_70 {dimension_numbers = #tpu.dot_dimension_numbers<[1], [0], [0], [1], [0, 0, 1, 1], [], []>} : vector<9x128xbf16>, vector<128x32xbf16>, vector<9x32xf32> -> vector<9x32xf32>
    %241 = arith.index_cast %arg1 : i32 to index
    %c0_71 = arith.constant 0 : index
    %c0_72 = arith.constant 0 : index
    %242 = vector.load %arg12[%241, %c0_71, %c0_72] : memref<1x1x32xf32, #tpu.memory_space<vmem>>, vector<1x1x32xf32>
    %243 = vector.shape_cast %242 : vector<1x1x32xf32> to vector<1x32xf32>
    %244 = vector.broadcast %243 : vector<1x32xf32> to vector<9x32xf32>
    %245 = arith.addf %240, %244 : vector<9x32xf32>
    %246 = arith.addf %165, %245 : vector<9x32xf32>
    %c0_i32_73 = arith.constant 0 : i32
    %247 = arith.cmpi slt, %arg1, %c0_i32_73 : i32
    %248 = arith.extui %247 : i1 to i32
    %c0_i32_74 = arith.constant 0 : i32
    %249 = arith.cmpi ne, %248, %c0_i32_74 : i32
    scf.if %249 {
      %c0_77 = arith.constant 0 : index
      %c0_78 = arith.constant 0 : index
      %253 = vector.load %arg15[%c0_77, %c0_78] : memref<9x32xf32, #tpu.memory_space<vmem>>, vector<9x32xf32>
      tpu.vector_store %arg15[%c0_77, %c0_78], %246 {strides = array<i32>} : memref<9x32xf32, #tpu.memory_space<vmem>>, vector<9x32xf32>,
    } else {
    }
    %c0_i32_75 = arith.constant 0 : i32
    %250 = arith.cmpi eq, %arg1, %c0_i32_75 : i32
    %251 = arith.extui %250 : i1 to i32
    %c0_i32_76 = arith.constant 0 : i32
    %252 = arith.cmpi ne, %251, %c0_i32_76 : i32
    scf.if %252 {
      %c0_77 = arith.constant 0 : index
      %c0_78 = arith.constant 0 : index
      %253 = vector.load %arg13[%c0_77, %c0_78] : memref<2x32xf32, #tpu.memory_space<vmem>>, vector<2x32xf32>
      %254 = vector.extract_strided_slice %253 {offsets = [0, 0], sizes = [1, 32], strides = [1, 1]} : vector<2x32xf32> to vector<1x32xf32>
      %255 = vector.extract_strided_slice %253 {offsets = [1, 0], sizes = [1, 32], strides = [1, 1]} : vector<2x32xf32> to vector<1x32xf32>
      %cst_79 = arith.constant dense<0.000000e+00> : vector<9xf32>
      %256 = vector.multi_reduction <add>, %246, %cst_79 [1] : vector<9x32xf32> to vector<9xf32>
      %257 = vector.shape_cast %256 : vector<9xf32> to vector<9x1xf32>
      %cst_80 = arith.constant 3.200000e+01 : f32
      %258 = vector.broadcast %cst_80 : f32 to vector<9x1xf32>
      %259 = arith.divf %257, %258 : vector<9x1xf32>
      %260 = vector.broadcast %259 : vector<9x1xf32> to vector<9x32xf32>
      %261 = arith.subf %246, %260 : vector<9x32xf32>
      %262 = arith.mulf %261, %261 : vector<9x32xf32>
      %cst_81 = arith.constant dense<0.000000e+00> : vector<9xf32>
      %263 = vector.multi_reduction <add>, %262, %cst_81 [1] : vector<9x32xf32> to vector<9xf32>
      %264 = vector.shape_cast %263 : vector<9xf32> to vector<9x1xf32>
      %cst_82 = arith.constant 3.200000e+01 : f32
      %265 = vector.broadcast %cst_82 : f32 to vector<9x1xf32>
      %266 = arith.divf %264, %265 : vector<9x1xf32>
      %cst_83 = arith.constant 9.99999974E-6 : f32
      %267 = vector.broadcast %cst_83 : f32 to vector<9x1xf32>
      %268 = arith.addf %266, %267 : vector<9x1xf32>
      %269 = math.rsqrt %268 : vector<9x1xf32>
      %270 = vector.broadcast %269 : vector<9x1xf32> to vector<9x32xf32>
      %271 = arith.mulf %261, %270 : vector<9x32xf32>
      %272 = vector.broadcast %254 : vector<1x32xf32> to vector<9x32xf32>
      %273 = arith.mulf %271, %272 : vector<9x32xf32>
      %274 = vector.broadcast %255 : vector<1x32xf32> to vector<9x32xf32>
      %275 = arith.addf %273, %274 : vector<9x32xf32>
      %276 = arith.truncf %275 : vector<9x32xf32> to vector<9x32xbf16>
      %c0_84 = arith.constant 0 : index
      %c0_85 = arith.constant 0 : index
      %c0_86 = arith.constant 0 : index
      %277 = vector.load %arg14[%c0_84, %c0_85, %c0_86] : memref<1x9x32xbf16, #tpu.memory_space<vmem>>, vector<1x9x32xbf16>
      %278 = vector.shape_cast %277 : vector<1x9x32xbf16> to vector<9x32xbf16>
      %279 = vector.shape_cast %276 : vector<9x32xbf16> to vector<1x9x32xbf16>
      tpu.vector_store %arg14[%c0_84, %c0_85, %c0_86], %279 {strides = array<i32>} : memref<1x9x32xbf16, #tpu.memory_space<vmem>>, vector<1x9x32xbf16>,
    } else {
    }
    return
  }
  func.func @transform_0(%arg0: i32, %arg1: i32) -> (i32, i32, i32) {
    %c0_i32 = arith.constant 0 : i32
    %c0_i32_0 = arith.constant 0 : i32
    %c0_i32_1 = arith.constant 0 : i32
    return %arg0, %c0_i32, %c0_i32_0 : i32, i32, i32
  }
  func.func @transform_1(%arg0: i32, %arg1: i32) -> (i32, i32) {
    %c0_i32 = arith.constant 0 : i32
    %c0_i32_0 = arith.constant 0 : i32
    %c0_i32_1 = arith.constant 0 : i32
    return %c0_i32, %c0_i32_0 : i32, i32
  }
  func.func @transform_2(%arg0: i32, %arg1: i32) -> (i32, i32, i32) {
    %c0_i32 = arith.constant 0 : i32
    %c0_i32_0 = arith.constant 0 : i32
    %c0_i32_1 = arith.constant 0 : i32
    %c0_i32_2 = arith.constant 0 : i32
    return %c0_i32, %c0_i32_0, %c0_i32_1 : i32, i32, i32
  }
  func.func @transform_3(%arg0: i32, %arg1: i32) -> (i32, i32, i32) {
    %c0_i32 = arith.constant 0 : i32
    %c0_i32_0 = arith.constant 0 : i32
    %c0_i32_1 = arith.constant 0 : i32
    %c0_i32_2 = arith.constant 0 : i32
    return %c0_i32, %c0_i32_0, %c0_i32_1 : i32, i32, i32
  }
  func.func @transform_4(%arg0: i32, %arg1: i32) -> (i32, i32, i32) {
    %c0_i32 = arith.constant 0 : i32
    %c0_i32_0 = arith.constant 0 : i32
    %c0_i32_1 = arith.constant 0 : i32
    %c0_i32_2 = arith.constant 0 : i32
    return %c0_i32, %c0_i32_0, %c0_i32_1 : i32, i32, i32
  }
  func.func @transform_5(%arg0: i32, %arg1: i32) -> (i32, i32, i32) {
    %c0_i32 = arith.constant 0 : i32
    %c0_i32_0 = arith.constant 0 : i32
    %c0_i32_1 = arith.constant 0 : i32
    %c0_i32_2 = arith.constant 0 : i32
    return %c0_i32, %c0_i32_0, %c0_i32_1 : i32, i32, i32
  }
  func.func @transform_6(%arg0: i32, %arg1: i32) -> (i32, i32, i32) {
    %c0_i32 = arith.constant 0 : i32
    %c0_i32_0 = arith.constant 0 : i32
    %c0_i32_1 = arith.constant 0 : i32
    %c0_i32_2 = arith.constant 0 : i32
    return %c0_i32, %c0_i32_0, %c0_i32_1 : i32, i32, i32
  }
  func.func @transform_7(%arg0: i32, %arg1: i32) -> (i32, i32, i32) {
    %c0_i32 = arith.constant 0 : i32
    %c0_i32_0 = arith.constant 0 : i32
    %c0_i32_1 = arith.constant 0 : i32
    %c0_i32_2 = arith.constant 0 : i32
    return %c0_i32, %c0_i32_0, %c0_i32_1 : i32, i32, i32
  }
  func.func @transform_8(%arg0: i32, %arg1: i32) -> (i32, i32, i32) {
    %c0_i32 = arith.constant 0 : i32
    %c0_i32_0 = arith.constant 0 : i32
    %c0_i32_1 = arith.constant 0 : i32
    %c0_i32_2 = arith.constant 0 : i32
    return %c0_i32, %c0_i32_0, %c0_i32_1 : i32, i32, i32
  }
  func.func @transform_9(%arg0: i32, %arg1: i32) -> (i32, i32, i32) {
    %c0_i32 = arith.constant 0 : i32
    %c0_i32_0 = arith.constant 0 : i32
    %c0_i32_1 = arith.constant 0 : i32
    %c0_i32_2 = arith.constant 0 : i32
    return %c0_i32, %c0_i32_0, %c0_i32_1 : i32, i32, i32
  }
  func.func @transform_10(%arg0: i32, %arg1: i32) -> (i32, i32, i32) {
    %c0_i32 = arith.constant 0 : i32
    %c0_i32_0 = arith.constant 0 : i32
    %c0_i32_1 = arith.constant 0 : i32
    %c0_i32_2 = arith.constant 0 : i32
    return %c0_i32, %c0_i32_0, %c0_i32_1 : i32, i32, i32
  }
  func.func @transform_11(%arg0: i32, %arg1: i32) -> (i32, i32) {
    %c0_i32 = arith.constant 0 : i32
    %c0_i32_0 = arith.constant 0 : i32
    %c0_i32_1 = arith.constant 0 : i32
    return %c0_i32, %c0_i32_0 : i32, i32
  }
  func.func @transform_12(%arg0: i32, %arg1: i32) -> (i32, i32, i32) {
    %c0_i32 = arith.constant 0 : i32
    %c0_i32_0 = arith.constant 0 : i32
    %c0_i32_1 = arith.constant 0 : i32
    return %arg0, %c0_i32, %c0_i32_0 : i32, i32, i32
  }
}

module attributes {stable_mosaic.version = 11 : i64} {
  func.func @_pred_loss_kernel(%arg0: i32, %arg1: memref<1x9x32xbf16, #tpu.memory_space<vmem>>, %arg2: memref<32x256xbf16, #tpu.memory_space<vmem>>, %arg3: memref<1x256xf32, #tpu.memory_space<vmem>>, %arg4: memref<1x8x256xf32, #tpu.memory_space<vmem>>, %arg5: memref<1x8x1xf32, #tpu.memory_space<vmem>>, %arg6: memref<1x8x256xf32, #tpu.memory_space<vmem>>, %arg7: memref<1x1xf32, #tpu.memory_space<vmem>>, %arg8: memref<1x1xf32, #tpu.memory_space<vmem>>, %arg9: memref<1x1xf32, #tpu.memory_space<vmem>>) attributes {dimension_semantics = [#tpu.dimension_semantics<arbitrary>], iteration_bounds = array<i64: 2>, scalar_prefetch = 0 : i64, scratch_operands = 2 : i64, tpu.core_type = #tpu.core_type<tc>, window_params = [{transform_indices = @transform_0, window_bounds = array<i64: 1, 9, 32>}, {pipeline_mode = #tpu.pipeline_mode<synchronous>, transform_indices = @transform_1, window_bounds = array<i64: 32, 256>}, {pipeline_mode = #tpu.pipeline_mode<synchronous>, transform_indices = @transform_2, window_bounds = array<i64: 1, 256>}, {transform_indices = @transform_3, window_bounds = array<i64: 1, 8, 256>}, {transform_indices = @transform_4, window_bounds = array<i64: 1, 8, 1>}, {transform_indices = @transform_5, window_bounds = array<i64: 1, 8, 256>}, {pipeline_mode = #tpu.pipeline_mode<synchronous>, transform_indices = @transform_6, window_bounds = array<i64: 1, 1>}]} {
    %c0_i32 = arith.constant 0 : i32
    %0 = arith.cmpi eq, %arg0, %c0_i32 : i32
    %1 = arith.extui %0 : i1 to i32
    %c0_i32_0 = arith.constant 0 : i32
    %2 = arith.cmpi ne, %1, %c0_i32_0 : i32
    scf.if %2 {
      %cst_29 = arith.constant 0.000000e+00 : f32
      %44 = vector.broadcast %cst_29 : f32 to vector<1x1xf32>
      %c0_30 = arith.constant 0 : index
      %c0_31 = arith.constant 0 : index
      %45 = vector.load %arg8[%c0_30, %c0_31] : memref<1x1xf32, #tpu.memory_space<vmem>>, vector<1x1xf32>
      tpu.vector_store %arg8[%c0_30, %c0_31], %44 {strides = array<i32>} : memref<1x1xf32, #tpu.memory_space<vmem>>, vector<1x1xf32>,
      %cst_32 = arith.constant 0.000000e+00 : f32
      %46 = vector.broadcast %cst_32 : f32 to vector<1x1xf32>
      %c0_33 = arith.constant 0 : index
      %c0_34 = arith.constant 0 : index
      %47 = vector.load %arg9[%c0_33, %c0_34] : memref<1x1xf32, #tpu.memory_space<vmem>>, vector<1x1xf32>
      tpu.vector_store %arg9[%c0_33, %c0_34], %46 {strides = array<i32>} : memref<1x1xf32, #tpu.memory_space<vmem>>, vector<1x1xf32>,
    } else {
    }
    %c0 = arith.constant 0 : index
    %c0_1 = arith.constant 0 : index
    %c0_2 = arith.constant 0 : index
    %3 = vector.load %arg1[%c0, %c0_1, %c0_2] : memref<1x9x32xbf16, #tpu.memory_space<vmem>>, vector<1x9x32xbf16>
    %4 = vector.shape_cast %3 : vector<1x9x32xbf16> to vector<9x32xbf16>
    %5 = vector.extract_strided_slice %4 {offsets = [1, 0], sizes = [8, 32], strides = [1, 1]} : vector<9x32xbf16> to vector<8x32xbf16>
    %c0_3 = arith.constant 0 : index
    %c0_4 = arith.constant 0 : index
    %6 = vector.load %arg2[%c0_3, %c0_4] : memref<32x256xbf16, #tpu.memory_space<vmem>>, vector<32x256xbf16>
    %cst = arith.constant dense<0.000000e+00> : vector<8x256xf32>
    %7 = tpu.matmul %5, %6, %cst {dimension_numbers = #tpu.dot_dimension_numbers<[1], [0], [0], [1], [0, 0, 1, 1], [], []>} : vector<8x32xbf16>, vector<32x256xbf16>, vector<8x256xf32> -> vector<8x256xf32>
    %c0_5 = arith.constant 0 : index
    %c0_6 = arith.constant 0 : index
    %8 = vector.load %arg3[%c0_5, %c0_6] : memref<1x256xf32, #tpu.memory_space<vmem>>, vector<1x256xf32>
    %9 = vector.broadcast %8 : vector<1x256xf32> to vector<8x256xf32>
    %10 = arith.addf %7, %9 : vector<8x256xf32>
    %c0_7 = arith.constant 0 : index
    %c0_8 = arith.constant 0 : index
    %c0_9 = arith.constant 0 : index
    %11 = vector.load %arg6[%c0_7, %c0_8, %c0_9] : memref<1x8x256xf32, #tpu.memory_space<vmem>>, vector<1x8x256xf32>
    %12 = vector.shape_cast %11 : vector<1x8x256xf32> to vector<8x256xf32>
    %13 = vector.shape_cast %10 : vector<8x256xf32> to vector<1x8x256xf32>
    tpu.vector_store %arg6[%c0_7, %c0_8, %c0_9], %13 {strides = array<i32>} : memref<1x8x256xf32, #tpu.memory_space<vmem>>, vector<1x8x256xf32>,
    %c0_10 = arith.constant 0 : index
    %c0_11 = arith.constant 0 : index
    %c0_12 = arith.constant 0 : index
    %14 = vector.load %arg4[%c0_10, %c0_11, %c0_12] : memref<1x8x256xf32, #tpu.memory_space<vmem>>, vector<1x8x256xf32>
    %15 = vector.shape_cast %14 : vector<1x8x256xf32> to vector<8x256xf32>
    %16 = arith.subf %10, %15 : vector<8x256xf32>
    %17 = arith.mulf %16, %16 : vector<8x256xf32>
    %cst_13 = arith.constant dense<0.000000e+00> : vector<8xf32>
    %18 = vector.multi_reduction <add>, %17, %cst_13 [1] : vector<8x256xf32> to vector<8xf32>
    %19 = vector.shape_cast %18 : vector<8xf32> to vector<8x1xf32>
    %cst_14 = arith.constant 2.560000e+02 : f32
    %20 = vector.broadcast %cst_14 : f32 to vector<8x1xf32>
    %21 = arith.divf %19, %20 : vector<8x1xf32>
    %c0_15 = arith.constant 0 : index
    %c0_16 = arith.constant 0 : index
    %c0_17 = arith.constant 0 : index
    %22 = vector.load %arg5[%c0_15, %c0_16, %c0_17] : memref<1x8x1xf32, #tpu.memory_space<vmem>>, vector<1x8x1xf32>
    %23 = vector.shape_cast %22 : vector<1x8x1xf32> to vector<8x1xf32>
    %c0_18 = arith.constant 0 : index
    %c0_19 = arith.constant 0 : index
    %24 = vector.load %arg8[%c0_18, %c0_19] : memref<1x1xf32, #tpu.memory_space<vmem>>, vector<1x1xf32>
    %25 = arith.mulf %21, %23 : vector<8x1xf32>
    %26 = vector.shape_cast %25 : vector<8x1xf32> to vector<1x8x1xf32>
    %cst_20 = arith.constant dense<0.000000e+00> : vector<1xf32>
    %27 = vector.multi_reduction <add>, %26, %cst_20 [1, 2] : vector<1x8x1xf32> to vector<1xf32>
    %28 = vector.shape_cast %27 : vector<1xf32> to vector<1x1x1xf32>
    %29 = vector.extract %28[0, 0, 0] : f32 from vector<1x1x1xf32>
    %30 = vector.broadcast %29 : f32 to vector<1x1xf32>
    %31 = arith.addf %24, %30 : vector<1x1xf32>
    %c0_21 = arith.constant 0 : index
    %c0_22 = arith.constant 0 : index
    %32 = vector.load %arg8[%c0_21, %c0_22] : memref<1x1xf32, #tpu.memory_space<vmem>>, vector<1x1xf32>
    tpu.vector_store %arg8[%c0_21, %c0_22], %31 {strides = array<i32>} : memref<1x1xf32, #tpu.memory_space<vmem>>, vector<1x1xf32>,
    %c0_23 = arith.constant 0 : index
    %c0_24 = arith.constant 0 : index
    %33 = vector.load %arg9[%c0_23, %c0_24] : memref<1x1xf32, #tpu.memory_space<vmem>>, vector<1x1xf32>
    %34 = vector.shape_cast %23 : vector<8x1xf32> to vector<1x8x1xf32>
    %cst_25 = arith.constant dense<0.000000e+00> : vector<1xf32>
    %35 = vector.multi_reduction <add>, %34, %cst_25 [1, 2] : vector<1x8x1xf32> to vector<1xf32>
    %36 = vector.shape_cast %35 : vector<1xf32> to vector<1x1x1xf32>
    %37 = vector.extract %36[0, 0, 0] : f32 from vector<1x1x1xf32>
    %38 = vector.broadcast %37 : f32 to vector<1x1xf32>
    %39 = arith.addf %33, %38 : vector<1x1xf32>
    %c0_26 = arith.constant 0 : index
    %c0_27 = arith.constant 0 : index
    %40 = vector.load %arg9[%c0_26, %c0_27] : memref<1x1xf32, #tpu.memory_space<vmem>>, vector<1x1xf32>
    tpu.vector_store %arg9[%c0_26, %c0_27], %39 {strides = array<i32>} : memref<1x1xf32, #tpu.memory_space<vmem>>, vector<1x1xf32>,
    %c1_i32 = arith.constant 1 : i32
    %41 = arith.cmpi eq, %arg0, %c1_i32 : i32
    %42 = arith.extui %41 : i1 to i32
    %c0_i32_28 = arith.constant 0 : i32
    %43 = arith.cmpi ne, %42, %c0_i32_28 : i32
    scf.if %43 {
      %c0_29 = arith.constant 0 : index
      %c0_30 = arith.constant 0 : index
      %44 = vector.load %arg8[%c0_29, %c0_30] : memref<1x1xf32, #tpu.memory_space<vmem>>, vector<1x1xf32>
      %c0_31 = arith.constant 0 : index
      %c0_32 = arith.constant 0 : index
      %45 = vector.load %arg9[%c0_31, %c0_32] : memref<1x1xf32, #tpu.memory_space<vmem>>, vector<1x1xf32>
      %46 = arith.divf %44, %45 : vector<1x1xf32>
      %c0_33 = arith.constant 0 : index
      %c0_34 = arith.constant 0 : index
      %47 = vector.load %arg7[%c0_33, %c0_34] : memref<1x1xf32, #tpu.memory_space<vmem>>, vector<1x1xf32>
      tpu.vector_store %arg7[%c0_33, %c0_34], %46 {strides = array<i32>} : memref<1x1xf32, #tpu.memory_space<vmem>>, vector<1x1xf32>,
    } else {
    }
    return
  }
  func.func @transform_0(%arg0: i32) -> (i32, i32, i32) {
    %c0_i32 = arith.constant 0 : i32
    %c0_i32_0 = arith.constant 0 : i32
    %c0_i32_1 = arith.constant 0 : i32
    return %arg0, %c0_i32, %c0_i32_0 : i32, i32, i32
  }
  func.func @transform_1(%arg0: i32) -> (i32, i32) {
    %c0_i32 = arith.constant 0 : i32
    %c0_i32_0 = arith.constant 0 : i32
    %c0_i32_1 = arith.constant 0 : i32
    return %c0_i32, %c0_i32_0 : i32, i32
  }
  func.func @transform_2(%arg0: i32) -> (i32, i32) {
    %c0_i32 = arith.constant 0 : i32
    %c0_i32_0 = arith.constant 0 : i32
    %c0_i32_1 = arith.constant 0 : i32
    return %c0_i32, %c0_i32_0 : i32, i32
  }
  func.func @transform_3(%arg0: i32) -> (i32, i32, i32) {
    %c0_i32 = arith.constant 0 : i32
    %c0_i32_0 = arith.constant 0 : i32
    %c0_i32_1 = arith.constant 0 : i32
    return %arg0, %c0_i32, %c0_i32_0 : i32, i32, i32
  }
  func.func @transform_4(%arg0: i32) -> (i32, i32, i32) {
    %c0_i32 = arith.constant 0 : i32
    %c0_i32_0 = arith.constant 0 : i32
    %c0_i32_1 = arith.constant 0 : i32
    return %arg0, %c0_i32, %c0_i32_0 : i32, i32, i32
  }
  func.func @transform_5(%arg0: i32) -> (i32, i32, i32) {
    %c0_i32 = arith.constant 0 : i32
    %c0_i32_0 = arith.constant 0 : i32
    %c0_i32_1 = arith.constant 0 : i32
    return %arg0, %c0_i32, %c0_i32_0 : i32, i32, i32
  }
  func.func @transform_6(%arg0: i32) -> (i32, i32) {
    %c0_i32 = arith.constant 0 : i32
    %c0_i32_0 = arith.constant 0 : i32
    %c0_i32_1 = arith.constant 0 : i32
    return %c0_i32, %c0_i32_0 : i32, i32
  }
}

</mosaic_0001>

<llo_original>
// kernel: forward.5
$region0: #{forward.5}
  #allocation0 [shape = 'u32[]', space=smem, size = 0x4, offset = 0x4, fixed_abs, tag = 'smem constant byte address 0x4 - core index']
  #allocation1 [shape = 'u32[144,128]{1,0:T(1,128)}', space=vmem, size = 0x12000, scoped, tag = 'internal scratch']
  %s0 = inlined_call_operand.vmem [shape: f32[16,256], index: 0, kind: input, shape index: {}]
  %s1 = inlined_call_operand.vmem [shape: bf16[256,32], index: 1, kind: input, shape index: {}]
  %s2 = inlined_call_operand.vmem [shape: f32[1,32], index: 2, kind: input, shape index: {}]
  %s3 = inlined_call_operand.vmem [shape: f32[8,32], index: 3, kind: input, shape index: {}]
  %s4 = inlined_call_operand.vmem [shape: bf16[16,32], index: 4, kind: output, shape index: {}]
  %s5 = sld [smem:[#allocation0]]
  $region26: #{forward.5} parent=0
    _
  %s7 = ssub.s32 1, %s5
  %s8 = scalar_select 0, %s7, %s5
  // Predicated region
  $region2: #{forward.5} parent=0 // pred_check
    _
  $region3: #{forward.5} parent=0 // pred_check_branch
    %10 = sbr.rel (0) target = $region5
  $region4: #{forward.5} parent=0 // pred_region
    _
  $region5: #{forward.5} parent=0 // pred_fallthru
    _
  // Predicated region
  $region6: #{forward.5} parent=0 // pred_check
    _
  $region7: #{forward.5} parent=0 // pred_check_branch
    %12 = sbr.rel (0) target = $region9
  $region8: #{forward.5} parent=0 // pred_region
    _
  $region9: #{forward.5} parent=0 // pred_fallthru
    _
  // Predicated region
  $region10: #{forward.5} parent=0 // pred_check
    _
  $region11: #{forward.5} parent=0 // pred_check_branch
    %14 = sbr.rel (0) target = $region13
  $region12: #{forward.5} parent=0 // pred_region
    _
  $region13: #{forward.5} parent=0 // pred_fallthru
    _
  // Predicated region
  $region14: #{forward.5} parent=0 // pred_check
    _
  $region15: #{forward.5} parent=0 // pred_check_branch
    %16 = sbr.rel (0) target = $region17
  $region16: #{forward.5} parent=0 // pred_region
    _
  $region17: #{forward.5} parent=0 // pred_fallthru
    _
  %v18 = vld [vmem:[%s0] sm:$0xff]
  %v19 = vld [vmem:[%s0 + $0x8] sm:$0xff]
  %v20 = vld [vmem:[%s0 + $0x10] sm:$0xff]
  %v21 = vld [vmem:[%s0 + $0x18] sm:$0xff]
  %v22 = vpack.c.bf16 %v20, %v18
  %v23 = vpack.c.bf16 %v21, %v19
  %v24 = vld [vmem:[%s1] sm:$0xf]
  %v25 = vld [vmem:[%s1 + $0x4] sm:$0xf]
  %v26 = vld [vmem:[%s1 + $0x8] sm:$0xf]
  %v27 = vld [vmem:[%s1 + $0xc] sm:$0xf]
  %v28 = vld [vmem:[%s1 + $0x10] sm:$0xf]
  %v29 = vld [vmem:[%s1 + $0x14] sm:$0xf]
  %v30 = vld [vmem:[%s1 + $0x18] sm:$0xf]
  %v31 = vld [vmem:[%s1 + $0x1c] sm:$0xf]
  %v32 = vld [vmem:[%s1 + $0x20] sm:$0xf]
  %v33 = vld [vmem:[%s1 + $0x24] sm:$0xf]
  %v34 = vld [vmem:[%s1 + $0x28] sm:$0xf]
  %v35 = vld [vmem:[%s1 + $0x2c] sm:$0xf]
  %v36 = vld [vmem:[%s1 + $0x30] sm:$0xf]
  %v37 = vld [vmem:[%s1 + $0x34] sm:$0xf]
  %v38 = vld [vmem:[%s1 + $0x38] sm:$0xf]
  %v39 = vld [vmem:[%s1 + $0x3c] sm:$0xf]
  %v40 = vld [vmem:[%s1 + $0x40] sm:$0xf]
  %v41 = vld [vmem:[%s1 + $0x44] sm:$0xf]
  %v42 = vld [vmem:[%s1 + $0x48] sm:$0xf]
  %v43 = vld [vmem:[%s1 + $0x4c] sm:$0xf]
  %v44 = vld [vmem:[%s1 + $0x50] sm:$0xf]
  %v45 = vld [vmem:[%s1 + $0x54] sm:$0xf]
  %v46 = vld [vmem:[%s1 + $0x58] sm:$0xf]
  %v47 = vld [vmem:[%s1 + $0x5c] sm:$0xf]
  %v48 = vld [vmem:[%s1 + $0x60] sm:$0xf]
  %v49 = vld [vmem:[%s1 + $0x64] sm:$0xf]
  %v50 = vld [vmem:[%s1 + $0x68] sm:$0xf]
  %v51 = vld [vmem:[%s1 + $0x6c] sm:$0xf]
  %v52 = vld [vmem:[%s1 + $0x70] sm:$0xf]
  %v53 = vld [vmem:[%s1 + $0x74] sm:$0xf]
  %v54 = vld [vmem:[%s1 + $0x78] sm:$0xf]
  %v55 = vld [vmem:[%s1 + $0x7c] sm:$0xf]
  %v56 = vld [vmem:[%s2] sm:$0x1]
  %v58 = vlaneseq
  %v59 = vshrl.u32 %v58, 7
  %v60 = vsub.s32 0, %v59
  %v61 = vrot.slane %v56, %v60
  %v95 = vunpack.c.l.b16 %v24
  %v96 = vunpack.c.l.b16 %v25
  %v97 = vunpack.c.l.b16 %v26
  %v98 = vunpack.c.l.b16 %v27
  %v99 = vunpack.c.l.b16 %v28
  %v100 = vunpack.c.l.b16 %v29
  %v101 = vunpack.c.l.b16 %v30
  %v102 = vunpack.c.l.b16 %v31
  %v103 = vunpack.c.l.b16 %v32
  %v104 = vunpack.c.l.b16 %v33
  %v105 = vunpack.c.l.b16 %v34
  %v106 = vunpack.c.l.b16 %v35
  %v107 = vunpack.c.l.b16 %v36
  %v108 = vunpack.c.l.b16 %v37
  %v109 = vunpack.c.l.b16 %v38
  %v110 = vunpack.c.l.b16 %v39
  %v111 = vunpack.c.l.b16 %v40
  %v112 = vunpack.c.l.b16 %v41
  %v113 = vunpack.c.l.b16 %v42
  %v114 = vunpack.c.l.b16 %v43
  %v115 = vunpack.c.l.b16 %v44
  %v116 = vunpack.c.l.b16 %v45
  %v117 = vunpack.c.l.b16 %v46
  %v118 = vunpack.c.l.b16 %v47
  %v119 = vunpack.c.l.b16 %v48
  %v120 = vunpack.c.l.b16 %v49
  %v121 = vunpack.c.l.b16 %v50
  %v122 = vunpack.c.l.b16 %v51
  %v123 = vunpack.c.l.b16 %v52
  %v124 = vunpack.c.l.b16 %v53
  %v125 = vunpack.c.l.b16 %v54
  %v126 = vunpack.c.l.b16 %v55
  %v127 = vpack.c.b16 %v96, %v95
  %v128 = vpack.c.b16 %v98, %v97
  %v129 = vpack.c.b16 %v100, %v99
  %v130 = vpack.c.b16 %v102, %v101
  %v131 = vpack.c.b16 %v104, %v103
  %v132 = vpack.c.b16 %v106, %v105
  %v133 = vpack.c.b16 %v108, %v107
  %v134 = vpack.c.b16 %v110, %v109
  %v135 = vpack.c.b16 %v112, %v111
  %v136 = vpack.c.b16 %v114, %v113
  %v137 = vpack.c.b16 %v116, %v115
  %v138 = vpack.c.b16 %v118, %v117
  %v139 = vpack.c.b16 %v120, %v119
  %v140 = vpack.c.b16 %v122, %v121
  %v141 = vpack.c.b16 %v124, %v123
  %v142 = vpack.c.b16 %v126, %v125
  %159 = vmatprep.subr.bf16.mxu0 0
  %160 = vmatpush1.bf16.msra.mxu0 %v127
  %161 = vmatprep.subr.bf16.mxu0 0
  %162 = vmatpush1.bf16.msra.mxu0 %v128
  %163 = vmatprep.subr.bf16.mxu0 0
  %164 = vmatpush1.bf16.msra.mxu0 %v129
  %165 = vmatprep.subr.bf16.mxu0 0
  %166 = vmatpush1.bf16.msra.mxu0 %v130
  %167 = vmatprep.subr.bf16.mxu0 0
  %168 = vmatpush1.bf16.msra.mxu0 %v131
  %169 = vmatprep.subr.bf16.mxu0 0
  %170 = vmatpush1.bf16.msra.mxu0 %v132
  %171 = vmatprep.subr.bf16.mxu0 0
  %172 = vmatpush1.bf16.msra.mxu0 %v133
  %173 = vmatprep.subr.bf16.mxu0 0
  %174 = vmatpush1.bf16.msra.mxu0 %v134
  %175 = vmatprep.subr.bf16.mxu0 0
  %176 = vmatpush1.bf16.msra.mxu0 %v135
  %177 = vmatprep.subr.bf16.mxu0 0
  %178 = vmatpush1.bf16.msra.mxu0 %v136
  %179 = vmatprep.subr.bf16.mxu0 0
  %180 = vmatpush1.bf16.msra.mxu0 %v137
  %181 = vmatprep.subr.bf16.mxu0 0
  %182 = vmatpush1.bf16.msra.mxu0 %v138
  %183 = vmatprep.subr.bf16.mxu0 0
  %184 = vmatpush1.bf16.msra.mxu0 %v139
  %185 = vmatprep.subr.bf16.mxu0 0
  %186 = vmatpush1.bf16.msra.mxu0 %v140
  %187 = vmatprep.subr.bf16.mxu0 0
  %188 = vmatpush1.bf16.msra.mxu0 %v141
  %189 = vmatprep.subr.bf16.mxu0 0
  %190 = vmatpush1.bf16.msra.mxu0 %v142
  %191 = vmatprep.mubr.bf16.mxu0 %v23
  %192 = vmatmul.mubr.bf16.gmra.mrb[0].mxu0 %v22
  %v193 = vpop.f32.mrb[0].mxu0
  %v194 = vadd.f32 %v61, %v193
  %v195 = vpop.f32.mrb[0].mxu0
  %v196 = vpop.f32.mrb[0].mxu0
  %v197 = vadd.f32 %v61, %v196
  %v198 = vpop.f32.mrb[0].mxu0
  %199 = vdwg.mxu0
  %v200 = vld [vmem:[%s3] sm:$0xff]
  %v201 = vadd.f32 %v194, %v200
  %v202 = vadd.f32 %v197, %v200
  %v203 = vpack.c.bf16 %v202, %v201
  %v205 = vunpack.c.l.b16 %v203
  %v206 = vunpack.c.h.b16 %v203
  %v207 = vpack.c.b16 %v205, %v205
  %v208 = vpack.c.b16 %v206, %v206
  %vm211 = vcmask 257024
  %212 = vst.msk [vmem:[%s4] sm:$0xf] %vm211, %v207
  %213 = vst.msk [vmem:[%s4 + $0x4] sm:$0xf] %vm211, %v208
  // Predicated region
  $region18: #{forward.5} parent=0 // pred_check
    _
  $region19: #{forward.5} parent=0 // pred_check_branch
    %215 = sbr.rel (0) target = $region21
  $region20: #{forward.5} parent=0 // pred_region
    _
  $region21: #{forward.5} parent=0 // pred_fallthru
    _
  // Predicated region
  $region22: #{forward.5} parent=0 // pred_check
    _
  $region23: #{forward.5} parent=0 // pred_check_branch
    %217 = sbr.rel (0) target = $region25
  $region24: #{forward.5} parent=0 // pred_region
    _
  $region25: #{forward.5} parent=0 // pred_fallthru
    _

// kernel: forward.7
$region0: #{forward.7}
  #allocation0 [shape = 'u32[]', space=smem, size = 0x4, offset = 0x4, fixed_abs, tag = 'smem constant byte address 0x4 - core index']
  #allocation1 [shape = 'u32[144,128]{1,0:T(1,128)}', space=vmem, size = 0x12000, scoped, tag = 'internal scratch']
  %s0 = inlined_call_operand.vmem [shape: bf16[6,32], index: 0, kind: input, shape index: {}]
  %s1 = inlined_call_operand.vmem [shape: bf16[32,32], index: 1, kind: input, shape index: {}]
  %s2 = inlined_call_operand.vmem [shape: f32[1,32], index: 2, kind: input, shape index: {}]
  %s3 = inlined_call_operand.vmem [shape: f32[6,32], index: 3, kind: output, shape index: {}]
  %s4 = sld [smem:[#allocation0]]
  $region22: #{forward.7} parent=0
    _
  %s6 = ssub.s32 1, %s4
  %s7 = scalar_select 0, %s6, %s4
  // Predicated region
  $region2: #{forward.7} parent=0 // pred_check
    _
  $region3: #{forward.7} parent=0 // pred_check_branch
    %9 = sbr.rel (0) target = $region5
  $region4: #{forward.7} parent=0 // pred_region
    _
  $region5: #{forward.7} parent=0 // pred_fallthru
    _
  // Predicated region
  $region6: #{forward.7} parent=0 // pred_check
    _
  $region7: #{forward.7} parent=0 // pred_check_branch
    %11 = sbr.rel (0) target = $region9
  $region8: #{forward.7} parent=0 // pred_region
    _
  $region9: #{forward.7} parent=0 // pred_fallthru
    _
  // Predicated region
  $region10: #{forward.7} parent=0 // pred_check
    _
  $region11: #{forward.7} parent=0 // pred_check_branch
    %13 = sbr.rel (0) target = $region13
  $region12: #{forward.7} parent=0 // pred_region
    _
  $region13: #{forward.7} parent=0 // pred_fallthru
    _
  %v15 = vld [vmem:[%s0] sm:$0x7]
  %v16 = vld [vmem:[%s1] sm:$0xf]
  %v17 = vld [vmem:[%s1 + $0x4] sm:$0xf]
  %v18 = vld [vmem:[%s1 + $0x8] sm:$0xf]
  %v19 = vld [vmem:[%s1 + $0xc] sm:$0xf]
  %v20 = vld [vmem:[%s2] sm:$0x1]
  %v22 = vlaneseq
  %v23 = vshrl.u32 %v22, 7
  %v24 = vsub.s32 0, %v23
  %v25 = vrot.slane %v20, %v24
  %v31 = vunpack.c.l.b16 %v16
  %v32 = vunpack.c.l.b16 %v17
  %v33 = vunpack.c.l.b16 %v18
  %v34 = vunpack.c.l.b16 %v19
  %v35 = vpack.c.b16 %v32, %v31
  %v36 = vpack.c.b16 %v34, %v33
  %vm39 = vcmask 261120
  %v41 = vsel %vm39, %v15, 0
  %43 = vmatprep.subr.bf16.mxu0 0
  %44 = vmatpush1.bf16.msra.mxu0 %v35
  %45 = vmatprep.subr.bf16.mxu0 0
  %46 = vmatpush1.bf16.msra.mxu0 %v36
  %47 = vmatprep.subr.bf16.mxu0 0
  %48 = vmatpush1.bf16.msra.mxu0 0
  %49 = vmatprep.subr.bf16.mxu0 0
  %50 = vmatpush1.bf16.msra.mxu0 0
  %51 = vmatprep.subr.bf16.mxu0 0
  %52 = vmatpush1.bf16.msra.mxu0 0
  %53 = vmatprep.subr.bf16.mxu0 0
  %54 = vmatpush1.bf16.msra.mxu0 0
  %55 = vmatprep.subr.bf16.mxu0 0
  %56 = vmatpush1.bf16.msra.mxu0 0
  %57 = vmatprep.subr.bf16.mxu0 0
  %58 = vmatpush1.bf16.msra.mxu0 0
  %59 = vmatprep.subr.bf16.mxu0 0
  %60 = vmatpush1.bf16.msra.mxu0 0
  %61 = vmatprep.subr.bf16.mxu0 0
  %62 = vmatpush1.bf16.msra.mxu0 0
  %63 = vmatprep.subr.bf16.mxu0 0
  %64 = vmatpush1.bf16.msra.mxu0 0
  %65 = vmatprep.subr.bf16.mxu0 0
  %66 = vmatpush1.bf16.msra.mxu0 0
  %67 = vmatprep.subr.bf16.mxu0 0
  %68 = vmatpush1.bf16.msra.mxu0 0
  %69 = vmatprep.subr.bf16.mxu0 0
  %70 = vmatpush1.bf16.msra.mxu0 0
  %71 = vmatprep.subr.bf16.mxu0 0
  %72 = vmatpush1.bf16.msra.mxu0 0
  %73 = vmatprep.subr.bf16.mxu0 0
  %74 = vmatpush1.bf16.msra.mxu0 0
  %75 = vmatprep.mubr.bf16.mxu0 0
  %76 = vmatmul.mubr.bf16.gmra.mrb[0].mxu0 %v41
  %v77 = vpop.f32.mrb[0].mxu0
  %v78 = vadd.f32 %v25, %v77
  %v79 = vpop.f32.mrb[0].mxu0
  %v80 = vpop.f32.mrb[0].mxu0
  %v81 = vpop.f32.mrb[0].mxu0
  %82 = vdwg.mxu0
  %vm83 = vcmask 259072
  %84 = vst.msk [vmem:[%s3] sm:$0x3f] %vm83, %v78
  // Predicated region
  $region14: #{forward.7} parent=0 // pred_check
    _
  $region15: #{forward.7} parent=0 // pred_check_branch
    %86 = sbr.rel (0) target = $region17
  $region16: #{forward.7} parent=0 // pred_region
    _
  $region17: #{forward.7} parent=0 // pred_fallthru
    _
  // Predicated region
  $region18: #{forward.7} parent=0 // pred_check
    _
  $region19: #{forward.7} parent=0 // pred_check_branch
    %88 = sbr.rel (0) target = $region21
  $region20: #{forward.7} parent=0 // pred_region
    _
  $region21: #{forward.7} parent=0 // pred_fallthru
    _

// kernel: forward.6
$region0: #{forward.6}
  #allocation0 [shape = 'u32[]', space=smem, size = 0x4, offset = 0x4, fixed_abs, tag = 'smem constant byte address 0x4 - core index']
  #allocation1 [shape = 'u32[144,128]{1,0:T(1,128)}', space=vmem, size = 0x12000, scoped, tag = 'internal scratch']
  #allocation2 [shape = 'f32[3,32]{1,0:T(4,128)}', space=vmem, size = 0x800, scoped, tag = 'scratch operand']
  %s0 = inlined_call_operand.vmem [shape: bf16[2,3,32], index: 0, kind: input, shape index: {}]
  %s1 = inlined_call_operand.vmem [shape: f32[2,4,32], index: 1, kind: input, shape index: {}]
  %s2 = inlined_call_operand.vmem [shape: bf16[2,32,96], index: 2, kind: input, shape index: {}]
  %s3 = inlined_call_operand.vmem [shape: f32[2,1,96], index: 3, kind: input, shape index: {}]
  %s4 = inlined_call_operand.vmem [shape: bf16[2,32,32], index: 4, kind: input, shape index: {}]
  %s5 = inlined_call_operand.vmem [shape: f32[2,1,32], index: 5, kind: input, shape index: {}]
  %s6 = inlined_call_operand.vmem [shape: bf16[2,32,128], index: 6, kind: input, shape index: {}]
  %s7 = inlined_call_operand.vmem [shape: f32[2,1,128], index: 7, kind: input, shape index: {}]
  %s8 = inlined_call_operand.vmem [shape: bf16[2,128,32], index: 8, kind: input, shape index: {}]
  %s9 = inlined_call_operand.vmem [shape: f32[2,1,32], index: 9, kind: input, shape index: {}]
  %s10 = inlined_call_operand.vmem [shape: f32[2,32], index: 10, kind: input, shape index: {}]
  %s11 = inlined_call_operand.vmem [shape: bf16[2,3,32], index: 11, kind: output, shape index: {}]
  %s12 = sld [smem:[#allocation0]]
  $region89: #{forward.6} parent=0
    _
  %s14 = ssub.s32 1, %s12
  %s15 = scalar_select 0, %s14, %s12
  loop: start=0, step=1, limit=6
  $region2: #{forward.6} parent=0 // loop_pre_header
    _
  $region3: #{forward.6} parent=0 // loop_header
    %s17 = sphi 0, %s21
    %p18 = scmp.ge.s32.totalorder %s17, 6
    %s24 = sphi 0, %s36
    %s25 = sphi 0, %s32
    %s26 = sphi 0, %s24
    %s27 = sphi 0, %s25
    %s28 = sphi 0, %s26
    %s29 = sphi 0, %s27
    %s39 = sphi 0, %s41
    %s42 = sphi 0, %s39
    %s43 = sphi 0, %s42
    %s59 = sphi 0, %s43
    %s63 = sphi 0, %s63
    %s65 = sphi 0, %s63
    %s66 = sphi 0, %s65
    %s80 = sphi 0, %s66
    %s84 = sphi 0, %s84
    %s86 = sphi 0, %s84
    %s87 = sphi 0, %s86
    %s101 = sphi 0, %s87
    %s105 = sphi 0, %s105
    %s107 = sphi 0, %s105
    %s108 = sphi 0, %s107
    %s122 = sphi 0, %s108
    %s126 = sphi 0, %s126
    %s128 = sphi 0, %s126
    %s129 = sphi 0, %s128
    %s143 = sphi 0, %s129
    %s147 = sphi 0, %s147
    %s149 = sphi 0, %s147
    %s150 = sphi 0, %s149
    %s164 = sphi 0, %s150
    %s168 = sphi 0, %s168
    %s170 = sphi 0, %s168
    %s171 = sphi 0, %s170
    %s185 = sphi 0, %s171
    %s189 = sphi 0, %s189
    %s191 = sphi 0, %s189
    %s192 = sphi 0, %s191
    %s206 = sphi 0, %s192
    %s210 = sphi 0, %s210
    %s212 = sphi 0, %s210
    %s213 = sphi 0, %s212
    %s227 = sphi 0, %s213
    %s231 = sphi 0, %s231
    %s233 = sphi 0, %s231
    %s234 = sphi 0, %s233
    %s248 = sphi 0, %s234
    %s252 = sphi 0, %s252
    %s254 = sphi 0, %s252
    %s255 = sphi 0, %s254
    %s269 = sphi 0, %s255
    %s275 = sphi 0, %s277
    %s278 = sphi 0, %s275
    %s279 = sphi 0, %s278
    %s295 = sphi 0, %s279
  $region4: #{forward.6} parent=0 // loop_header_branch
    %20 = sbr.rel (%p18) target = $region8
  $region5: #{forward.6} parent=0 // loop_body
    %s22 = ssub.s32 %s17, 1
    %s23 = ssub.s32 %s17, 2
    %s30 = sadd.s32 1, %s25
    %p31 = scmp.ge.s32.totalorder %s30, 2
    %s32 = scalar_select %p31, 0, %s30
    %s33 = sadd.s32 1, %s24
    %s34 = scalar_select %p31, %s33, %s24
    %p35 = scmp.ge.s32.totalorder %s34, 2
    %s36 = scalar_select %p35, 0, %s34
    %s37 = ssub.s32 %s24, %s36
    %p38 = scmp.eq.s32.totalorder %s37, 0
    %s40 = sadd.s32 %s39, 1
    %s41 = scalar_select %p38, %s39, %s40
    %p44 = pneg %p38
    %p45 = scmp.eq.s32.totalorder %s17, 3
    %p46 = por %p44, %p45
    %p47 = scmp.ne.s32.totalorder %s39, %s42
    %p48 = scmp.eq.s32.totalorder %s17, 0
    %p49 = por %p47, %p48
    %p50 = scmp.ne.s32.totalorder %s39, %s42
    %p51 = scmp.eq.s32.totalorder %s22, 3
    %p52 = por %p50, %p51
    %p53 = scmp.ne.s32.totalorder %s42, %s43
    %p54 = scmp.eq.s32.totalorder %s22, 0
    %p55 = por %p53, %p54
    %p56 = scmp.ne.s32.totalorder %s42, %s43
    %p57 = scmp.eq.s32.totalorder %s23, 3
    %p58 = por %p56, %p57
    %p60 = scmp.ne.s32.totalorder %s43, %s59
    %p61 = scmp.eq.s32.totalorder %s23, 0
    %p62 = por %p60, %p61
    %s64 = sadd.s32 %s63, 1
    %p67 = scmp.eq.s32.totalorder %s17, 3
    %p68 = scmp.ne.s32.totalorder %s63, %s65
    %p69 = scmp.eq.s32.totalorder %s17, 0
    %p70 = por %p68, %p69
    %p71 = scmp.ne.s32.totalorder %s63, %s65
    %p72 = scmp.eq.s32.totalorder %s22, 3
    %p73 = por %p71, %p72
    %p74 = scmp.ne.s32.totalorder %s65, %s66
    %p75 = scmp.eq.s32.totalorder %s22, 0
    %p76 = por %p74, %p75
    %p77 = scmp.ne.s32.totalorder %s65, %s66
    %p78 = scmp.eq.s32.totalorder %s23, 3
    %p79 = por %p77, %p78
    %p81 = scmp.ne.s32.totalorder %s66, %s80
    %p82 = scmp.eq.s32.totalorder %s23, 0
    %p83 = por %p81, %p82
    %s85 = sadd.s32 %s84, 1
    %p88 = scmp.eq.s32.totalorder %s17, 3
    %p89 = scmp.ne.s32.totalorder %s84, %s86
    %p90 = scmp.eq.s32.totalorder %s17, 0
    %p91 = por %p89, %p90
    %p92 = scmp.ne.s32.totalorder %s84, %s86
    %p93 = scmp.eq.s32.totalorder %s22, 3
    %p94 = por %p92, %p93
    %p95 = scmp.ne.s32.totalorder %s86, %s87
    %p96 = scmp.eq.s32.totalorder %s22, 0
    %p97 = por %p95, %p96
    %p98 = scmp.ne.s32.totalorder %s86, %s87
    %p99 = scmp.eq.s32.totalorder %s23, 3
    %p100 = por %p98, %p99
    %p102 = scmp.ne.s32.totalorder %s87, %s101
    %p103 = scmp.eq.s32.totalorder %s23, 0
    %p104 = por %p102, %p103
    %s106 = sadd.s32 %s105, 1
    %p109 = scmp.eq.s32.totalorder %s17, 3
    %p110 = scmp.ne.s32.totalorder %s105, %s107
    %p111 = scmp.eq.s32.totalorder %s17, 0
    %p112 = por %p110, %p111
    %p113 = scmp.ne.s32.totalorder %s105, %s107
    %p114 = scmp.eq.s32.totalorder %s22, 3
    %p115 = por %p113, %p114
    %p116 = scmp.ne.s32.totalorder %s107, %s108
    %p117 = scmp.eq.s32.totalorder %s22, 0
    %p118 = por %p116, %p117
    %p119 = scmp.ne.s32.totalorder %s107, %s108
    %p120 = scmp.eq.s32.totalorder %s23, 3
    %p121 = por %p119, %p120
    %p123 = scmp.ne.s32.totalorder %s108, %s122
    %p124 = scmp.eq.s32.totalorder %s23, 0
    %p125 = por %p123, %p124
    %s127 = sadd.s32 %s126, 1
    %p130 = scmp.eq.s32.totalorder %s17, 3
    %p131 = scmp.ne.s32.totalorder %s126, %s128
    %p132 = scmp.eq.s32.totalorder %s17, 0
    %p133 = por %p131, %p132
    %p134 = scmp.ne.s32.totalorder %s126, %s128
    %p135 = scmp.eq.s32.totalorder %s22, 3
    %p136 = por %p134, %p135
    %p137 = scmp.ne.s32.totalorder %s128, %s129
    %p138 = scmp.eq.s32.totalorder %s22, 0
    %p139 = por %p137, %p138
    %p140 = scmp.ne.s32.totalorder %s128, %s129
    %p141 = scmp.eq.s32.totalorder %s23, 3
    %p142 = por %p140, %p141
    %p144 = scmp.ne.s32.totalorder %s129, %s143
    %p145 = scmp.eq.s32.totalorder %s23, 0
    %p146 = por %p144, %p145
    %s148 = sadd.s32 %s147, 1
    %p151 = scmp.eq.s32.totalorder %s17, 3
    %p152 = scmp.ne.s32.totalorder %s147, %s149
    %p153 = scmp.eq.s32.totalorder %s17, 0
    %p154 = por %p152, %p153
    %p155 = scmp.ne.s32.totalorder %s147, %s149
    %p156 = scmp.eq.s32.totalorder %s22, 3
    %p157 = por %p155, %p156
    %p158 = scmp.ne.s32.totalorder %s149, %s150
    %p159 = scmp.eq.s32.totalorder %s22, 0
    %p160 = por %p158, %p159
    %p161 = scmp.ne.s32.totalorder %s149, %s150
    %p162 = scmp.eq.s32.totalorder %s23, 3
    %p163 = por %p161, %p162
    %p165 = scmp.ne.s32.totalorder %s150, %s164
    %p166 = scmp.eq.s32.totalorder %s23, 0
    %p167 = por %p165, %p166
    %s169 = sadd.s32 %s168, 1
    %p172 = scmp.eq.s32.totalorder %s17, 3
    %p173 = scmp.ne.s32.totalorder %s168, %s170
    %p174 = scmp.eq.s32.totalorder %s17, 0
    %p175 = por %p173, %p174
    %p176 = scmp.ne.s32.totalorder %s168, %s170
    %p177 = scmp.eq.s32.totalorder %s22, 3
    %p178 = por %p176, %p177
    %p179 = scmp.ne.s32.totalorder %s170, %s171
    %p180 = scmp.eq.s32.totalorder %s22, 0
    %p181 = por %p179, %p180
    %p182 = scmp.ne.s32.totalorder %s170, %s171
    %p183 = scmp.eq.s32.totalorder %s23, 3
    %p184 = por %p182, %p183
    %p186 = scmp.ne.s32.totalorder %s171, %s185
    %p187 = scmp.eq.s32.totalorder %s23, 0
    %p188 = por %p186, %p187
    %s190 = sadd.s32 %s189, 1
    %p193 = scmp.eq.s32.totalorder %s17, 3
    %p194 = scmp.ne.s32.totalorder %s189, %s191
    %p195 = scmp.eq.s32.totalorder %s17, 0
    %p196 = por %p194, %p195
    %p197 = scmp.ne.s32.totalorder %s189, %s191
    %p198 = scmp.eq.s32.totalorder %s22, 3
    %p199 = por %p197, %p198
    %p200 = scmp.ne.s32.totalorder %s191, %s192
    %p201 = scmp.eq.s32.totalorder %s22, 0
    %p202 = por %p200, %p201
    %p203 = scmp.ne.s32.totalorder %s191, %s192
    %p204 = scmp.eq.s32.totalorder %s23, 3
    %p205 = por %p203, %p204
    %p207 = scmp.ne.s32.totalorder %s192, %s206
    %p208 = scmp.eq.s32.totalorder %s23, 0
    %p209 = por %p207, %p208
    %s211 = sadd.s32 %s210, 1
    %p214 = scmp.eq.s32.totalorder %s17, 3
    %p215 = scmp.ne.s32.totalorder %s210, %s212
    %p216 = scmp.eq.s32.totalorder %s17, 0
    %p217 = por %p215, %p216
    %p218 = scmp.ne.s32.totalorder %s210, %s212
    %p219 = scmp.eq.s32.totalorder %s22, 3
    %p220 = por %p218, %p219
    %p221 = scmp.ne.s32.totalorder %s212, %s213
    %p222 = scmp.eq.s32.totalorder %s22, 0
    %p223 = por %p221, %p222
    %p224 = scmp.ne.s32.totalorder %s212, %s213
    %p225 = scmp.eq.s32.totalorder %s23, 3
    %p226 = por %p224, %p225
    %p228 = scmp.ne.s32.totalorder %s213, %s227
    %p229 = scmp.eq.s32.totalorder %s23, 0
    %p230 = por %p228, %p229
    %s232 = sadd.s32 %s231, 1
    %p235 = scmp.eq.s32.totalorder %s17, 3
    %p236 = scmp.ne.s32.totalorder %s231, %s233
    %p237 = scmp.eq.s32.totalorder %s17, 0
    %p238 = por %p236, %p237
    %p239 = scmp.ne.s32.totalorder %s231, %s233
    %p240 = scmp.eq.s32.totalorder %s22, 3
    %p241 = por %p239, %p240
    %p242 = scmp.ne.s32.totalorder %s233, %s234
    %p243 = scmp.eq.s32.totalorder %s22, 0
    %p244 = por %p242, %p243
    %p245 = scmp.ne.s32.totalorder %s233, %s234
    %p246 = scmp.eq.s32.totalorder %s23, 3
    %p247 = por %p245, %p246
    %p249 = scmp.ne.s32.totalorder %s234, %s248
    %p250 = scmp.eq.s32.totalorder %s23, 0
    %p251 = por %p249, %p250
    %s253 = sadd.s32 %s252, 1
    %p256 = scmp.eq.s32.totalorder %s17, 3
    %p257 = scmp.ne.s32.totalorder %s252, %s254
    %p258 = scmp.eq.s32.totalorder %s17, 0
    %p259 = por %p257, %p258
    %p260 = scmp.ne.s32.totalorder %s252, %s254
    %p261 = scmp.eq.s32.totalorder %s22, 3
    %p262 = por %p260, %p261
    %p263 = scmp.ne.s32.totalorder %s254, %s255
    %p264 = scmp.eq.s32.totalorder %s22, 0
    %p265 = por %p263, %p264
    %p266 = scmp.ne.s32.totalorder %s254, %s255
    %p267 = scmp.eq.s32.totalorder %s23, 3
    %p268 = por %p266, %p267
    %p270 = scmp.ne.s32.totalorder %s255, %s269
    %p271 = scmp.eq.s32.totalorder %s23, 0
    %p272 = por %p270, %p271
    %s273 = ssub.s32 %s24, %s36
    %p274 = scmp.eq.s32.totalorder %s273, 0
    %s276 = sadd.s32 %s275, 1
    %s277 = scalar_select %p274, %s275, %s276
    %p280 = pneg %p274
    %p281 = scmp.eq.s32.totalorder %s17, 3
    %p282 = por %p280, %p281
    %p283 = scmp.ne.s32.totalorder %s275, %s278
    %p284 = scmp.eq.s32.totalorder %s17, 0
    %p285 = por %p283, %p284
    %p286 = scmp.ne.s32.totalorder %s275, %s278
    %p287 = scmp.eq.s32.totalorder %s22, 3
    %p288 = por %p286, %p287
    %p289 = scmp.ne.s32.totalorder %s278, %s279
    %p290 = scmp.eq.s32.totalorder %s22, 0
    %p291 = por %p289, %p290
    %p292 = scmp.ne.s32.totalorder %s278, %s279
    %p293 = scmp.eq.s32.totalorder %s23, 3
    %p294 = por %p292, %p293
    %p296 = scmp.ne.s32.totalorder %s279, %s295
    %p297 = scmp.eq.s32.totalorder %s23, 0
    %p298 = por %p296, %p297
    %p299 = scmp.le.s32.totalorder 1, %s17
    %p300 = scmp.lt.s32.totalorder %s17, 5
    %p301 = pnand %p299, %p300
    %p302 = pneg %p301
    // Predicated region
    $region9: #{forward.6} parent=5 // pred_check
      _
    $region10: #{forward.6} parent=5 // pred_check_branch
      %304 = sbr.rel (%p301) target = $region12
    $region11: #{forward.6} parent=5 // pred_region
      %s305 = ssub.s32 %s17, 1
      // Predicated region
      $region13: #{forward.6} parent=11 // pred_check
        %p306 = pneg %p76
      $region14: #{forward.6} parent=11 // pred_check_branch
        %308 = sbr.rel (%p306) target = $region16
      $region15: #{forward.6} parent=11 // pred_region
        _
      $region16: #{forward.6} parent=11 // pred_fallthru
        _
      // Predicated region
      $region17: #{forward.6} parent=11 // pred_check
        %p309 = pneg %p97
      $region18: #{forward.6} parent=11 // pred_check_branch
        %311 = sbr.rel (%p309) target = $region20
      $region19: #{forward.6} parent=11 // pred_region
        _
      $region20: #{forward.6} parent=11 // pred_fallthru
        _
      // Predicated region
      $region21: #{forward.6} parent=11 // pred_check
        %p312 = pneg %p118
      $region22: #{forward.6} parent=11 // pred_check_branch
        %314 = sbr.rel (%p312) target = $region24
      $region23: #{forward.6} parent=11 // pred_region
        _
      $region24: #{forward.6} parent=11 // pred_fallthru
        _
      // Predicated region
      $region25: #{forward.6} parent=11 // pred_check
        %p315 = pneg %p139
      $region26: #{forward.6} parent=11 // pred_check_branch
        %317 = sbr.rel (%p315) target = $region28
      $region27: #{forward.6} parent=11 // pred_region
        _
      $region28: #{forward.6} parent=11 // pred_fallthru
        _
      // Predicated region
      $region29: #{forward.6} parent=11 // pred_check
        %p318 = pneg %p160
      $region30: #{forward.6} parent=11 // pred_check_branch
        %320 = sbr.rel (%p318) target = $region32
      $region31: #{forward.6} parent=11 // pred_region
        _
      $region32: #{forward.6} parent=11 // pred_fallthru
        _
      // Predicated region
      $region33: #{forward.6} parent=11 // pred_check
        %p321 = pneg %p181
      $region34: #{forward.6} parent=11 // pred_check_branch
        %323 = sbr.rel (%p321) target = $region36
      $region35: #{forward.6} parent=11 // pred_region
        _
      $region36: #{forward.6} parent=11 // pred_fallthru
        _
      // Predicated region
      $region37: #{forward.6} parent=11 // pred_check
        %p324 = pneg %p202
      $region38: #{forward.6} parent=11 // pred_check_branch
        %326 = sbr.rel (%p324) target = $region40
      $region39: #{forward.6} parent=11 // pred_region
        _
      $region40: #{forward.6} parent=11 // pred_fallthru
        _
      // Predicated region
      $region41: #{forward.6} parent=11 // pred_check
        %p327 = pneg %p223
      $region42: #{forward.6} parent=11 // pred_check_branch
        %329 = sbr.rel (%p327) target = $region44
      $region43: #{forward.6} parent=11 // pred_region
        _
      $region44: #{forward.6} parent=11 // pred_fallthru
        _
      // Predicated region
      $region45: #{forward.6} parent=11 // pred_check
        %p330 = pneg %p244
      $region46: #{forward.6} parent=11 // pred_check_branch
        %332 = sbr.rel (%p330) target = $region48
      $region47: #{forward.6} parent=11 // pred_region
        _
      $region48: #{forward.6} parent=11 // pred_fallthru
        _
      // Predicated region
      $region49: #{forward.6} parent=11 // pred_check
        %p333 = pneg %p265
      $region50: #{forward.6} parent=11 // pred_check_branch
        %335 = sbr.rel (%p333) target = $region52
      $region51: #{forward.6} parent=11 // pred_region
        _
      $region52: #{forward.6} parent=11 // pred_fallthru
        _
    $region12: #{forward.6} parent=5 // pred_fallthru
      _
    %p336 = scmp.lt.s32.totalorder %s17, 4
    // Predicated region
    $region53: #{forward.6} parent=5 // pred_check
      %p337 = pneg %p336
    $region54: #{forward.6} parent=5 // pred_check_branch
      %339 = sbr.rel (%p337) target = $region56
    $region55: #{forward.6} parent=5 // pred_region
      // Predicated region
      $region57: #{forward.6} parent=55 // pred_check
        %p340 = pneg %p49
      $region58: #{forward.6} parent=55 // pred_check_branch
        %342 = sbr.rel (%p340) target = $region60
      $region59: #{forward.6} parent=55 // pred_region
        %p343 = scmp.lt.s32.totalorder %s24, 1
        %s344 = scalar_select %p343, %s24, 1
        %s345 = smul.addr %s344, 2
        %s346 = scalar_lea.vmem %s0, %s345
      $region60: #{forward.6} parent=55 // pred_fallthru
        _
    $region56: #{forward.6} parent=5 // pred_fallthru
      _
    %p347 = scmp.le.s32.totalorder 1, %s17
    %p348 = scmp.lt.s32.totalorder %s17, 5
    %p349 = pnand %p347, %p348
    %p350 = pneg %p349
    // Predicated region
    $region61: #{forward.6} parent=5 // pred_check
      _
    $region62: #{forward.6} parent=5 // pred_check_branch
      %352 = sbr.rel (%p349) target = $region64
    $region63: #{forward.6} parent=5 // pred_region
      %s353 = ssub.s32 %s17, 1
      %p354 = scmp.lt.s32.totalorder %s26, 1
      %s355 = scalar_select %p354, %s26, 1
      %s356 = smul.addr %s355, 2
      %s357 = scalar_lea.vmem %s0, %s356
      %p358 = pneg %p55
      %p359 = pneg %p52
      %p360 = pneg %p76
      %p361 = pneg %p73
      %p362 = pneg %p97
      %p363 = pneg %p94
      %p364 = pneg %p118
      %p365 = pneg %p115
      %p366 = pneg %p139
      %p367 = pneg %p136
      %p368 = pneg %p160
      %p369 = pneg %p157
      %p370 = pneg %p181
      %p371 = pneg %p178
      %p372 = pneg %p202
      %p373 = pneg %p199
      %p374 = pneg %p223
      %p375 = pneg %p220
      %p376 = pneg %p244
      %p377 = pneg %p241
      %p378 = pneg %p265
      %p379 = pneg %p262
      %p380 = pneg %p291
      %p381 = pneg %p288
      %p382 = scmp.lt.s32.totalorder %s26, 1
      %s383 = scalar_select %p382, %s26, 1
      %s384 = smul.addr %s383, 2
      %s385 = scalar_lea.vmem %s11, %s384
      %p386 = scmp.lt.s32.totalorder %s26, 1
      %s387 = scalar_select %p386, %s26, 1
      %s388 = smul.addr %s387, 2
      %s389 = scalar_lea.vmem %s0, %s388
      %p390 = scmp.lt.s32.totalorder %s26, 1
      %s391 = scalar_select %p390, %s26, 1
      %s392 = smul.addr %s391, 2
      %s393 = scalar_lea.vmem %s11, %s392
      %p395 = scmp.eq.s32.totalorder %s27, 0
      // Predicated region
      $region65: #{forward.6} parent=63 // pred_check
        %p396 = pneg %p395
      $region66: #{forward.6} parent=63 // pred_check_branch
        %398 = sbr.rel (%p396) target = $region68
      $region67: #{forward.6} parent=63 // pred_region
        %v399 = vld [vmem:[%s389] sm:$0x3]
        %v400 = vunpack.c.l.bf16 %v399
        %vm401 = vcmask 256000
        %402 = vst.msk [vmem:[#allocation2] sm:$0x7] %vm401, %v400
      $region68: #{forward.6} parent=63 // pred_fallthru
        _
      %v403 = vld [vmem:[#allocation2] sm:$0x7]
      %s404 = smul.u32 %s27, 4
      %s405 = scalar_lea.vmem %s1, %s404
      %v406 = vld [vmem:[%s405] sm:$0xf]
      %vm407 = vcmask 256000
      %v408 = vsel %vm407, %v403, 0.0
      %409 = vadd.xlane.f32.xlu0 %v408
      %v410 = vpop.xlane.xlu0 %409
      %v411 = vrcp.pop 32.0
      %v412 = vmul.f32 %v410, %v411
      %v413 = vsub.f32 %v403, %v412
      %v414 = vmul.f32 %v413, %v413
      %v415 = vsel %vm407, %v414, 0.0
      %416 = vadd.xlane.f32.xlu0 %v415
      %v417 = vpop.xlane.xlu0 %416
      %v418 = vmul.f32 %v417, %v411
      %v419 = vadd.f32 %v418, 1e-05
      %v420 = vrsqrt.pop %v419
      %v421 = vmul.f32 %v413, %v420
      %v422 = vlaneseq
      %v423 = vshrl.u32 %v422, 7
      %v424 = vsub.s32 0, %v423
      %v425 = vrot.slane %v406, %v424
      %v426 = vmul.f32 %v421, %v425
      %v427 = vlaneseq
      %v428 = vshrl.u32 %v427, 7
      %v429 = vsub.s32 1, %v428
      %v430 = vrot.slane %v406, %v429
      %v431 = vadd.f32 %v426, %v430
      %v432 = vpack.c.bf16 %v431, %v431
      %s433 = smul.addr %s404, 4
      %s434 = scalar_lea.vmem %s2, %s433
      %v435 = vld [vmem:[%s434] sm:$0xf]
      %v436 = vld [vmem:[%s434 + $0x4] sm:$0xf]
      %v437 = vld [vmem:[%s434 + $0x8] sm:$0xf]
      %v438 = vld [vmem:[%s434 + $0xc] sm:$0xf]
      %s439 = scalar_lea.vmem %s3, %s27
      %v440 = vld [vmem:[%s439] sm:$0x1]
      %v442 = vlaneseq
      %v443 = vshrl.u32 %v442, 7
      %v444 = vsub.s32 0, %v443
      %v445 = vrot.slane %v440, %v444
      %v451 = vunpack.c.l.b16 %v435
      %v452 = vunpack.c.l.b16 %v436
      %v453 = vunpack.c.l.b16 %v437
      %v454 = vunpack.c.l.b16 %v438
      %v455 = vpack.c.b16 %v452, %v451
      %v456 = vpack.c.b16 %v454, %v453
      %vm459 = vcmask 261120
      %v461 = vsel %vm459, %v432, 0
      %463 = vmatprep.subr.bf16.mxu0 0
      %464 = vmatpush1.bf16.msra.mxu0 %v455
      %465 = vmatprep.subr.bf16.mxu0 0
      %466 = vmatpush1.bf16.msra.mxu0 %v456
      %467 = vmatprep.subr.bf16.mxu0 0
      %468 = vmatpush1.bf16.msra.mxu0 0
      %469 = vmatprep.subr.bf16.mxu0 0
      %470 = vmatpush1.bf16.msra.mxu0 0
      %471 = vmatprep.subr.bf16.mxu0 0
      %472 = vmatpush1.bf16.msra.mxu0 0
      %473 = vmatprep.subr.bf16.mxu0 0
      %474 = vmatpush1.bf16.msra.mxu0 0
      %475 = vmatprep.subr.bf16.mxu0 0
      %476 = vmatpush1.bf16.msra.mxu0 0
      %477 = vmatprep.subr.bf16.mxu0 0
      %478 = vmatpush1.bf16.msra.mxu0 0
      %479 = vmatprep.subr.bf16.mxu0 0
      %480 = vmatpush1.bf16.msra.mxu0 0
      %481 = vmatprep.subr.bf16.mxu0 0
      %482 = vmatpush1.bf16.msra.mxu0 0
      %483 = vmatprep.subr.bf16.mxu0 0
      %484 = vmatpush1.bf16.msra.mxu0 0
      %485 = vmatprep.subr.bf16.mxu0 0
      %486 = vmatpush1.bf16.msra.mxu0 0
      %487 = vmatprep.subr.bf16.mxu0 0
      %488 = vmatpush1.bf16.msra.mxu0 0
      %489 = vmatprep.subr.bf16.mxu0 0
      %490 = vmatpush1.bf16.msra.mxu0 0
      %491 = vmatprep.subr.bf16.mxu0 0
      %492 = vmatpush1.bf16.msra.mxu0 0
      %493 = vmatprep.subr.bf16.mxu0 0
      %494 = vmatpush1.bf16.msra.mxu0 0
      %495 = vmatprep.mubr.bf16.mxu0 0
      %496 = vmatmul.mubr.bf16.gmra.mrb[0].mxu0 %v461
      %v497 = vpop.f32.mrb[0].mxu0
      %v498 = vadd.f32 %v445, %v497
      %v499 = vpop.f32.mrb[0].mxu0
      %v500 = vpop.f32.mrb[0].mxu0
      %v501 = vpop.f32.mrb[0].mxu0
      %502 = vdwg.mxu0
      %v503 = vpack.c.bf16 %v498, %v498
      %v504 = vlaneseq
      %v505 = vand.u32 %v504, 127
      %vm506 = vcmp.ge.s32.totalorder %v505, 0
      %vm507 = vcmp.lt.s32.totalorder %v505, 8
      %vm508 = vmand %vm506, %vm507
      %v509 = vsel %vm508, 1, 0
      %v510 = vcvt.s32.f32 %v509
      %v511 = vmul.f32 %v498, %v510
      %v512 = vpack.c.bf16 %v511, %v511
      %514 = vrot.lane.b32.xlu0 %v503, 96
      %v515 = vpop.permute.xlu0 %514
      %v517 = vsel %vm459, %v512, 0
      %v520 = vsel %vm459, %v515, 0
      %522 = vmatprep.subr.bf16.mxu0 0
      %523 = vmatpush1.bf16.xpose.msra.mxu0 %v520
      %524 = vmatprep.subr.bf16.mxu0 0
      %525 = vmatpush1.bf16.xpose.msra.mxu0 0
      %526 = vmatprep.subr.bf16.mxu0 0
      %527 = vmatpush1.bf16.xpose.msra.mxu0 0
      %528 = vmatprep.subr.bf16.mxu0 0
      %529 = vmatpush1.bf16.xpose.msra.mxu0 0
      %530 = vmatprep.subr.bf16.mxu0 0
      %531 = vmatpush1.bf16.xpose.msra.mxu0 0
      %532 = vmatprep.subr.bf16.mxu0 0
      %533 = vmatpush1.bf16.xpose.msra.mxu0 0
      %534 = vmatprep.subr.bf16.mxu0 0
      %535 = vmatpush1.bf16.xpose.msra.mxu0 0
      %536 = vmatprep.subr.bf16.mxu0 0
      %537 = vmatpush1.bf16.xpose.msra.mxu0 0
      %538 = vmatprep.subr.bf16.mxu0 0
      %539 = vmatpush1.bf16.xpose.msra.mxu0 0
      %540 = vmatprep.subr.bf16.mxu0 0
      %541 = vmatpush1.bf16.xpose.msra.mxu0 0
      %542 = vmatprep.subr.bf16.mxu0 0
      %543 = vmatpush1.bf16.xpose.msra.mxu0 0
      %544 = vmatprep.subr.bf16.mxu0 0
      %545 = vmatpush1.bf16.xpose.msra.mxu0 0
      %546 = vmatprep.subr.bf16.mxu0 0
      %547 = vmatpush1.bf16.xpose.msra.mxu0 0
      %548 = vmatprep.subr.bf16.mxu0 0
      %549 = vmatpush1.bf16.xpose.msra.mxu0 0
      %550 = vmatprep.subr.bf16.mxu0 0
      %551 = vmatpush1.bf16.xpose.msra.mxu0 0
      %552 = vmatprep.subr.bf16.mxu0 0
      %553 = vmatpush1.bf16.xpose.msra.mxu0 0
      %554 = vmatprep.mubr.bf16.mxu0 0
      %555 = vmatmul.mubr.bf16.gmra.mrb[0].mxu0 %v517
      %v556 = vpop.f32.mrb[0].mxu0
      %v557 = vadd.f32 0.0, %v556
      %v558 = vpop.f32.mrb[0].mxu0
      %v559 = vpop.f32.mrb[0].mxu0
      %v560 = vpop.f32.mrb[0].mxu0
      %561 = vdwg.mxu0
      %v562 = vmul.f32 %v557, 0.35355338
      %vm563 = vcmask 18432
      %v564 = vsel %vm563, %v562, -inf
      %565 = vmax.xlane.f32.xlu0 %v564
      %v566 = vpop.xlane.xlu0 %565
      %v567 = vsub.f32 %v562, %v566
      %v568 = vmul.f32 %v567, 1.442695
      %v569 = vpow.pop %v568
      %v570 = vsel %vm563, %v569, 0.0
      %571 = vadd.xlane.f32.xlu0 %v570
      %v572 = vpop.xlane.xlu0 %571
      %v573 = vrcp.pop %v572
      %v574 = vmul.f32 %v569, %v573
      %v575 = vpack.c.bf16 %v574, %v574
      %577 = vrot.lane.b32.xlu0 %v510, 64
      %v578 = vpop.permute.xlu0 %577
      %v580 = vmul.f32 %v498, %v578
      %v581 = vpack.c.bf16 %v580, %v580
      %vm582 = vcmp.ge.s32.totalorder %v505, 8
      %vm583 = vcmp.lt.s32.totalorder %v505, 16
      %vm584 = vmand %vm582, %vm583
      %v585 = vsel %vm584, 1, 0
      %v586 = vcvt.s32.f32 %v585
      %v587 = vmul.f32 %v498, %v586
      %v588 = vpack.c.bf16 %v587, %v587
      %v590 = vsel %vm459, %v588, 0
      %592 = vmatprep.subr.bf16.mxu0 0
      %593 = vmatpush1.bf16.xpose.msra.mxu0 %v520
      %594 = vmatprep.subr.bf16.mxu0 0
      %595 = vmatpush1.bf16.xpose.msra.mxu0 0
      %596 = vmatprep.subr.bf16.mxu0 0
      %597 = vmatpush1.bf16.xpose.msra.mxu0 0
      %598 = vmatprep.subr.bf16.mxu0 0
      %599 = vmatpush1.bf16.xpose.msra.mxu0 0
      %600 = vmatprep.subr.bf16.mxu0 0
      %601 = vmatpush1.bf16.xpose.msra.mxu0 0
      %602 = vmatprep.subr.bf16.mxu0 0
      %603 = vmatpush1.bf16.xpose.msra.mxu0 0
      %604 = vmatprep.subr.bf16.mxu0 0
      %605 = vmatpush1.bf16.xpose.msra.mxu0 0
      %606 = vmatprep.subr.bf16.mxu0 0
      %607 = vmatpush1.bf16.xpose.msra.mxu0 0
      %608 = vmatprep.subr.bf16.mxu0 0
      %609 = vmatpush1.bf16.xpose.msra.mxu0 0
      %610 = vmatprep.subr.bf16.mxu0 0
      %611 = vmatpush1.bf16.xpose.msra.mxu0 0
      %612 = vmatprep.subr.bf16.mxu0 0
      %613 = vmatpush1.bf16.xpose.msra.mxu0 0
      %614 = vmatprep.subr.bf16.mxu0 0
      %615 = vmatpush1.bf16.xpose.msra.mxu0 0
      %616 = vmatprep.subr.bf16.mxu0 0
      %617 = vmatpush1.bf16.xpose.msra.mxu0 0
      %618 = vmatprep.subr.bf16.mxu0 0
      %619 = vmatpush1.bf16.xpose.msra.mxu0 0
      %620 = vmatprep.subr.bf16.mxu0 0
      %621 = vmatpush1.bf16.xpose.msra.mxu0 0
      %622 = vmatprep.subr.bf16.mxu0 0
      %623 = vmatpush1.bf16.xpose.msra.mxu0 0
      %624 = vmatprep.mubr.bf16.mxu0 0
      %625 = vmatmul.mubr.bf16.gmra.mrb[0].mxu0 %v590
      %v626 = vpop.f32.mrb[0].mxu0
      %v627 = vadd.f32 0.0, %v626
      %v628 = vpop.f32.mrb[0].mxu0
      %v629 = vpop.f32.mrb[0].mxu0
      %v630 = vpop.f32.mrb[0].mxu0
      %631 = vdwg.mxu0
      %v632 = vmul.f32 %v627, 0.35355338
      %v633 = vsel %vm563, %v632, -inf
      %634 = vmax.xlane.f32.xlu0 %v633
      %v635 = vpop.xlane.xlu0 %634
      %v636 = vsub.f32 %v632, %v635
      %v637 = vmul.f32 %v636, 1.442695
      %v638 = vpow.pop %v637
      %v639 = vsel %vm563, %v638, 0.0
      %640 = vadd.xlane.f32.xlu0 %v639
      %v641 = vpop.xlane.xlu0 %640
      %v642 = vrcp.pop %v641
      %v643 = vmul.f32 %v638, %v642
      %v644 = vpack.c.bf16 %v643, %v643
      %646 = vrot.lane.b32.xlu0 %v586, 64
      %v647 = vpop.permute.xlu0 %646
      %v649 = vmul.f32 %v498, %v647
      %v650 = vpack.c.bf16 %v649, %v649
      %652 = vrot.lane.b32.xlu0 %v650, 64
      %v653 = vpop.permute.xlu0 %652
      %vm654 = vcmask 23552
      %v656 = vsel %vm654, %v644, 0
      %vm658 = vcmask 1040384
      %vm659 = vcmask 1041408
      %v660 = vsel %vm658, 4294967295, 65535
      %v661 = vsel %vm659, %v660, 0
      %v663 = vand.u32 %v653, %v661
      %665 = vmatprep.subr.bf16.mxu0 0
      %666 = vmatpush1.bf16.msra.mxu0 %v663
      %667 = vmatprep.subr.bf16.mxu0 0
      %668 = vmatpush1.bf16.msra.mxu0 0
      %669 = vmatprep.subr.bf16.mxu0 0
      %670 = vmatpush1.bf16.msra.mxu0 0
      %671 = vmatprep.subr.bf16.mxu0 0
      %672 = vmatpush1.bf16.msra.mxu0 0
      %673 = vmatprep.subr.bf16.mxu0 0
      %674 = vmatpush1.bf16.msra.mxu0 0
      %675 = vmatprep.subr.bf16.mxu0 0
      %676 = vmatpush1.bf16.msra.mxu0 0
      %677 = vmatprep.subr.bf16.mxu0 0
      %678 = vmatpush1.bf16.msra.mxu0 0
      %679 = vmatprep.subr.bf16.mxu0 0
      %680 = vmatpush1.bf16.msra.mxu0 0
      %681 = vmatprep.subr.bf16.mxu0 0
      %682 = vmatpush1.bf16.msra.mxu0 0
      %683 = vmatprep.subr.bf16.mxu0 0
      %684 = vmatpush1.bf16.msra.mxu0 0
      %685 = vmatprep.subr.bf16.mxu0 0
      %686 = vmatpush1.bf16.msra.mxu0 0
      %687 = vmatprep.subr.bf16.mxu0 0
      %688 = vmatpush1.bf16.msra.mxu0 0
      %689 = vmatprep.subr.bf16.mxu0 0
      %690 = vmatpush1.bf16.msra.mxu0 0
      %691 = vmatprep.subr.bf16.mxu0 0
      %692 = vmatpush1.bf16.msra.mxu0 0
      %693 = vmatprep.subr.bf16.mxu0 0
      %694 = vmatpush1.bf16.msra.mxu0 0
      %695 = vmatprep.subr.bf16.mxu0 0
      %696 = vmatpush1.bf16.msra.mxu0 0
      %697 = vmatprep.mubr.bf16.mxu0 0
      %698 = vmatmul.mubr.bf16.gmra.mrb[0].mxu0 %v656
      %v699 = vpop.f32.mrb[0].mxu0
      %v700 = vadd.f32 0.0, %v699
      %v701 = vpop.f32.mrb[0].mxu0
      %v702 = vpop.f32.mrb[0].mxu0
      %v703 = vpop.f32.mrb[0].mxu0
      %704 = vdwg.mxu0
      %706 = vrot.lane.b32.xlu0 %v581, 64
      %v707 = vpop.permute.xlu0 %706
      %v709 = vsel %vm654, %v575, 0
      %v712 = vand.u32 %v707, %v661
      %714 = vmatprep.subr.bf16.mxu0 0
      %715 = vmatpush1.bf16.msra.mxu0 %v712
      %716 = vmatprep.subr.bf16.mxu0 0
      %717 = vmatpush1.bf16.msra.mxu0 0
      %718 = vmatprep.subr.bf16.mxu0 0
      %719 = vmatpush1.bf16.msra.mxu0 0
      %720 = vmatprep.subr.bf16.mxu0 0
      %721 = vmatpush1.bf16.msra.mxu0 0
      %722 = vmatprep.subr.bf16.mxu0 0
      %723 = vmatpush1.bf16.msra.mxu0 0
      %724 = vmatprep.subr.bf16.mxu0 0
      %725 = vmatpush1.bf16.msra.mxu0 0
      %726 = vmatprep.subr.bf16.mxu0 0
      %727 = vmatpush1.bf16.msra.mxu0 0
      %728 = vmatprep.subr.bf16.mxu0 0
      %729 = vmatpush1.bf16.msra.mxu0 0
      %730 = vmatprep.subr.bf16.mxu0 0
      %731 = vmatpush1.bf16.msra.mxu0 0
      %732 = vmatprep.subr.bf16.mxu0 0
      %733 = vmatpush1.bf16.msra.mxu0 0
      %734 = vmatprep.subr.bf16.mxu0 0
      %735 = vmatpush1.bf16.msra.mxu0 0
      %736 = vmatprep.subr.bf16.mxu0 0
      %737 = vmatpush1.bf16.msra.mxu0 0
      %738 = vmatprep.subr.bf16.mxu0 0
      %739 = vmatpush1.bf16.msra.mxu0 0
      %740 = vmatprep.subr.bf16.mxu0 0
      %741 = vmatpush1.bf16.msra.mxu0 0
      %742 = vmatprep.subr.bf16.mxu0 0
      %743 = vmatpush1.bf16.msra.mxu0 0
      %744 = vmatprep.subr.bf16.mxu0 0
      %745 = vmatpush1.bf16.msra.mxu0 0
      %746 = vmatprep.mubr.bf16.mxu0 0
      %747 = vmatmul.mubr.bf16.gmra.mrb[0].mxu0 %v709
      %v748 = vpop.f32.mrb[0].mxu0
      %v749 = vadd.f32 %v700, %v748
      %v750 = vpop.f32.mrb[0].mxu0
      %v751 = vpop.f32.mrb[0].mxu0
      %v752 = vpop.f32.mrb[0].mxu0
      %753 = vdwg.mxu0
      %vm754 = vcmp.ge.s32.totalorder %v505, 16
      %vm755 = vcmp.lt.s32.totalorder %v505, 24
      %vm756 = vmand %vm754, %vm755
      %v757 = vsel %vm756, 1, 0
      %v758 = vcvt.s32.f32 %v757
      %v759 = vmul.f32 %v498, %v758
      %v760 = vpack.c.bf16 %v759, %v759
      %v762 = vsel %vm459, %v760, 0
      %764 = vmatprep.subr.bf16.mxu0 0
      %765 = vmatpush1.bf16.xpose.msra.mxu0 %v520
      %766 = vmatprep.subr.bf16.mxu0 0
      %767 = vmatpush1.bf16.xpose.msra.mxu0 0
      %768 = vmatprep.subr.bf16.mxu0 0
      %769 = vmatpush1.bf16.xpose.msra.mxu0 0
      %770 = vmatprep.subr.bf16.mxu0 0
      %771 = vmatpush1.bf16.xpose.msra.mxu0 0
      %772 = vmatprep.subr.bf16.mxu0 0
      %773 = vmatpush1.bf16.xpose.msra.mxu0 0
      %774 = vmatprep.subr.bf16.mxu0 0
      %775 = vmatpush1.bf16.xpose.msra.mxu0 0
      %776 = vmatprep.subr.bf16.mxu0 0
      %777 = vmatpush1.bf16.xpose.msra.mxu0 0
      %778 = vmatprep.subr.bf16.mxu0 0
      %779 = vmatpush1.bf16.xpose.msra.mxu0 0
      %780 = vmatprep.subr.bf16.mxu0 0
      %781 = vmatpush1.bf16.xpose.msra.mxu0 0
      %782 = vmatprep.subr.bf16.mxu0 0
      %783 = vmatpush1.bf16.xpose.msra.mxu0 0
      %784 = vmatprep.subr.bf16.mxu0 0
      %785 = vmatpush1.bf16.xpose.msra.mxu0 0
      %786 = vmatprep.subr.bf16.mxu0 0
      %787 = vmatpush1.bf16.xpose.msra.mxu0 0
      %788 = vmatprep.subr.bf16.mxu0 0
      %789 = vmatpush1.bf16.xpose.msra.mxu0 0
      %790 = vmatprep.subr.bf16.mxu0 0
      %791 = vmatpush1.bf16.xpose.msra.mxu0 0
      %792 = vmatprep.subr.bf16.mxu0 0
      %793 = vmatpush1.bf16.xpose.msra.mxu0 0
      %794 = vmatprep.subr.bf16.mxu0 0
      %795 = vmatpush1.bf16.xpose.msra.mxu0 0
      %796 = vmatprep.mubr.bf16.mxu0 0
      %797 = vmatmul.mubr.bf16.gmra.mrb[0].mxu0 %v762
      %v798 = vpop.f32.mrb[0].mxu0
      %v799 = vadd.f32 0.0, %v798
      %v800 = vpop.f32.mrb[0].mxu0
      %v801 = vpop.f32.mrb[0].mxu0
      %v802 = vpop.f32.mrb[0].mxu0
      %803 = vdwg.mxu0
      %v804 = vmul.f32 %v799, 0.35355338
      %v805 = vsel %vm563, %v804, -inf
      %806 = vmax.xlane.f32.xlu0 %v805
      %v807 = vpop.xlane.xlu0 %806
      %v808 = vsub.f32 %v804, %v807
      %v809 = vmul.f32 %v808, 1.442695
      %v810 = vpow.pop %v809
      %v811 = vsel %vm563, %v810, 0.0
      %812 = vadd.xlane.f32.xlu0 %v811
      %v813 = vpop.xlane.xlu0 %812
      %v814 = vrcp.pop %v813
      %v815 = vmul.f32 %v810, %v814
      %v816 = vpack.c.bf16 %v815, %v815
      %818 = vrot.lane.b32.xlu0 %v758, 64
      %v819 = vpop.permute.xlu0 %818
      %v821 = vmul.f32 %v498, %v819
      %v822 = vpack.c.bf16 %v821, %v821
      %824 = vrot.lane.b32.xlu0 %v822, 64
      %v825 = vpop.permute.xlu0 %824
      %v827 = vsel %vm654, %v816, 0
      %v830 = vand.u32 %v825, %v661
      %832 = vmatprep.subr.bf16.mxu0 0
      %833 = vmatpush1.bf16.msra.mxu0 %v830
      %834 = vmatprep.subr.bf16.mxu0 0
      %835 = vmatpush1.bf16.msra.mxu0 0
      %836 = vmatprep.subr.bf16.mxu0 0
      %837 = vmatpush1.bf16.msra.mxu0 0
      %838 = vmatprep.subr.bf16.mxu0 0
      %839 = vmatpush1.bf16.msra.mxu0 0
      %840 = vmatprep.subr.bf16.mxu0 0
      %841 = vmatpush1.bf16.msra.mxu0 0
      %842 = vmatprep.subr.bf16.mxu0 0
      %843 = vmatpush1.bf16.msra.mxu0 0
      %844 = vmatprep.subr.bf16.mxu0 0
      %845 = vmatpush1.bf16.msra.mxu0 0
      %846 = vmatprep.subr.bf16.mxu0 0
      %847 = vmatpush1.bf16.msra.mxu0 0
      %848 = vmatprep.subr.bf16.mxu0 0
      %849 = vmatpush1.bf16.msra.mxu0 0
      %850 = vmatprep.subr.bf16.mxu0 0
      %851 = vmatpush1.bf16.msra.mxu0 0
      %852 = vmatprep.subr.bf16.mxu0 0
      %853 = vmatpush1.bf16.msra.mxu0 0
      %854 = vmatprep.subr.bf16.mxu0 0
      %855 = vmatpush1.bf16.msra.mxu0 0
      %856 = vmatprep.subr.bf16.mxu0 0
      %857 = vmatpush1.bf16.msra.mxu0 0
      %858 = vmatprep.subr.bf16.mxu0 0
      %859 = vmatpush1.bf16.msra.mxu0 0
      %860 = vmatprep.subr.bf16.mxu0 0
      %861 = vmatpush1.bf16.msra.mxu0 0
      %862 = vmatprep.subr.bf16.mxu0 0
      %863 = vmatpush1.bf16.msra.mxu0 0
      %864 = vmatprep.mubr.bf16.mxu0 0
      %865 = vmatmul.mubr.bf16.gmra.mrb[0].mxu0 %v827
      %v866 = vpop.f32.mrb[0].mxu0
      %v867 = vadd.f32 0.0, %v866
      %v868 = vpop.f32.mrb[0].mxu0
      %v869 = vpop.f32.mrb[0].mxu0
      %v870 = vpop.f32.mrb[0].mxu0
      %871 = vdwg.mxu0
      %v872 = vadd.f32 %v749, %v867
      %vm873 = vcmp.ge.s32.totalorder %v505, 24
      %vm874 = vcmp.lt.s32.totalorder %v505, 32
      %vm875 = vmand %vm873, %vm874
      %v876 = vsel %vm875, 1, 0
      %v877 = vcvt.s32.f32 %v876
      %v878 = vmul.f32 %v498, %v877
      %v879 = vpack.c.bf16 %v878, %v878
      %v881 = vsel %vm459, %v879, 0
      %883 = vmatprep.subr.bf16.mxu0 0
      %884 = vmatpush1.bf16.xpose.msra.mxu0 %v520
      %885 = vmatprep.subr.bf16.mxu0 0
      %886 = vmatpush1.bf16.xpose.msra.mxu0 0
      %887 = vmatprep.subr.bf16.mxu0 0
      %888 = vmatpush1.bf16.xpose.msra.mxu0 0
      %889 = vmatprep.subr.bf16.mxu0 0
      %890 = vmatpush1.bf16.xpose.msra.mxu0 0
      %891 = vmatprep.subr.bf16.mxu0 0
      %892 = vmatpush1.bf16.xpose.msra.mxu0 0
      %893 = vmatprep.subr.bf16.mxu0 0
      %894 = vmatpush1.bf16.xpose.msra.mxu0 0
      %895 = vmatprep.subr.bf16.mxu0 0
      %896 = vmatpush1.bf16.xpose.msra.mxu0 0
      %897 = vmatprep.subr.bf16.mxu0 0
      %898 = vmatpush1.bf16.xpose.msra.mxu0 0
      %899 = vmatprep.subr.bf16.mxu0 0
      %900 = vmatpush1.bf16.xpose.msra.mxu0 0
      %901 = vmatprep.subr.bf16.mxu0 0
      %902 = vmatpush1.bf16.xpose.msra.mxu0 0
      %903 = vmatprep.subr.bf16.mxu0 0
      %904 = vmatpush1.bf16.xpose.msra.mxu0 0
      %905 = vmatprep.subr.bf16.mxu0 0
      %906 = vmatpush1.bf16.xpose.msra.mxu0 0
      %907 = vmatprep.subr.bf16.mxu0 0
      %908 = vmatpush1.bf16.xpose.msra.mxu0 0
      %909 = vmatprep.subr.bf16.mxu0 0
      %910 = vmatpush1.bf16.xpose.msra.mxu0 0
      %911 = vmatprep.subr.bf16.mxu0 0
      %912 = vmatpush1.bf16.xpose.msra.mxu0 0
      %913 = vmatprep.subr.bf16.mxu0 0
      %914 = vmatpush1.bf16.xpose.msra.mxu0 0
      %915 = vmatprep.mubr.bf16.mxu0 0
      %916 = vmatmul.mubr.bf16.gmra.mrb[0].mxu0 %v881
      %v917 = vpop.f32.mrb[0].mxu0
      %v918 = vadd.f32 0.0, %v917
      %v919 = vpop.f32.mrb[0].mxu0
      %v920 = vpop.f32.mrb[0].mxu0
      %v921 = vpop.f32.mrb[0].mxu0
      %922 = vdwg.mxu0
      %v923 = vmul.f32 %v918, 0.35355338
      %v924 = vsel %vm563, %v923, -inf
      %925 = vmax.xlane.f32.xlu0 %v924
      %v926 = vpop.xlane.xlu0 %925
      %v927 = vsub.f32 %v923, %v926
      %v928 = vmul.f32 %v927, 1.442695
      %v929 = vpow.pop %v928
      %v930 = vsel %vm563, %v929, 0.0
      %931 = vadd.xlane.f32.xlu0 %v930
      %v932 = vpop.xlane.xlu0 %931
      %v933 = vrcp.pop %v932
      %v934 = vmul.f32 %v929, %v933
      %v935 = vpack.c.bf16 %v934, %v934
      %937 = vrot.lane.b32.xlu0 %v877, 64
      %v938 = vpop.permute.xlu0 %937
      %v940 = vmul.f32 %v498, %v938
      %v941 = vpack.c.bf16 %v940, %v940
      %943 = vrot.lane.b32.xlu0 %v941, 64
      %v944 = vpop.permute.xlu0 %943
      %v946 = vsel %vm654, %v935, 0
      %v949 = vand.u32 %v944, %v661
      %951 = vmatprep.subr.bf16.mxu0 0
      %952 = vmatpush1.bf16.msra.mxu0 %v949
      %953 = vmatprep.subr.bf16.mxu0 0
      %954 = vmatpush1.bf16.msra.mxu0 0
      %955 = vmatprep.subr.bf16.mxu0 0
      %956 = vmatpush1.bf16.msra.mxu0 0
      %957 = vmatprep.subr.bf16.mxu0 0
      %958 = vmatpush1.bf16.msra.mxu0 0
      %959 = vmatprep.subr.bf16.mxu0 0
      %960 = vmatpush1.bf16.msra.mxu0 0
      %961 = vmatprep.subr.bf16.mxu0 0
      %962 = vmatpush1.bf16.msra.mxu0 0
      %963 = vmatprep.subr.bf16.mxu0 0
      %964 = vmatpush1.bf16.msra.mxu0 0
      %965 = vmatprep.subr.bf16.mxu0 0
      %966 = vmatpush1.bf16.msra.mxu0 0
      %967 = vmatprep.subr.bf16.mxu0 0
      %968 = vmatpush1.bf16.msra.mxu0 0
      %969 = vmatprep.subr.bf16.mxu0 0
      %970 = vmatpush1.bf16.msra.mxu0 0
      %971 = vmatprep.subr.bf16.mxu0 0
      %972 = vmatpush1.bf16.msra.mxu0 0
      %973 = vmatprep.subr.bf16.mxu0 0
      %974 = vmatpush1.bf16.msra.mxu0 0
      %975 = vmatprep.subr.bf16.mxu0 0
      %976 = vmatpush1.bf16.msra.mxu0 0
      %977 = vmatprep.subr.bf16.mxu0 0
      %978 = vmatpush1.bf16.msra.mxu0 0
      %979 = vmatprep.subr.bf16.mxu0 0
      %980 = vmatpush1.bf16.msra.mxu0 0
      %981 = vmatprep.subr.bf16.mxu0 0
      %982 = vmatpush1.bf16.msra.mxu0 0
      %983 = vmatprep.mubr.bf16.mxu0 0
      %984 = vmatmul.mubr.bf16.gmra.mrb[0].mxu0 %v946
      %v985 = vpop.f32.mrb[0].mxu0
      %v986 = vadd.f32 0.0, %v985
      %v987 = vpop.f32.mrb[0].mxu0
      %v988 = vpop.f32.mrb[0].mxu0
      %v989 = vpop.f32.mrb[0].mxu0
      %990 = vdwg.mxu0
      %v991 = vadd.f32 %v872, %v986
      %v992 = vpack.c.bf16 %v991, %v991
      %s993 = smul.addr %s404, 4
      %s994 = scalar_lea.vmem %s4, %s993
      %v995 = vld [vmem:[%s994] sm:$0xf]
      %v996 = vld [vmem:[%s994 + $0x4] sm:$0xf]
      %v997 = vld [vmem:[%s994 + $0x8] sm:$0xf]
      %v998 = vld [vmem:[%s994 + $0xc] sm:$0xf]
      %s999 = scalar_lea.vmem %s5, %s27
      %v1000 = vld [vmem:[%s999] sm:$0x1]
      %v1002 = vlaneseq
      %v1003 = vshrl.u32 %v1002, 7
      %v1004 = vsub.s32 0, %v1003
      %v1005 = vrot.slane %v1000, %v1004
      %v1011 = vunpack.c.l.b16 %v995
      %v1012 = vunpack.c.l.b16 %v996
      %v1013 = vunpack.c.l.b16 %v997
      %v1014 = vunpack.c.l.b16 %v998
      %v1015 = vpack.c.b16 %v1012, %v1011
      %v1016 = vpack.c.b16 %v1014, %v1013
      %v1020 = vsel %vm459, %v992, 0
      %1022 = vmatprep.subr.bf16.mxu0 0
      %1023 = vmatpush1.bf16.msra.mxu0 %v1015
      %1024 = vmatprep.subr.bf16.mxu0 0
      %1025 = vmatpush1.bf16.msra.mxu0 %v1016
      %1026 = vmatprep.subr.bf16.mxu0 0
      %1027 = vmatpush1.bf16.msra.mxu0 0
      %1028 = vmatprep.subr.bf16.mxu0 0
      %1029 = vmatpush1.bf16.msra.mxu0 0
      %1030 = vmatprep.subr.bf16.mxu0 0
      %1031 = vmatpush1.bf16.msra.mxu0 0
      %1032 = vmatprep.subr.bf16.mxu0 0
      %1033 = vmatpush1.bf16.msra.mxu0 0
      %1034 = vmatprep.subr.bf16.mxu0 0
      %1035 = vmatpush1.bf16.msra.mxu0 0
      %1036 = vmatprep.subr.bf16.mxu0 0
      %1037 = vmatpush1.bf16.msra.mxu0 0
      %1038 = vmatprep.subr.bf16.mxu0 0
      %1039 = vmatpush1.bf16.msra.mxu0 0
      %1040 = vmatprep.subr.bf16.mxu0 0
      %1041 = vmatpush1.bf16.msra.mxu0 0
      %1042 = vmatprep.subr.bf16.mxu0 0
      %1043 = vmatpush1.bf16.msra.mxu0 0
      %1044 = vmatprep.subr.bf16.mxu0 0
      %1045 = vmatpush1.bf16.msra.mxu0 0
      %1046 = vmatprep.subr.bf16.mxu0 0
      %1047 = vmatpush1.bf16.msra.mxu0 0
      %1048 = vmatprep.subr.bf16.mxu0 0
      %1049 = vmatpush1.bf16.msra.mxu0 0
      %1050 = vmatprep.subr.bf16.mxu0 0
      %1051 = vmatpush1.bf16.msra.mxu0 0
      %1052 = vmatprep.subr.bf16.mxu0 0
      %1053 = vmatpush1.bf16.msra.mxu0 0
      %1054 = vmatprep.mubr.bf16.mxu0 0
      %1055 = vmatmul.mubr.bf16.gmra.mrb[0].mxu0 %v1020
      %v1056 = vpop.f32.mrb[0].mxu0
      %v1057 = vadd.f32 %v1005, %v1056
      %v1058 = vpop.f32.mrb[0].mxu0
      %v1059 = vpop.f32.mrb[0].mxu0
      %v1060 = vpop.f32.mrb[0].mxu0
      %1061 = vdwg.mxu0
      %v1062 = vadd.f32 %v403, %v1057
      %v1063 = vsel %vm407, %v1062, 0.0
      %1064 = vadd.xlane.f32.xlu0 %v1063
      %v1065 = vpop.xlane.xlu0 %1064
      %v1066 = vmul.f32 %v1065, %v411
      %v1067 = vsub.f32 %v1062, %v1066
      %v1068 = vmul.f32 %v1067, %v1067
      %v1069 = vsel %vm407, %v1068, 0.0
      %1070 = vadd.xlane.f32.xlu0 %v1069
      %v1071 = vpop.xlane.xlu0 %1070
      %v1072 = vmul.f32 %v1071, %v411
      %v1073 = vadd.f32 %v1072, 1e-05
      %v1074 = vrsqrt.pop %v1073
      %v1075 = vmul.f32 %v1067, %v1074
      %v1076 = vlaneseq
      %v1077 = vshrl.u32 %v1076, 7
      %v1078 = vsub.s32 2, %v1077
      %v1079 = vrot.slane %v406, %v1078
      %v1080 = vmul.f32 %v1075, %v1079
      %v1081 = vlaneseq
      %v1082 = vshrl.u32 %v1081, 7
      %v1083 = vsub.s32 3, %v1082
      %v1084 = vrot.slane %v406, %v1083
      %v1085 = vadd.f32 %v1080, %v1084
      %v1086 = vpack.c.bf16 %v1085, %v1085
      %s1087 = smul.addr %s404, 4
      %s1088 = scalar_lea.vmem %s6, %s1087
      %v1089 = vld [vmem:[%s1088] sm:$0xf]
      %v1090 = vld [vmem:[%s1088 + $0x4] sm:$0xf]
      %v1091 = vld [vmem:[%s1088 + $0x8] sm:$0xf]
      %v1092 = vld [vmem:[%s1088 + $0xc] sm:$0xf]
      %s1093 = scalar_lea.vmem %s7, %s27
      %v1094 = vld [vmem:[%s1093] sm:$0x1]
      %v1096 = vlaneseq
      %v1097 = vshrl.u32 %v1096, 7
      %v1098 = vsub.s32 0, %v1097
      %v1099 = vrot.slane %v1094, %v1098
      %v1105 = vunpack.c.l.b16 %v1089
      %v1106 = vunpack.c.l.b16 %v1090
      %v1107 = vunpack.c.l.b16 %v1091
      %v1108 = vunpack.c.l.b16 %v1092
      %v1109 = vpack.c.b16 %v1106, %v1105
      %v1110 = vpack.c.b16 %v1108, %v1107
      %v1114 = vsel %vm459, %v1086, 0
      %1116 = vmatprep.subr.bf16.mxu0 0
      %1117 = vmatpush1.bf16.msra.mxu0 %v1109
      %1118 = vmatprep.subr.bf16.mxu0 0
      %1119 = vmatpush1.bf16.msra.mxu0 %v1110
      %1120 = vmatprep.subr.bf16.mxu0 0
      %1121 = vmatpush1.bf16.msra.mxu0 0
      %1122 = vmatprep.subr.bf16.mxu0 0
      %1123 = vmatpush1.bf16.msra.mxu0 0
      %1124 = vmatprep.subr.bf16.mxu0 0
      %1125 = vmatpush1.bf16.msra.mxu0 0
      %1126 = vmatprep.subr.bf16.mxu0 0
      %1127 = vmatpush1.bf16.msra.mxu0 0
      %1128 = vmatprep.subr.bf16.mxu0 0
      %1129 = vmatpush1.bf16.msra.mxu0 0
      %1130 = vmatprep.subr.bf16.mxu0 0
      %1131 = vmatpush1.bf16.msra.mxu0 0
      %1132 = vmatprep.subr.bf16.mxu0 0
      %1133 = vmatpush1.bf16.msra.mxu0 0
      %1134 = vmatprep.subr.bf16.mxu0 0
      %1135 = vmatpush1.bf16.msra.mxu0 0
      %1136 = vmatprep.subr.bf16.mxu0 0
      %1137 = vmatpush1.bf16.msra.mxu0 0
      %1138 = vmatprep.subr.bf16.mxu0 0
      %1139 = vmatpush1.bf16.msra.mxu0 0
      %1140 = vmatprep.subr.bf16.mxu0 0
      %1141 = vmatpush1.bf16.msra.mxu0 0
      %1142 = vmatprep.subr.bf16.mxu0 0
      %1143 = vmatpush1.bf16.msra.mxu0 0
      %1144 = vmatprep.subr.bf16.mxu0 0
      %1145 = vmatpush1.bf16.msra.mxu0 0
      %1146 = vmatprep.subr.bf16.mxu0 0
      %1147 = vmatpush1.bf16.msra.mxu0 0
      %1148 = vmatprep.mubr.bf16.mxu0 0
      %1149 = vmatmul.mubr.bf16.gmra.mrb[0].mxu0 %v1114
      %v1150 = vpop.f32.mrb[0].mxu0
      %v1151 = vadd.f32 %v1099, %v1150
      %v1152 = vpop.f32.mrb[0].mxu0
      %v1153 = vpop.f32.mrb[0].mxu0
      %v1154 = vpop.f32.mrb[0].mxu0
      %1155 = vdwg.mxu0
      %v1156 = vmul.f32 %v1151, 0.5
      %v1157 = vmul.f32 %v1151, 0.70710677
      %v1158 = vand.u32 2147483647, %v1157
      %v1159 = vmul.f32 %v1158, 0.3275911
      %v1160 = vadd.f32 %v1159, 1.0
      %v1161 = vrcp.pop %v1160
      %v1162 = vmul.f32 1.0, %v1161
      %v1163 = vmul.f32 %v1162, 1.0614054
      %v1164 = vadd.f32 %v1163, -1.4531521
      %v1165 = vmul.f32 %v1164, %v1162
      %v1166 = vadd.f32 %v1165, 1.4214138
      %v1167 = vmul.f32 %v1166, %v1162
      %v1168 = vadd.f32 %v1167, -0.28449672
      %v1169 = vmul.f32 %v1168, %v1162
      %v1170 = vadd.f32 %v1169, 0.2548296
      %v1171 = vmul.f32 %v1170, %v1162
      %v1172 = vsub.f32 0.0, %v1158
      %v1173 = vmul.f32 %v1172, %v1158
      %v1174 = vmul.f32 %v1173, 1.442695
      %v1175 = vpow.pop %v1174
      %v1176 = vmul.f32 %v1171, %v1175
      %v1177 = vsub.f32 1.0, %v1176
      %vm1178 = vcmp.ge.f32.partialorder %v1157, 0.0
      %v1179 = vsub.f32 0.0, %v1177
      %v1180 = vsel %vm1178, %v1177, %v1179
      %v1181 = vadd.f32 %v1180, 1.0
      %v1182 = vmul.f32 %v1156, %v1181
      %v1183 = vpack.c.bf16 %v1182, %v1182
      %s1184 = smul.u32 %s27, 16
      %s1185 = smul.addr %s1184, 4
      %s1186 = scalar_lea.vmem %s8, %s1185
      %v1187 = vld [vmem:[%s1186] sm:$0xf]
      %v1188 = vld [vmem:[%s1186 + $0x4] sm:$0xf]
      %v1189 = vld [vmem:[%s1186 + $0x8] sm:$0xf]
      %v1190 = vld [vmem:[%s1186 + $0xc] sm:$0xf]
      %v1191 = vld [vmem:[%s1186 + $0x10] sm:$0xf]
      %v1192 = vld [vmem:[%s1186 + $0x14] sm:$0xf]
      %v1193 = vld [vmem:[%s1186 + $0x18] sm:$0xf]
      %v1194 = vld [vmem:[%s1186 + $0x1c] sm:$0xf]
      %v1195 = vld [vmem:[%s1186 + $0x20] sm:$0xf]
      %v1196 = vld [vmem:[%s1186 + $0x24] sm:$0xf]
      %v1197 = vld [vmem:[%s1186 + $0x28] sm:$0xf]
      %v1198 = vld [vmem:[%s1186 + $0x2c] sm:$0xf]
      %v1199 = vld [vmem:[%s1186 + $0x30] sm:$0xf]
      %v1200 = vld [vmem:[%s1186 + $0x34] sm:$0xf]
      %v1201 = vld [vmem:[%s1186 + $0x38] sm:$0xf]
      %v1202 = vld [vmem:[%s1186 + $0x3c] sm:$0xf]
      %s1203 = scalar_lea.vmem %s9, %s27
      %v1204 = vld [vmem:[%s1203] sm:$0x1]
      %v1206 = vlaneseq
      %v1207 = vshrl.u32 %v1206, 7
      %v1208 = vsub.s32 0, %v1207
      %v1209 = vrot.slane %v1204, %v1208
      %v1227 = vunpack.c.l.b16 %v1187
      %v1228 = vunpack.c.l.b16 %v1188
      %v1229 = vunpack.c.l.b16 %v1189
      %v1230 = vunpack.c.l.b16 %v1190
      %v1231 = vunpack.c.l.b16 %v1191
      %v1232 = vunpack.c.l.b16 %v1192
      %v1233 = vunpack.c.l.b16 %v1193
      %v1234 = vunpack.c.l.b16 %v1194
      %v1235 = vunpack.c.l.b16 %v1195
      %v1236 = vunpack.c.l.b16 %v1196
      %v1237 = vunpack.c.l.b16 %v1197
      %v1238 = vunpack.c.l.b16 %v1198
      %v1239 = vunpack.c.l.b16 %v1199
      %v1240 = vunpack.c.l.b16 %v1200
      %v1241 = vunpack.c.l.b16 %v1201
      %v1242 = vunpack.c.l.b16 %v1202
      %v1243 = vpack.c.b16 %v1228, %v1227
      %v1244 = vpack.c.b16 %v1230, %v1229
      %v1245 = vpack.c.b16 %v1232, %v1231
      %v1246 = vpack.c.b16 %v1234, %v1233
      %v1247 = vpack.c.b16 %v1236, %v1235
      %v1248 = vpack.c.b16 %v1238, %v1237
      %v1249 = vpack.c.b16 %v1240, %v1239
      %v1250 = vpack.c.b16 %v1242, %v1241
      %1259 = vmatprep.subr.bf16.mxu0 0
      %1260 = vmatpush1.bf16.msra.mxu0 %v1243
      %1261 = vmatprep.subr.bf16.mxu0 0
      %1262 = vmatpush1.bf16.msra.mxu0 %v1244
      %1263 = vmatprep.subr.bf16.mxu0 0
      %1264 = vmatpush1.bf16.msra.mxu0 %v1245
      %1265 = vmatprep.subr.bf16.mxu0 0
      %1266 = vmatpush1.bf16.msra.mxu0 %v1246
      %1267 = vmatprep.subr.bf16.mxu0 0
      %1268 = vmatpush1.bf16.msra.mxu0 %v1247
      %1269 = vmatprep.subr.bf16.mxu0 0
      %1270 = vmatpush1.bf16.msra.mxu0 %v1248
      %1271 = vmatprep.subr.bf16.mxu0 0
      %1272 = vmatpush1.bf16.msra.mxu0 %v1249
      %1273 = vmatprep.subr.bf16.mxu0 0
      %1274 = vmatpush1.bf16.msra.mxu0 %v1250
      %1275 = vmatprep.subr.bf16.mxu0 0
      %1276 = vmatpush1.bf16.msra.mxu0 0
      %1277 = vmatprep.subr.bf16.mxu0 0
      %1278 = vmatpush1.bf16.msra.mxu0 0
      %1279 = vmatprep.subr.bf16.mxu0 0
      %1280 = vmatpush1.bf16.msra.mxu0 0
      %1281 = vmatprep.subr.bf16.mxu0 0
      %1282 = vmatpush1.bf16.msra.mxu0 0
      %1283 = vmatprep.subr.bf16.mxu0 0
      %1284 = vmatpush1.bf16.msra.mxu0 0
      %1285 = vmatprep.subr.bf16.mxu0 0
      %1286 = vmatpush1.bf16.msra.mxu0 0
      %1287 = vmatprep.subr.bf16.mxu0 0
      %1288 = vmatpush1.bf16.msra.mxu0 0
      %1289 = vmatprep.subr.bf16.mxu0 0
      %1290 = vmatpush1.bf16.msra.mxu0 0
      %1291 = vmatprep.mubr.bf16.mxu0 0
      %1292 = vmatmul.mubr.bf16.gmra.mrb[0].mxu0 %v1183
      %v1293 = vpop.f32.mrb[0].mxu0
      %v1294 = vadd.f32 %v1209, %v1293
      %v1295 = vpop.f32.mrb[0].mxu0
      %v1296 = vpop.f32.mrb[0].mxu0
      %v1297 = vpop.f32.mrb[0].mxu0
      %1298 = vdwg.mxu0
      %v1299 = vadd.f32 %v1062, %v1294
      %p1300 = scmp.lt.s32.totalorder %s27, 1
      // Predicated region
      $region69: #{forward.6} parent=63 // pred_check
        %p1301 = pneg %p1300
      $region70: #{forward.6} parent=63 // pred_check_branch
        %1303 = sbr.rel (%p1301) target = $region72
      $region71: #{forward.6} parent=63 // pred_region
        %1304 = vst.msk [vmem:[#allocation2] sm:$0x7] %vm407, %v1299
      $region72: #{forward.6} parent=63 // pred_fallthru
        _
      %p1305 = scmp.eq.s32.totalorder %s27, 1
      // Predicated region
      $region73: #{forward.6} parent=63 // pred_check
        %p1306 = pneg %p1305
      $region74: #{forward.6} parent=63 // pred_check_branch
        %1308 = sbr.rel (%p1306) target = $region76
      $region75: #{forward.6} parent=63 // pred_region
        %v1309 = vld [vmem:[%s10] sm:$0x3]
        %v1310 = vsel %vm407, %v1299, 0.0
        %1311 = vadd.xlane.f32.xlu0 %v1310
        %v1312 = vpop.xlane.xlu0 %1311
        %v1313 = vmul.f32 %v1312, %v411
        %v1314 = vsub.f32 %v1299, %v1313
        %v1315 = vmul.f32 %v1314, %v1314
        %v1316 = vsel %vm407, %v1315, 0.0
        %1317 = vadd.xlane.f32.xlu0 %v1316
        %v1318 = vpop.xlane.xlu0 %1317
        %v1319 = vmul.f32 %v1318, %v411
        %v1320 = vadd.f32 %v1319, 1e-05
        %v1321 = vrsqrt.pop %v1320
        %v1322 = vmul.f32 %v1314, %v1321
        %v1323 = vlaneseq
        %v1324 = vshrl.u32 %v1323, 7
        %v1325 = vsub.s32 0, %v1324
        %v1326 = vrot.slane %v1309, %v1325
        %v1327 = vmul.f32 %v1322, %v1326
        %v1328 = vlaneseq
        %v1329 = vshrl.u32 %v1328, 7
        %v1330 = vsub.s32 1, %v1329
        %v1331 = vrot.slane %v1309, %v1330
        %v1332 = vadd.f32 %v1327, %v1331
        %v1333 = vpack.c.bf16 %v1332, %v1332
        %vm1334 = vcmask 254976
        %vm1335 = vsmask.f32 1280
        %vm1336 = vmand %vm1334, %vm1335
        %v1337 = vld [vmem:[%s393] sm:$0x3]
        %v1338 = vsel %vm1336, %v1333, %v1337
        %1339 = vst [vmem:[%s393] sm:$0x3] %v1338
      $region76: #{forward.6} parent=63 // pred_fallthru
        _
      %p1340 = scmp.lt.s32.totalorder %s26, 1
      %s1341 = scalar_select %p1340, %s26, 1
      %s1342 = smul.addr %s1341, 2
      %s1343 = scalar_lea.vmem %s11, %s1342
      // Predicated region
      $region77: #{forward.6} parent=63 // pred_check
        %p1344 = pneg %p288
      $region78: #{forward.6} parent=63 // pred_check_branch
        %1346 = sbr.rel (%p1344) target = $region80
      $region79: #{forward.6} parent=63 // pred_region
        _
      $region80: #{forward.6} parent=63 // pred_fallthru
        _
    $region64: #{forward.6} parent=5 // pred_fallthru
      _
    %p1347 = scmp.le.s32.totalorder 2, %s17
    // Predicated region
    $region81: #{forward.6} parent=5 // pred_check
      %p1348 = pneg %p1347
    $region82: #{forward.6} parent=5 // pred_check_branch
      %1350 = sbr.rel (%p1348) target = $region84
    $region83: #{forward.6} parent=5 // pred_region
      %s1351 = ssub.s32 %s17, 2
      // Predicated region
      $region85: #{forward.6} parent=83 // pred_check
        %p1352 = pneg %p294
      $region86: #{forward.6} parent=83 // pred_check_branch
        %1354 = sbr.rel (%p1352) target = $region88
      $region87: #{forward.6} parent=83 // pred_region
        %p1355 = scmp.lt.s32.totalorder %s28, 1
        %s1356 = scalar_select %p1355, %s28, 1
        %s1357 = smul.addr %s1356, 2
        %s1358 = scalar_lea.vmem %s11, %s1357
      $region88: #{forward.6} parent=83 // pred_fallthru
        _
    $region84: #{forward.6} parent=5 // pred_fallthru
      _
  $region6: #{forward.6} parent=0 // loop_footer
    %s21 = sadd.s32 1, %s17
  $region7: #{forward.6} parent=0 // loop_footer_branch
    %16 = sbr.rel target = $region3
  $region8: #{forward.6} parent=0 // loop_exit
    _

// kernel: forward.8
$region0: #{forward.8}
  #allocation0 [shape = 'u32[]', space=smem, size = 0x4, offset = 0x4, fixed_abs, tag = 'smem constant byte address 0x4 - core index']
  #allocation1 [shape = 'u32[144,128]{1,0:T(1,128)}', space=vmem, size = 0x12000, scoped, tag = 'internal scratch']
  #allocation2 [shape = 'f32[9,32]{1,0:T(8,128)}', space=vmem, size = 0x2000, scoped, tag = 'scratch operand']
  %s0 = inlined_call_operand.vmem [shape: f32[2,9,32], index: 0, kind: input, shape index: {}]
  %s1 = inlined_call_operand.vmem [shape: f32[9,32], index: 1, kind: input, shape index: {}]
  %s2 = inlined_call_operand.vmem [shape: f32[1,4,32], index: 2, kind: input, shape index: {}]
  %s3 = inlined_call_operand.vmem [shape: bf16[1,32,96], index: 3, kind: input, shape index: {}]
  %s4 = inlined_call_operand.vmem [shape: f32[1,1,96], index: 4, kind: input, shape index: {}]
  %s5 = inlined_call_operand.vmem [shape: bf16[1,32,32], index: 5, kind: input, shape index: {}]
  %s6 = inlined_call_operand.vmem [shape: f32[1,1,32], index: 6, kind: input, shape index: {}]
  %s7 = inlined_call_operand.vmem [shape: bf16[1,32,128], index: 7, kind: input, shape index: {}]
  %s8 = inlined_call_operand.vmem [shape: f32[1,1,128], index: 8, kind: input, shape index: {}]
  %s9 = inlined_call_operand.vmem [shape: bf16[1,128,32], index: 9, kind: input, shape index: {}]
  %s10 = inlined_call_operand.vmem [shape: f32[1,1,32], index: 10, kind: input, shape index: {}]
  %s11 = inlined_call_operand.vmem [shape: f32[2,32], index: 11, kind: input, shape index: {}]
  %s12 = inlined_call_operand.vmem [shape: bf16[2,9,32], index: 12, kind: output, shape index: {}]
  %s13 = sld [smem:[#allocation0]]
  $region93: #{forward.8} parent=0
    _
  %s15 = ssub.s32 1, %s13
  %s16 = scalar_select 0, %s15, %s13
  loop: start=0, step=1, limit=4
  $region2: #{forward.8} parent=0 // loop_pre_header
    _
  $region3: #{forward.8} parent=0 // loop_header
    %s18 = sphi 0, %s22
    %p19 = scmp.ge.s32.totalorder %s18, 4
    %s25 = sphi 0, %s37
    %s26 = sphi 0, %s33
    %s27 = sphi 0, %s25
    %s28 = sphi 0, %s26
    %s29 = sphi 0, %s27
    %s30 = sphi 0, %s28
    %s40 = sphi 0, %s42
    %s43 = sphi 0, %s40
    %s44 = sphi 0, %s43
    %s60 = sphi 0, %s44
    %s64 = sphi 0, %s64
    %s66 = sphi 0, %s64
    %s67 = sphi 0, %s66
    %s81 = sphi 0, %s67
    %s85 = sphi 0, %s85
    %s87 = sphi 0, %s85
    %s88 = sphi 0, %s87
    %s102 = sphi 0, %s88
    %s106 = sphi 0, %s106
    %s108 = sphi 0, %s106
    %s109 = sphi 0, %s108
    %s123 = sphi 0, %s109
    %s127 = sphi 0, %s127
    %s129 = sphi 0, %s127
    %s130 = sphi 0, %s129
    %s144 = sphi 0, %s130
    %s148 = sphi 0, %s148
    %s150 = sphi 0, %s148
    %s151 = sphi 0, %s150
    %s165 = sphi 0, %s151
    %s169 = sphi 0, %s169
    %s171 = sphi 0, %s169
    %s172 = sphi 0, %s171
    %s186 = sphi 0, %s172
    %s190 = sphi 0, %s190
    %s192 = sphi 0, %s190
    %s193 = sphi 0, %s192
    %s207 = sphi 0, %s193
    %s211 = sphi 0, %s211
    %s213 = sphi 0, %s211
    %s214 = sphi 0, %s213
    %s228 = sphi 0, %s214
    %s232 = sphi 0, %s232
    %s234 = sphi 0, %s232
    %s235 = sphi 0, %s234
    %s249 = sphi 0, %s235
    %s253 = sphi 0, %s253
    %s255 = sphi 0, %s253
    %s256 = sphi 0, %s255
    %s270 = sphi 0, %s256
    %s274 = sphi 0, %s274
    %s276 = sphi 0, %s274
    %s277 = sphi 0, %s276
    %s291 = sphi 0, %s277
    %s297 = sphi 0, %s299
    %s300 = sphi 0, %s297
    %s301 = sphi 0, %s300
    %s317 = sphi 0, %s301
  $region4: #{forward.8} parent=0 // loop_header_branch
    %21 = sbr.rel (%p19) target = $region8
  $region5: #{forward.8} parent=0 // loop_body
    %s23 = ssub.s32 %s18, 1
    %s24 = ssub.s32 %s18, 2
    %s31 = sadd.s32 1, %s26
    %p32 = scmp.ge.s32.totalorder %s31, 1
    %s33 = scalar_select %p32, 0, %s31
    %s34 = sadd.s32 1, %s25
    %s35 = scalar_select %p32, %s34, %s25
    %p36 = scmp.ge.s32.totalorder %s35, 2
    %s37 = scalar_select %p36, 0, %s35
    %s38 = ssub.s32 %s25, %s37
    %p39 = scmp.eq.s32.totalorder %s38, 0
    %s41 = sadd.s32 %s40, 1
    %s42 = scalar_select %p39, %s40, %s41
    %p45 = pneg %p39
    %p46 = scmp.eq.s32.totalorder %s18, 1
    %p47 = por %p45, %p46
    %p48 = scmp.ne.s32.totalorder %s40, %s43
    %p49 = scmp.eq.s32.totalorder %s18, 0
    %p50 = por %p48, %p49
    %p51 = scmp.ne.s32.totalorder %s40, %s43
    %p52 = scmp.eq.s32.totalorder %s23, 1
    %p53 = por %p51, %p52
    %p54 = scmp.ne.s32.totalorder %s43, %s44
    %p55 = scmp.eq.s32.totalorder %s23, 0
    %p56 = por %p54, %p55
    %p57 = scmp.ne.s32.totalorder %s43, %s44
    %p58 = scmp.eq.s32.totalorder %s24, 1
    %p59 = por %p57, %p58
    %p61 = scmp.ne.s32.totalorder %s44, %s60
    %p62 = scmp.eq.s32.totalorder %s24, 0
    %p63 = por %p61, %p62
    %s65 = sadd.s32 %s64, 1
    %p68 = scmp.eq.s32.totalorder %s18, 1
    %p69 = scmp.ne.s32.totalorder %s64, %s66
    %p70 = scmp.eq.s32.totalorder %s18, 0
    %p71 = por %p69, %p70
    %p72 = scmp.ne.s32.totalorder %s64, %s66
    %p73 = scmp.eq.s32.totalorder %s23, 1
    %p74 = por %p72, %p73
    %p75 = scmp.ne.s32.totalorder %s66, %s67
    %p76 = scmp.eq.s32.totalorder %s23, 0
    %p77 = por %p75, %p76
    %p78 = scmp.ne.s32.totalorder %s66, %s67
    %p79 = scmp.eq.s32.totalorder %s24, 1
    %p80 = por %p78, %p79
    %p82 = scmp.ne.s32.totalorder %s67, %s81
    %p83 = scmp.eq.s32.totalorder %s24, 0
    %p84 = por %p82, %p83
    %s86 = sadd.s32 %s85, 1
    %p89 = scmp.eq.s32.totalorder %s18, 1
    %p90 = scmp.ne.s32.totalorder %s85, %s87
    %p91 = scmp.eq.s32.totalorder %s18, 0
    %p92 = por %p90, %p91
    %p93 = scmp.ne.s32.totalorder %s85, %s87
    %p94 = scmp.eq.s32.totalorder %s23, 1
    %p95 = por %p93, %p94
    %p96 = scmp.ne.s32.totalorder %s87, %s88
    %p97 = scmp.eq.s32.totalorder %s23, 0
    %p98 = por %p96, %p97
    %p99 = scmp.ne.s32.totalorder %s87, %s88
    %p100 = scmp.eq.s32.totalorder %s24, 1
    %p101 = por %p99, %p100
    %p103 = scmp.ne.s32.totalorder %s88, %s102
    %p104 = scmp.eq.s32.totalorder %s24, 0
    %p105 = por %p103, %p104
    %s107 = sadd.s32 %s106, 1
    %p110 = scmp.eq.s32.totalorder %s18, 1
    %p111 = scmp.ne.s32.totalorder %s106, %s108
    %p112 = scmp.eq.s32.totalorder %s18, 0
    %p113 = por %p111, %p112
    %p114 = scmp.ne.s32.totalorder %s106, %s108
    %p115 = scmp.eq.s32.totalorder %s23, 1
    %p116 = por %p114, %p115
    %p117 = scmp.ne.s32.totalorder %s108, %s109
    %p118 = scmp.eq.s32.totalorder %s23, 0
    %p119 = por %p117, %p118
    %p120 = scmp.ne.s32.totalorder %s108, %s109
    %p121 = scmp.eq.s32.totalorder %s24, 1
    %p122 = por %p120, %p121
    %p124 = scmp.ne.s32.totalorder %s109, %s123
    %p125 = scmp.eq.s32.totalorder %s24, 0
    %p126 = por %p124, %p125
    %s128 = sadd.s32 %s127, 1
    %p131 = scmp.eq.s32.totalorder %s18, 1
    %p132 = scmp.ne.s32.totalorder %s127, %s129
    %p133 = scmp.eq.s32.totalorder %s18, 0
    %p134 = por %p132, %p133
    %p135 = scmp.ne.s32.totalorder %s127, %s129
    %p136 = scmp.eq.s32.totalorder %s23, 1
    %p137 = por %p135, %p136
    %p138 = scmp.ne.s32.totalorder %s129, %s130
    %p139 = scmp.eq.s32.totalorder %s23, 0
    %p140 = por %p138, %p139
    %p141 = scmp.ne.s32.totalorder %s129, %s130
    %p142 = scmp.eq.s32.totalorder %s24, 1
    %p143 = por %p141, %p142
    %p145 = scmp.ne.s32.totalorder %s130, %s144
    %p146 = scmp.eq.s32.totalorder %s24, 0
    %p147 = por %p145, %p146
    %s149 = sadd.s32 %s148, 1
    %p152 = scmp.eq.s32.totalorder %s18, 1
    %p153 = scmp.ne.s32.totalorder %s148, %s150
    %p154 = scmp.eq.s32.totalorder %s18, 0
    %p155 = por %p153, %p154
    %p156 = scmp.ne.s32.totalorder %s148, %s150
    %p157 = scmp.eq.s32.totalorder %s23, 1
    %p158 = por %p156, %p157
    %p159 = scmp.ne.s32.totalorder %s150, %s151
    %p160 = scmp.eq.s32.totalorder %s23, 0
    %p161 = por %p159, %p160
    %p162 = scmp.ne.s32.totalorder %s150, %s151
    %p163 = scmp.eq.s32.totalorder %s24, 1
    %p164 = por %p162, %p163
    %p166 = scmp.ne.s32.totalorder %s151, %s165
    %p167 = scmp.eq.s32.totalorder %s24, 0
    %p168 = por %p166, %p167
    %s170 = sadd.s32 %s169, 1
    %p173 = scmp.eq.s32.totalorder %s18, 1
    %p174 = scmp.ne.s32.totalorder %s169, %s171
    %p175 = scmp.eq.s32.totalorder %s18, 0
    %p176 = por %p174, %p175
    %p177 = scmp.ne.s32.totalorder %s169, %s171
    %p178 = scmp.eq.s32.totalorder %s23, 1
    %p179 = por %p177, %p178
    %p180 = scmp.ne.s32.totalorder %s171, %s172
    %p181 = scmp.eq.s32.totalorder %s23, 0
    %p182 = por %p180, %p181
    %p183 = scmp.ne.s32.totalorder %s171, %s172
    %p184 = scmp.eq.s32.totalorder %s24, 1
    %p185 = por %p183, %p184
    %p187 = scmp.ne.s32.totalorder %s172, %s186
    %p188 = scmp.eq.s32.totalorder %s24, 0
    %p189 = por %p187, %p188
    %s191 = sadd.s32 %s190, 1
    %p194 = scmp.eq.s32.totalorder %s18, 1
    %p195 = scmp.ne.s32.totalorder %s190, %s192
    %p196 = scmp.eq.s32.totalorder %s18, 0
    %p197 = por %p195, %p196
    %p198 = scmp.ne.s32.totalorder %s190, %s192
    %p199 = scmp.eq.s32.totalorder %s23, 1
    %p200 = por %p198, %p199
    %p201 = scmp.ne.s32.totalorder %s192, %s193
    %p202 = scmp.eq.s32.totalorder %s23, 0
    %p203 = por %p201, %p202
    %p204 = scmp.ne.s32.totalorder %s192, %s193
    %p205 = scmp.eq.s32.totalorder %s24, 1
    %p206 = por %p204, %p205
    %p208 = scmp.ne.s32.totalorder %s193, %s207
    %p209 = scmp.eq.s32.totalorder %s24, 0
    %p210 = por %p208, %p209
    %s212 = sadd.s32 %s211, 1
    %p215 = scmp.eq.s32.totalorder %s18, 1
    %p216 = scmp.ne.s32.totalorder %s211, %s213
    %p217 = scmp.eq.s32.totalorder %s18, 0
    %p218 = por %p216, %p217
    %p219 = scmp.ne.s32.totalorder %s211, %s213
    %p220 = scmp.eq.s32.totalorder %s23, 1
    %p221 = por %p219, %p220
    %p222 = scmp.ne.s32.totalorder %s213, %s214
    %p223 = scmp.eq.s32.totalorder %s23, 0
    %p224 = por %p222, %p223
    %p225 = scmp.ne.s32.totalorder %s213, %s214
    %p226 = scmp.eq.s32.totalorder %s24, 1
    %p227 = por %p225, %p226
    %p229 = scmp.ne.s32.totalorder %s214, %s228
    %p230 = scmp.eq.s32.totalorder %s24, 0
    %p231 = por %p229, %p230
    %s233 = sadd.s32 %s232, 1
    %p236 = scmp.eq.s32.totalorder %s18, 1
    %p237 = scmp.ne.s32.totalorder %s232, %s234
    %p238 = scmp.eq.s32.totalorder %s18, 0
    %p239 = por %p237, %p238
    %p240 = scmp.ne.s32.totalorder %s232, %s234
    %p241 = scmp.eq.s32.totalorder %s23, 1
    %p242 = por %p240, %p241
    %p243 = scmp.ne.s32.totalorder %s234, %s235
    %p244 = scmp.eq.s32.totalorder %s23, 0
    %p245 = por %p243, %p244
    %p246 = scmp.ne.s32.totalorder %s234, %s235
    %p247 = scmp.eq.s32.totalorder %s24, 1
    %p248 = por %p246, %p247
    %p250 = scmp.ne.s32.totalorder %s235, %s249
    %p251 = scmp.eq.s32.totalorder %s24, 0
    %p252 = por %p250, %p251
    %s254 = sadd.s32 %s253, 1
    %p257 = scmp.eq.s32.totalorder %s18, 1
    %p258 = scmp.ne.s32.totalorder %s253, %s255
    %p259 = scmp.eq.s32.totalorder %s18, 0
    %p260 = por %p258, %p259
    %p261 = scmp.ne.s32.totalorder %s253, %s255
    %p262 = scmp.eq.s32.totalorder %s23, 1
    %p263 = por %p261, %p262
    %p264 = scmp.ne.s32.totalorder %s255, %s256
    %p265 = scmp.eq.s32.totalorder %s23, 0
    %p266 = por %p264, %p265
    %p267 = scmp.ne.s32.totalorder %s255, %s256
    %p268 = scmp.eq.s32.totalorder %s24, 1
    %p269 = por %p267, %p268
    %p271 = scmp.ne.s32.totalorder %s256, %s270
    %p272 = scmp.eq.s32.totalorder %s24, 0
    %p273 = por %p271, %p272
    %s275 = sadd.s32 %s274, 1
    %p278 = scmp.eq.s32.totalorder %s18, 1
    %p279 = scmp.ne.s32.totalorder %s274, %s276
    %p280 = scmp.eq.s32.totalorder %s18, 0
    %p281 = por %p279, %p280
    %p282 = scmp.ne.s32.totalorder %s274, %s276
    %p283 = scmp.eq.s32.totalorder %s23, 1
    %p284 = por %p282, %p283
    %p285 = scmp.ne.s32.totalorder %s276, %s277
    %p286 = scmp.eq.s32.totalorder %s23, 0
    %p287 = por %p285, %p286
    %p288 = scmp.ne.s32.totalorder %s276, %s277
    %p289 = scmp.eq.s32.totalorder %s24, 1
    %p290 = por %p288, %p289
    %p292 = scmp.ne.s32.totalorder %s277, %s291
    %p293 = scmp.eq.s32.totalorder %s24, 0
    %p294 = por %p292, %p293
    %s295 = ssub.s32 %s25, %s37
    %p296 = scmp.eq.s32.totalorder %s295, 0
    %s298 = sadd.s32 %s297, 1
    %s299 = scalar_select %p296, %s297, %s298
    %p302 = pneg %p296
    %p303 = scmp.eq.s32.totalorder %s18, 1
    %p304 = por %p302, %p303
    %p305 = scmp.ne.s32.totalorder %s297, %s300
    %p306 = scmp.eq.s32.totalorder %s18, 0
    %p307 = por %p305, %p306
    %p308 = scmp.ne.s32.totalorder %s297, %s300
    %p309 = scmp.eq.s32.totalorder %s23, 1
    %p310 = por %p308, %p309
    %p311 = scmp.ne.s32.totalorder %s300, %s301
    %p312 = scmp.eq.s32.totalorder %s23, 0
    %p313 = por %p311, %p312
    %p314 = scmp.ne.s32.totalorder %s300, %s301
    %p315 = scmp.eq.s32.totalorder %s24, 1
    %p316 = por %p314, %p315
    %p318 = scmp.ne.s32.totalorder %s301, %s317
    %p319 = scmp.eq.s32.totalorder %s24, 0
    %p320 = por %p318, %p319
    %p321 = scmp.le.s32.totalorder 1, %s18
    %p322 = scmp.lt.s32.totalorder %s18, 3
    %p323 = pnand %p321, %p322
    %p324 = pneg %p323
    // Predicated region
    $region9: #{forward.8} parent=5 // pred_check
      _
    $region10: #{forward.8} parent=5 // pred_check_branch
      %326 = sbr.rel (%p323) target = $region12
    $region11: #{forward.8} parent=5 // pred_region
      %s327 = ssub.s32 %s18, 1
      // Predicated region
      $region13: #{forward.8} parent=11 // pred_check
        %p328 = pneg %p77
      $region14: #{forward.8} parent=11 // pred_check_branch
        %330 = sbr.rel (%p328) target = $region16
      $region15: #{forward.8} parent=11 // pred_region
        _
      $region16: #{forward.8} parent=11 // pred_fallthru
        _
      // Predicated region
      $region17: #{forward.8} parent=11 // pred_check
        %p331 = pneg %p98
      $region18: #{forward.8} parent=11 // pred_check_branch
        %333 = sbr.rel (%p331) target = $region20
      $region19: #{forward.8} parent=11 // pred_region
        _
      $region20: #{forward.8} parent=11 // pred_fallthru
        _
      // Predicated region
      $region21: #{forward.8} parent=11 // pred_check
        %p334 = pneg %p119
      $region22: #{forward.8} parent=11 // pred_check_branch
        %336 = sbr.rel (%p334) target = $region24
      $region23: #{forward.8} parent=11 // pred_region
        _
      $region24: #{forward.8} parent=11 // pred_fallthru
        _
      // Predicated region
      $region25: #{forward.8} parent=11 // pred_check
        %p337 = pneg %p140
      $region26: #{forward.8} parent=11 // pred_check_branch
        %339 = sbr.rel (%p337) target = $region28
      $region27: #{forward.8} parent=11 // pred_region
        _
      $region28: #{forward.8} parent=11 // pred_fallthru
        _
      // Predicated region
      $region29: #{forward.8} parent=11 // pred_check
        %p340 = pneg %p161
      $region30: #{forward.8} parent=11 // pred_check_branch
        %342 = sbr.rel (%p340) target = $region32
      $region31: #{forward.8} parent=11 // pred_region
        _
      $region32: #{forward.8} parent=11 // pred_fallthru
        _
      // Predicated region
      $region33: #{forward.8} parent=11 // pred_check
        %p343 = pneg %p182
      $region34: #{forward.8} parent=11 // pred_check_branch
        %345 = sbr.rel (%p343) target = $region36
      $region35: #{forward.8} parent=11 // pred_region
        _
      $region36: #{forward.8} parent=11 // pred_fallthru
        _
      // Predicated region
      $region37: #{forward.8} parent=11 // pred_check
        %p346 = pneg %p203
      $region38: #{forward.8} parent=11 // pred_check_branch
        %348 = sbr.rel (%p346) target = $region40
      $region39: #{forward.8} parent=11 // pred_region
        _
      $region40: #{forward.8} parent=11 // pred_fallthru
        _
      // Predicated region
      $region41: #{forward.8} parent=11 // pred_check
        %p349 = pneg %p224
      $region42: #{forward.8} parent=11 // pred_check_branch
        %351 = sbr.rel (%p349) target = $region44
      $region43: #{forward.8} parent=11 // pred_region
        _
      $region44: #{forward.8} parent=11 // pred_fallthru
        _
      // Predicated region
      $region45: #{forward.8} parent=11 // pred_check
        %p352 = pneg %p245
      $region46: #{forward.8} parent=11 // pred_check_branch
        %354 = sbr.rel (%p352) target = $region48
      $region47: #{forward.8} parent=11 // pred_region
        _
      $region48: #{forward.8} parent=11 // pred_fallthru
        _
      // Predicated region
      $region49: #{forward.8} parent=11 // pred_check
        %p355 = pneg %p266
      $region50: #{forward.8} parent=11 // pred_check_branch
        %357 = sbr.rel (%p355) target = $region52
      $region51: #{forward.8} parent=11 // pred_region
        _
      $region52: #{forward.8} parent=11 // pred_fallthru
        _
      // Predicated region
      $region53: #{forward.8} parent=11 // pred_check
        %p358 = pneg %p287
      $region54: #{forward.8} parent=11 // pred_check_branch
        %360 = sbr.rel (%p358) target = $region56
      $region55: #{forward.8} parent=11 // pred_region
        _
      $region56: #{forward.8} parent=11 // pred_fallthru
        _
    $region12: #{forward.8} parent=5 // pred_fallthru
      _
    %p361 = scmp.lt.s32.totalorder %s18, 2
    // Predicated region
    $region57: #{forward.8} parent=5 // pred_check
      %p362 = pneg %p361
    $region58: #{forward.8} parent=5 // pred_check_branch
      %364 = sbr.rel (%p362) target = $region60
    $region59: #{forward.8} parent=5 // pred_region
      // Predicated region
      $region61: #{forward.8} parent=59 // pred_check
        %p365 = pneg %p50
      $region62: #{forward.8} parent=59 // pred_check_branch
        %367 = sbr.rel (%p365) target = $region64
      $region63: #{forward.8} parent=59 // pred_region
        %p368 = scmp.lt.s32.totalorder %s25, 1
        %s369 = scalar_select %p368, %s25, 1
        %s370 = smul.addr %s369, 2
        %s371 = smul.addr %s370, 8
        %s372 = scalar_lea.vmem %s0, %s371
      $region64: #{forward.8} parent=59 // pred_fallthru
        _
    $region60: #{forward.8} parent=5 // pred_fallthru
      _
    %p373 = scmp.le.s32.totalorder 1, %s18
    %p374 = scmp.lt.s32.totalorder %s18, 3
    %p375 = pnand %p373, %p374
    %p376 = pneg %p375
    // Predicated region
    $region65: #{forward.8} parent=5 // pred_check
      _
    $region66: #{forward.8} parent=5 // pred_check_branch
      %378 = sbr.rel (%p375) target = $region68
    $region67: #{forward.8} parent=5 // pred_region
      %s379 = ssub.s32 %s18, 1
      %p380 = scmp.lt.s32.totalorder %s27, 1
      %s381 = scalar_select %p380, %s27, 1
      %s382 = smul.addr %s381, 2
      %s383 = smul.addr %s382, 8
      %s384 = scalar_lea.vmem %s0, %s383
      %p385 = pneg %p56
      %p386 = pneg %p53
      %p387 = pneg %p77
      %p388 = pneg %p74
      %p389 = pneg %p98
      %p390 = pneg %p95
      %p391 = pneg %p119
      %p392 = pneg %p116
      %p393 = pneg %p140
      %p394 = pneg %p137
      %p395 = pneg %p161
      %p396 = pneg %p158
      %p397 = pneg %p182
      %p398 = pneg %p179
      %p399 = pneg %p203
      %p400 = pneg %p200
      %p401 = pneg %p224
      %p402 = pneg %p221
      %p403 = pneg %p245
      %p404 = pneg %p242
      %p405 = pneg %p266
      %p406 = pneg %p263
      %p407 = pneg %p287
      %p408 = pneg %p284
      %p409 = pneg %p313
      %p410 = pneg %p310
      %p411 = scmp.lt.s32.totalorder %s27, 1
      %s412 = scalar_select %p411, %s27, 1
      %s413 = smul.addr %s412, 2
      %s414 = smul.addr %s413, 4
      %s415 = scalar_lea.vmem %s12, %s414
      %p416 = scmp.lt.s32.totalorder %s27, 1
      %s417 = scalar_select %p416, %s27, 1
      %s418 = smul.addr %s417, 2
      %s419 = smul.addr %s418, 8
      %s420 = scalar_lea.vmem %s0, %s419
      %p421 = scmp.lt.s32.totalorder %s27, 1
      %s422 = scalar_select %p421, %s27, 1
      %s423 = smul.addr %s422, 2
      %s424 = smul.addr %s423, 4
      %s425 = scalar_lea.vmem %s12, %s424
      %p427 = scmp.eq.s32.totalorder %s28, 0
      // Predicated region
      $region69: #{forward.8} parent=67 // pred_check
        %p428 = pneg %p427
      $region70: #{forward.8} parent=67 // pred_check_branch
        %430 = sbr.rel (%p428) target = $region72
      $region71: #{forward.8} parent=67 // pred_region
        %v431 = vld [vmem:[%s420] sm:$0xff]
        %v432 = vld [vmem:[%s420 + $0x8] sm:$0x1]
        %v433 = vld [vmem:[%s1] sm:$0xff]
        %v434 = vld [vmem:[%s1 + $0x8] sm:$0x1]
        %v435 = vadd.f32 %v431, %v433
        %v436 = vadd.f32 %v432, %v434
        %vm437 = vcmask 261120
        %438 = vst.msk [vmem:[#allocation2] sm:$0xff] %vm437, %v435
        %vm439 = vcmask 253952
        %440 = vst.msk [vmem:[#allocation2 + $0x8] sm:$0x1] %vm439, %v436
      $region72: #{forward.8} parent=67 // pred_fallthru
        _
      %v441 = vld [vmem:[#allocation2] sm:$0xff]
      %v442 = vld [vmem:[#allocation2 + $0x8] sm:$0x1]
      %s443 = smul.u32 %s28, 4
      %s444 = scalar_lea.vmem %s2, %s443
      %v445 = vld [vmem:[%s444] sm:$0xf]
      %vm446 = vcmask 261120
      %v447 = vsel %vm446, %v441, 0.0
      %448 = vadd.xlane.f32.xlu0 %v447
      %v449 = vpop.xlane.xlu0 %448
      %vm450 = vcmask 253952
      %v451 = vsel %vm450, %v442, 0.0
      %452 = vadd.xlane.f32.xlu0 %v451
      %v453 = vpop.xlane.xlu0 %452
      %v454 = vrcp.pop 32.0
      %v455 = vmul.f32 %v449, %v454
      %v456 = vmul.f32 %v453, %v454
      %v457 = vsub.f32 %v441, %v455
      %v458 = vsub.f32 %v442, %v456
      %v459 = vmul.f32 %v457, %v457
      %v460 = vmul.f32 %v458, %v458
      %v461 = vsel %vm446, %v459, 0.0
      %462 = vadd.xlane.f32.xlu0 %v461
      %v463 = vpop.xlane.xlu0 %462
      %v464 = vsel %vm450, %v460, 0.0
      %465 = vadd.xlane.f32.xlu0 %v464
      %v466 = vpop.xlane.xlu0 %465
      %v467 = vmul.f32 %v463, %v454
      %v468 = vmul.f32 %v466, %v454
      %v469 = vadd.f32 %v467, 1e-05
      %v470 = vadd.f32 %v468, 1e-05
      %v471 = vrsqrt.pop %v469
      %v472 = vrsqrt.pop %v470
      %v473 = vmul.f32 %v457, %v471
      %v474 = vmul.f32 %v458, %v472
      %v475 = vlaneseq
      %v476 = vshrl.u32 %v475, 7
      %v477 = vsub.s32 0, %v476
      %v478 = vrot.slane %v445, %v477
      %v479 = vmul.f32 %v473, %v478
      %v480 = vmul.f32 %v474, %v478
      %v481 = vlaneseq
      %v482 = vshrl.u32 %v481, 7
      %v483 = vsub.s32 1, %v482
      %v484 = vrot.slane %v445, %v483
      %v485 = vadd.f32 %v479, %v484
      %v486 = vadd.f32 %v480, %v484
      %v487 = vpack.c.bf16 %v486, %v485
      %s488 = smul.addr %s443, 4
      %s489 = scalar_lea.vmem %s3, %s488
      %v490 = vld [vmem:[%s489] sm:$0xf]
      %v491 = vld [vmem:[%s489 + $0x4] sm:$0xf]
      %v492 = vld [vmem:[%s489 + $0x8] sm:$0xf]
      %v493 = vld [vmem:[%s489 + $0xc] sm:$0xf]
      %s494 = scalar_lea.vmem %s4, %s28
      %v495 = vld [vmem:[%s494] sm:$0x1]
      %v497 = vlaneseq
      %v498 = vshrl.u32 %v497, 7
      %v499 = vsub.s32 0, %v498
      %v500 = vrot.slane %v495, %v499
      %v506 = vunpack.c.l.b16 %v490
      %v507 = vunpack.c.l.b16 %v491
      %v508 = vunpack.c.l.b16 %v492
      %v509 = vunpack.c.l.b16 %v493
      %v510 = vpack.c.b16 %v507, %v506
      %v511 = vpack.c.b16 %v509, %v508
      %v515 = vsel %vm446, %v487, 0
      %517 = vmatprep.subr.bf16.mxu0 0
      %518 = vmatpush1.bf16.msra.mxu0 %v510
      %519 = vmatprep.subr.bf16.mxu0 0
      %520 = vmatpush1.bf16.msra.mxu0 %v511
      %521 = vmatprep.subr.bf16.mxu0 0
      %522 = vmatpush1.bf16.msra.mxu0 0
      %523 = vmatprep.subr.bf16.mxu0 0
      %524 = vmatpush1.bf16.msra.mxu0 0
      %525 = vmatprep.subr.bf16.mxu0 0
      %526 = vmatpush1.bf16.msra.mxu0 0
      %527 = vmatprep.subr.bf16.mxu0 0
      %528 = vmatpush1.bf16.msra.mxu0 0
      %529 = vmatprep.subr.bf16.mxu0 0
      %530 = vmatpush1.bf16.msra.mxu0 0
      %531 = vmatprep.subr.bf16.mxu0 0
      %532 = vmatpush1.bf16.msra.mxu0 0
      %533 = vmatprep.subr.bf16.mxu0 0
      %534 = vmatpush1.bf16.msra.mxu0 0
      %535 = vmatprep.subr.bf16.mxu0 0
      %536 = vmatpush1.bf16.msra.mxu0 0
      %537 = vmatprep.subr.bf16.mxu0 0
      %538 = vmatpush1.bf16.msra.mxu0 0
      %539 = vmatprep.subr.bf16.mxu0 0
      %540 = vmatpush1.bf16.msra.mxu0 0
      %541 = vmatprep.subr.bf16.mxu0 0
      %542 = vmatpush1.bf16.msra.mxu0 0
      %543 = vmatprep.subr.bf16.mxu0 0
      %544 = vmatpush1.bf16.msra.mxu0 0
      %545 = vmatprep.subr.bf16.mxu0 0
      %546 = vmatpush1.bf16.msra.mxu0 0
      %547 = vmatprep.subr.bf16.mxu0 0
      %548 = vmatpush1.bf16.msra.mxu0 0
      %549 = vmatprep.mubr.bf16.mxu0 0
      %550 = vmatmul.mubr.bf16.gmra.mrb[0].mxu0 %v515
      %v551 = vpop.f32.mrb[0].mxu0
      %v552 = vadd.f32 %v500, %v551
      %v553 = vpop.f32.mrb[0].mxu0
      %v554 = vpop.f32.mrb[0].mxu0
      %v555 = vadd.f32 %v500, %v554
      %v556 = vpop.f32.mrb[0].mxu0
      %557 = vdwg.mxu0
      %v558 = vpack.c.bf16 %v555, %v552
      %v559 = vlaneseq
      %v560 = vand.u32 %v559, 127
      %vm561 = vcmp.ge.s32.totalorder %v560, 0
      %vm562 = vcmp.lt.s32.totalorder %v560, 8
      %vm563 = vmand %vm561, %vm562
      %v564 = vsel %vm563, 1, 0
      %v565 = vcvt.s32.f32 %v564
      %v566 = vmul.f32 %v552, %v565
      %v567 = vmul.f32 %v555, %v565
      %v568 = vpack.c.bf16 %v567, %v566
      %570 = vrot.lane.b32.xlu0 %v558, 96
      %v571 = vpop.permute.xlu0 %570
      %v573 = vsel %vm446, %v568, 0
      %v576 = vsel %vm446, %v571, 0
      %578 = vmatprep.subr.bf16.mxu0 0
      %579 = vmatpush1.bf16.xpose.msra.mxu0 %v576
      %580 = vmatprep.subr.bf16.mxu0 0
      %581 = vmatpush1.bf16.xpose.msra.mxu0 0
      %582 = vmatprep.subr.bf16.mxu0 0
      %583 = vmatpush1.bf16.xpose.msra.mxu0 0
      %584 = vmatprep.subr.bf16.mxu0 0
      %585 = vmatpush1.bf16.xpose.msra.mxu0 0
      %586 = vmatprep.subr.bf16.mxu0 0
      %587 = vmatpush1.bf16.xpose.msra.mxu0 0
      %588 = vmatprep.subr.bf16.mxu0 0
      %589 = vmatpush1.bf16.xpose.msra.mxu0 0
      %590 = vmatprep.subr.bf16.mxu0 0
      %591 = vmatpush1.bf16.xpose.msra.mxu0 0
      %592 = vmatprep.subr.bf16.mxu0 0
      %593 = vmatpush1.bf16.xpose.msra.mxu0 0
      %594 = vmatprep.subr.bf16.mxu0 0
      %595 = vmatpush1.bf16.xpose.msra.mxu0 0
      %596 = vmatprep.subr.bf16.mxu0 0
      %597 = vmatpush1.bf16.xpose.msra.mxu0 0
      %598 = vmatprep.subr.bf16.mxu0 0
      %599 = vmatpush1.bf16.xpose.msra.mxu0 0
      %600 = vmatprep.subr.bf16.mxu0 0
      %601 = vmatpush1.bf16.xpose.msra.mxu0 0
      %602 = vmatprep.subr.bf16.mxu0 0
      %603 = vmatpush1.bf16.xpose.msra.mxu0 0
      %604 = vmatprep.subr.bf16.mxu0 0
      %605 = vmatpush1.bf16.xpose.msra.mxu0 0
      %606 = vmatprep.subr.bf16.mxu0 0
      %607 = vmatpush1.bf16.xpose.msra.mxu0 0
      %608 = vmatprep.subr.bf16.mxu0 0
      %609 = vmatpush1.bf16.xpose.msra.mxu0 0
      %610 = vmatprep.mubr.bf16.mxu0 0
      %611 = vmatmul.mubr.bf16.gmra.mrb[0].mxu0 %v573
      %v612 = vpop.f32.mrb[0].mxu0
      %v613 = vadd.f32 0.0, %v612
      %v614 = vpop.f32.mrb[0].mxu0
      %v615 = vpop.f32.mrb[0].mxu0
      %v616 = vadd.f32 0.0, %v615
      %v617 = vpop.f32.mrb[0].mxu0
      %618 = vdwg.mxu0
      %v619 = vmul.f32 %v613, 0.35355338
      %v620 = vmul.f32 %v616, 0.35355338
      %vm621 = vcmask 72704
      %v622 = vsel %vm621, %v619, -inf
      %623 = vmax.xlane.f32.xlu0 %v622
      %v624 = vpop.xlane.xlu0 %623
      %vm625 = vcmask 65536
      %v626 = vsel %vm625, %v620, -inf
      %627 = vmax.xlane.f32.xlu0 %v626
      %v628 = vpop.xlane.xlu0 %627
      %v629 = vsub.f32 %v619, %v624
      %v630 = vsub.f32 %v620, %v628
      %v631 = vmul.f32 %v629, 1.442695
      %v632 = vpow.pop %v631
      %v633 = vmul.f32 %v630, 1.442695
      %v634 = vpow.pop %v633
      %v635 = vsel %vm621, %v632, 0.0
      %636 = vadd.xlane.f32.xlu0 %v635
      %v637 = vpop.xlane.xlu0 %636
      %v638 = vsel %vm625, %v634, 0.0
      %639 = vadd.xlane.f32.xlu0 %v638
      %v640 = vpop.xlane.xlu0 %639
      %v641 = vrcp.pop %v637
      %v642 = vrcp.pop %v640
      %v643 = vmul.f32 %v632, %v641
      %v644 = vmul.f32 %v634, %v642
      %v645 = vpack.c.bf16 %v644, %v643
      %647 = vrot.lane.b32.xlu0 %v565, 64
      %v648 = vpop.permute.xlu0 %647
      %v650 = vmul.f32 %v552, %v648
      %v651 = vmul.f32 %v555, %v648
      %v652 = vpack.c.bf16 %v651, %v650
      %vm653 = vcmp.ge.s32.totalorder %v560, 8
      %vm654 = vcmp.lt.s32.totalorder %v560, 16
      %vm655 = vmand %vm653, %vm654
      %v656 = vsel %vm655, 1, 0
      %v657 = vcvt.s32.f32 %v656
      %v658 = vmul.f32 %v552, %v657
      %v659 = vmul.f32 %v555, %v657
      %v660 = vpack.c.bf16 %v659, %v658
      %v662 = vsel %vm446, %v660, 0
      %664 = vmatprep.subr.bf16.mxu0 0
      %665 = vmatpush1.bf16.xpose.msra.mxu0 %v576
      %666 = vmatprep.subr.bf16.mxu0 0
      %667 = vmatpush1.bf16.xpose.msra.mxu0 0
      %668 = vmatprep.subr.bf16.mxu0 0
      %669 = vmatpush1.bf16.xpose.msra.mxu0 0
      %670 = vmatprep.subr.bf16.mxu0 0
      %671 = vmatpush1.bf16.xpose.msra.mxu0 0
      %672 = vmatprep.subr.bf16.mxu0 0
      %673 = vmatpush1.bf16.xpose.msra.mxu0 0
      %674 = vmatprep.subr.bf16.mxu0 0
      %675 = vmatpush1.bf16.xpose.msra.mxu0 0
      %676 = vmatprep.subr.bf16.mxu0 0
      %677 = vmatpush1.bf16.xpose.msra.mxu0 0
      %678 = vmatprep.subr.bf16.mxu0 0
      %679 = vmatpush1.bf16.xpose.msra.mxu0 0
      %680 = vmatprep.subr.bf16.mxu0 0
      %681 = vmatpush1.bf16.xpose.msra.mxu0 0
      %682 = vmatprep.subr.bf16.mxu0 0
      %683 = vmatpush1.bf16.xpose.msra.mxu0 0
      %684 = vmatprep.subr.bf16.mxu0 0
      %685 = vmatpush1.bf16.xpose.msra.mxu0 0
      %686 = vmatprep.subr.bf16.mxu0 0
      %687 = vmatpush1.bf16.xpose.msra.mxu0 0
      %688 = vmatprep.subr.bf16.mxu0 0
      %689 = vmatpush1.bf16.xpose.msra.mxu0 0
      %690 = vmatprep.subr.bf16.mxu0 0
      %691 = vmatpush1.bf16.xpose.msra.mxu0 0
      %692 = vmatprep.subr.bf16.mxu0 0
      %693 = vmatpush1.bf16.xpose.msra.mxu0 0
      %694 = vmatprep.subr.bf16.mxu0 0
      %695 = vmatpush1.bf16.xpose.msra.mxu0 0
      %696 = vmatprep.mubr.bf16.mxu0 0
      %697 = vmatmul.mubr.bf16.gmra.mrb[0].mxu0 %v662
      %v698 = vpop.f32.mrb[0].mxu0
      %v699 = vadd.f32 0.0, %v698
      %v700 = vpop.f32.mrb[0].mxu0
      %v701 = vpop.f32.mrb[0].mxu0
      %v702 = vadd.f32 0.0, %v701
      %v703 = vpop.f32.mrb[0].mxu0
      %704 = vdwg.mxu0
      %v705 = vmul.f32 %v699, 0.35355338
      %v706 = vmul.f32 %v702, 0.35355338
      %v707 = vsel %vm621, %v705, -inf
      %708 = vmax.xlane.f32.xlu0 %v707
      %v709 = vpop.xlane.xlu0 %708
      %v710 = vsel %vm625, %v706, -inf
      %711 = vmax.xlane.f32.xlu0 %v710
      %v712 = vpop.xlane.xlu0 %711
      %v713 = vsub.f32 %v705, %v709
      %v714 = vsub.f32 %v706, %v712
      %v715 = vmul.f32 %v713, 1.442695
      %v716 = vpow.pop %v715
      %v717 = vmul.f32 %v714, 1.442695
      %v718 = vpow.pop %v717
      %v719 = vsel %vm621, %v716, 0.0
      %720 = vadd.xlane.f32.xlu0 %v719
      %v721 = vpop.xlane.xlu0 %720
      %v722 = vsel %vm625, %v718, 0.0
      %723 = vadd.xlane.f32.xlu0 %v722
      %v724 = vpop.xlane.xlu0 %723
      %v725 = vrcp.pop %v721
      %v726 = vrcp.pop %v724
      %v727 = vmul.f32 %v716, %v725
      %v728 = vmul.f32 %v718, %v726
      %v729 = vpack.c.bf16 %v728, %v727
      %731 = vrot.lane.b32.xlu0 %v657, 64
      %v732 = vpop.permute.xlu0 %731
      %v734 = vmul.f32 %v552, %v732
      %v735 = vmul.f32 %v555, %v732
      %v736 = vpack.c.bf16 %v735, %v734
      %738 = vrot.lane.b32.xlu0 %v736, 64
      %v739 = vpop.permute.xlu0 %738
      %v741 = vsel %vm621, %v729, 0
      %vm743 = vcmask 1043456
      %vm744 = vcmask 1044480
      %v745 = vsel %vm743, 4294967295, 65535
      %v746 = vsel %vm744, %v745, 0
      %v748 = vand.u32 %v739, %v746
      %750 = vmatprep.subr.bf16.mxu0 0
      %751 = vmatpush1.bf16.msra.mxu0 %v748
      %752 = vmatprep.subr.bf16.mxu0 0
      %753 = vmatpush1.bf16.msra.mxu0 0
      %754 = vmatprep.subr.bf16.mxu0 0
      %755 = vmatpush1.bf16.msra.mxu0 0
      %756 = vmatprep.subr.bf16.mxu0 0
      %757 = vmatpush1.bf16.msra.mxu0 0
      %758 = vmatprep.subr.bf16.mxu0 0
      %759 = vmatpush1.bf16.msra.mxu0 0
      %760 = vmatprep.subr.bf16.mxu0 0
      %761 = vmatpush1.bf16.msra.mxu0 0
      %762 = vmatprep.subr.bf16.mxu0 0
      %763 = vmatpush1.bf16.msra.mxu0 0
      %764 = vmatprep.subr.bf16.mxu0 0
      %765 = vmatpush1.bf16.msra.mxu0 0
      %766 = vmatprep.subr.bf16.mxu0 0
      %767 = vmatpush1.bf16.msra.mxu0 0
      %768 = vmatprep.subr.bf16.mxu0 0
      %769 = vmatpush1.bf16.msra.mxu0 0
      %770 = vmatprep.subr.bf16.mxu0 0
      %771 = vmatpush1.bf16.msra.mxu0 0
      %772 = vmatprep.subr.bf16.mxu0 0
      %773 = vmatpush1.bf16.msra.mxu0 0
      %774 = vmatprep.subr.bf16.mxu0 0
      %775 = vmatpush1.bf16.msra.mxu0 0
      %776 = vmatprep.subr.bf16.mxu0 0
      %777 = vmatpush1.bf16.msra.mxu0 0
      %778 = vmatprep.subr.bf16.mxu0 0
      %779 = vmatpush1.bf16.msra.mxu0 0
      %780 = vmatprep.subr.bf16.mxu0 0
      %781 = vmatpush1.bf16.msra.mxu0 0
      %782 = vmatprep.mubr.bf16.mxu0 0
      %783 = vmatmul.mubr.bf16.gmra.mrb[0].mxu0 %v741
      %v784 = vpop.f32.mrb[0].mxu0
      %v785 = vadd.f32 0.0, %v784
      %v786 = vpop.f32.mrb[0].mxu0
      %v787 = vpop.f32.mrb[0].mxu0
      %v788 = vadd.f32 0.0, %v787
      %v789 = vpop.f32.mrb[0].mxu0
      %790 = vdwg.mxu0
      %792 = vrot.lane.b32.xlu0 %v652, 64
      %v793 = vpop.permute.xlu0 %792
      %v795 = vsel %vm621, %v645, 0
      %v798 = vand.u32 %v793, %v746
      %800 = vmatprep.subr.bf16.mxu0 0
      %801 = vmatpush1.bf16.msra.mxu0 %v798
      %802 = vmatprep.subr.bf16.mxu0 0
      %803 = vmatpush1.bf16.msra.mxu0 0
      %804 = vmatprep.subr.bf16.mxu0 0
      %805 = vmatpush1.bf16.msra.mxu0 0
      %806 = vmatprep.subr.bf16.mxu0 0
      %807 = vmatpush1.bf16.msra.mxu0 0
      %808 = vmatprep.subr.bf16.mxu0 0
      %809 = vmatpush1.bf16.msra.mxu0 0
      %810 = vmatprep.subr.bf16.mxu0 0
      %811 = vmatpush1.bf16.msra.mxu0 0
      %812 = vmatprep.subr.bf16.mxu0 0
      %813 = vmatpush1.bf16.msra.mxu0 0
      %814 = vmatprep.subr.bf16.mxu0 0
      %815 = vmatpush1.bf16.msra.mxu0 0
      %816 = vmatprep.subr.bf16.mxu0 0
      %817 = vmatpush1.bf16.msra.mxu0 0
      %818 = vmatprep.subr.bf16.mxu0 0
      %819 = vmatpush1.bf16.msra.mxu0 0
      %820 = vmatprep.subr.bf16.mxu0 0
      %821 = vmatpush1.bf16.msra.mxu0 0
      %822 = vmatprep.subr.bf16.mxu0 0
      %823 = vmatpush1.bf16.msra.mxu0 0
      %824 = vmatprep.subr.bf16.mxu0 0
      %825 = vmatpush1.bf16.msra.mxu0 0
      %826 = vmatprep.subr.bf16.mxu0 0
      %827 = vmatpush1.bf16.msra.mxu0 0
      %828 = vmatprep.subr.bf16.mxu0 0
      %829 = vmatpush1.bf16.msra.mxu0 0
      %830 = vmatprep.subr.bf16.mxu0 0
      %831 = vmatpush1.bf16.msra.mxu0 0
      %832 = vmatprep.mubr.bf16.mxu0 0
      %833 = vmatmul.mubr.bf16.gmra.mrb[0].mxu0 %v795
      %v834 = vpop.f32.mrb[0].mxu0
      %v835 = vadd.f32 %v785, %v834
      %v836 = vpop.f32.mrb[0].mxu0
      %v837 = vpop.f32.mrb[0].mxu0
      %v838 = vadd.f32 %v788, %v837
      %v839 = vpop.f32.mrb[0].mxu0
      %840 = vdwg.mxu0
      %vm841 = vcmp.ge.s32.totalorder %v560, 16
      %vm842 = vcmp.lt.s32.totalorder %v560, 24
      %vm843 = vmand %vm841, %vm842
      %v844 = vsel %vm843, 1, 0
      %v845 = vcvt.s32.f32 %v844
      %v846 = vmul.f32 %v552, %v845
      %v847 = vmul.f32 %v555, %v845
      %v848 = vpack.c.bf16 %v847, %v846
      %v850 = vsel %vm446, %v848, 0
      %852 = vmatprep.subr.bf16.mxu0 0
      %853 = vmatpush1.bf16.xpose.msra.mxu0 %v576
      %854 = vmatprep.subr.bf16.mxu0 0
      %855 = vmatpush1.bf16.xpose.msra.mxu0 0
      %856 = vmatprep.subr.bf16.mxu0 0
      %857 = vmatpush1.bf16.xpose.msra.mxu0 0
      %858 = vmatprep.subr.bf16.mxu0 0
      %859 = vmatpush1.bf16.xpose.msra.mxu0 0
      %860 = vmatprep.subr.bf16.mxu0 0
      %861 = vmatpush1.bf16.xpose.msra.mxu0 0
      %862 = vmatprep.subr.bf16.mxu0 0
      %863 = vmatpush1.bf16.xpose.msra.mxu0 0
      %864 = vmatprep.subr.bf16.mxu0 0
      %865 = vmatpush1.bf16.xpose.msra.mxu0 0
      %866 = vmatprep.subr.bf16.mxu0 0
      %867 = vmatpush1.bf16.xpose.msra.mxu0 0
      %868 = vmatprep.subr.bf16.mxu0 0
      %869 = vmatpush1.bf16.xpose.msra.mxu0 0
      %870 = vmatprep.subr.bf16.mxu0 0
      %871 = vmatpush1.bf16.xpose.msra.mxu0 0
      %872 = vmatprep.subr.bf16.mxu0 0
      %873 = vmatpush1.bf16.xpose.msra.mxu0 0
      %874 = vmatprep.subr.bf16.mxu0 0
      %875 = vmatpush1.bf16.xpose.msra.mxu0 0
      %876 = vmatprep.subr.bf16.mxu0 0
      %877 = vmatpush1.bf16.xpose.msra.mxu0 0
      %878 = vmatprep.subr.bf16.mxu0 0
      %879 = vmatpush1.bf16.xpose.msra.mxu0 0
      %880 = vmatprep.subr.bf16.mxu0 0
      %881 = vmatpush1.bf16.xpose.msra.mxu0 0
      %882 = vmatprep.subr.bf16.mxu0 0
      %883 = vmatpush1.bf16.xpose.msra.mxu0 0
      %884 = vmatprep.mubr.bf16.mxu0 0
      %885 = vmatmul.mubr.bf16.gmra.mrb[0].mxu0 %v850
      %v886 = vpop.f32.mrb[0].mxu0
      %v887 = vadd.f32 0.0, %v886
      %v888 = vpop.f32.mrb[0].mxu0
      %v889 = vpop.f32.mrb[0].mxu0
      %v890 = vadd.f32 0.0, %v889
      %v891 = vpop.f32.mrb[0].mxu0
      %892 = vdwg.mxu0
      %v893 = vmul.f32 %v887, 0.35355338
      %v894 = vmul.f32 %v890, 0.35355338
      %v895 = vsel %vm621, %v893, -inf
      %896 = vmax.xlane.f32.xlu0 %v895
      %v897 = vpop.xlane.xlu0 %896
      %v898 = vsel %vm625, %v894, -inf
      %899 = vmax.xlane.f32.xlu0 %v898
      %v900 = vpop.xlane.xlu0 %899
      %v901 = vsub.f32 %v893, %v897
      %v902 = vsub.f32 %v894, %v900
      %v903 = vmul.f32 %v901, 1.442695
      %v904 = vpow.pop %v903
      %v905 = vmul.f32 %v902, 1.442695
      %v906 = vpow.pop %v905
      %v907 = vsel %vm621, %v904, 0.0
      %908 = vadd.xlane.f32.xlu0 %v907
      %v909 = vpop.xlane.xlu0 %908
      %v910 = vsel %vm625, %v906, 0.0
      %911 = vadd.xlane.f32.xlu0 %v910
      %v912 = vpop.xlane.xlu0 %911
      %v913 = vrcp.pop %v909
      %v914 = vrcp.pop %v912
      %v915 = vmul.f32 %v904, %v913
      %v916 = vmul.f32 %v906, %v914
      %v917 = vpack.c.bf16 %v916, %v915
      %919 = vrot.lane.b32.xlu0 %v845, 64
      %v920 = vpop.permute.xlu0 %919
      %v922 = vmul.f32 %v552, %v920
      %v923 = vmul.f32 %v555, %v920
      %v924 = vpack.c.bf16 %v923, %v922
      %926 = vrot.lane.b32.xlu0 %v924, 64
      %v927 = vpop.permute.xlu0 %926
      %v929 = vsel %vm621, %v917, 0
      %v932 = vand.u32 %v927, %v746
      %934 = vmatprep.subr.bf16.mxu0 0
      %935 = vmatpush1.bf16.msra.mxu0 %v932
      %936 = vmatprep.subr.bf16.mxu0 0
      %937 = vmatpush1.bf16.msra.mxu0 0
      %938 = vmatprep.subr.bf16.mxu0 0
      %939 = vmatpush1.bf16.msra.mxu0 0
      %940 = vmatprep.subr.bf16.mxu0 0
      %941 = vmatpush1.bf16.msra.mxu0 0
      %942 = vmatprep.subr.bf16.mxu0 0
      %943 = vmatpush1.bf16.msra.mxu0 0
      %944 = vmatprep.subr.bf16.mxu0 0
      %945 = vmatpush1.bf16.msra.mxu0 0
      %946 = vmatprep.subr.bf16.mxu0 0
      %947 = vmatpush1.bf16.msra.mxu0 0
      %948 = vmatprep.subr.bf16.mxu0 0
      %949 = vmatpush1.bf16.msra.mxu0 0
      %950 = vmatprep.subr.bf16.mxu0 0
      %951 = vmatpush1.bf16.msra.mxu0 0
      %952 = vmatprep.subr.bf16.mxu0 0
      %953 = vmatpush1.bf16.msra.mxu0 0
      %954 = vmatprep.subr.bf16.mxu0 0
      %955 = vmatpush1.bf16.msra.mxu0 0
      %956 = vmatprep.subr.bf16.mxu0 0
      %957 = vmatpush1.bf16.msra.mxu0 0
      %958 = vmatprep.subr.bf16.mxu0 0
      %959 = vmatpush1.bf16.msra.mxu0 0
      %960 = vmatprep.subr.bf16.mxu0 0
      %961 = vmatpush1.bf16.msra.mxu0 0
      %962 = vmatprep.subr.bf16.mxu0 0
      %963 = vmatpush1.bf16.msra.mxu0 0
      %964 = vmatprep.subr.bf16.mxu0 0
      %965 = vmatpush1.bf16.msra.mxu0 0
      %966 = vmatprep.mubr.bf16.mxu0 0
      %967 = vmatmul.mubr.bf16.gmra.mrb[0].mxu0 %v929
      %v968 = vpop.f32.mrb[0].mxu0
      %v969 = vadd.f32 0.0, %v968
      %v970 = vpop.f32.mrb[0].mxu0
      %v971 = vpop.f32.mrb[0].mxu0
      %v972 = vadd.f32 0.0, %v971
      %v973 = vpop.f32.mrb[0].mxu0
      %974 = vdwg.mxu0
      %v975 = vadd.f32 %v835, %v969
      %v976 = vadd.f32 %v838, %v972
      %vm977 = vcmp.ge.s32.totalorder %v560, 24
      %vm978 = vcmp.lt.s32.totalorder %v560, 32
      %vm979 = vmand %vm977, %vm978
      %v980 = vsel %vm979, 1, 0
      %v981 = vcvt.s32.f32 %v980
      %v982 = vmul.f32 %v552, %v981
      %v983 = vmul.f32 %v555, %v981
      %v984 = vpack.c.bf16 %v983, %v982
      %v986 = vsel %vm446, %v984, 0
      %988 = vmatprep.subr.bf16.mxu0 0
      %989 = vmatpush1.bf16.xpose.msra.mxu0 %v576
      %990 = vmatprep.subr.bf16.mxu0 0
      %991 = vmatpush1.bf16.xpose.msra.mxu0 0
      %992 = vmatprep.subr.bf16.mxu0 0
      %993 = vmatpush1.bf16.xpose.msra.mxu0 0
      %994 = vmatprep.subr.bf16.mxu0 0
      %995 = vmatpush1.bf16.xpose.msra.mxu0 0
      %996 = vmatprep.subr.bf16.mxu0 0
      %997 = vmatpush1.bf16.xpose.msra.mxu0 0
      %998 = vmatprep.subr.bf16.mxu0 0
      %999 = vmatpush1.bf16.xpose.msra.mxu0 0
      %1000 = vmatprep.subr.bf16.mxu0 0
      %1001 = vmatpush1.bf16.xpose.msra.mxu0 0
      %1002 = vmatprep.subr.bf16.mxu0 0
      %1003 = vmatpush1.bf16.xpose.msra.mxu0 0
      %1004 = vmatprep.subr.bf16.mxu0 0
      %1005 = vmatpush1.bf16.xpose.msra.mxu0 0
      %1006 = vmatprep.subr.bf16.mxu0 0
      %1007 = vmatpush1.bf16.xpose.msra.mxu0 0
      %1008 = vmatprep.subr.bf16.mxu0 0
      %1009 = vmatpush1.bf16.xpose.msra.mxu0 0
      %1010 = vmatprep.subr.bf16.mxu0 0
      %1011 = vmatpush1.bf16.xpose.msra.mxu0 0
      %1012 = vmatprep.subr.bf16.mxu0 0
      %1013 = vmatpush1.bf16.xpose.msra.mxu0 0
      %1014 = vmatprep.subr.bf16.mxu0 0
      %1015 = vmatpush1.bf16.xpose.msra.mxu0 0
      %1016 = vmatprep.subr.bf16.mxu0 0
      %1017 = vmatpush1.bf16.xpose.msra.mxu0 0
      %1018 = vmatprep.subr.bf16.mxu0 0
      %1019 = vmatpush1.bf16.xpose.msra.mxu0 0
      %1020 = vmatprep.mubr.bf16.mxu0 0
      %1021 = vmatmul.mubr.bf16.gmra.mrb[0].mxu0 %v986
      %v1022 = vpop.f32.mrb[0].mxu0
      %v1023 = vadd.f32 0.0, %v1022
      %v1024 = vpop.f32.mrb[0].mxu0
      %v1025 = vpop.f32.mrb[0].mxu0
      %v1026 = vadd.f32 0.0, %v1025
      %v1027 = vpop.f32.mrb[0].mxu0
      %1028 = vdwg.mxu0
      %v1029 = vmul.f32 %v1023, 0.35355338
      %v1030 = vmul.f32 %v1026, 0.35355338
      %v1031 = vsel %vm621, %v1029, -inf
      %1032 = vmax.xlane.f32.xlu0 %v1031
      %v1033 = vpop.xlane.xlu0 %1032
      %v1034 = vsel %vm625, %v1030, -inf
      %1035 = vmax.xlane.f32.xlu0 %v1034
      %v1036 = vpop.xlane.xlu0 %1035
      %v1037 = vsub.f32 %v1029, %v1033
      %v1038 = vsub.f32 %v1030, %v1036
      %v1039 = vmul.f32 %v1037, 1.442695
      %v1040 = vpow.pop %v1039
      %v1041 = vmul.f32 %v1038, 1.442695
      %v1042 = vpow.pop %v1041
      %v1043 = vsel %vm621, %v1040, 0.0
      %1044 = vadd.xlane.f32.xlu0 %v1043
      %v1045 = vpop.xlane.xlu0 %1044
      %v1046 = vsel %vm625, %v1042, 0.0
      %1047 = vadd.xlane.f32.xlu0 %v1046
      %v1048 = vpop.xlane.xlu0 %1047
      %v1049 = vrcp.pop %v1045
      %v1050 = vrcp.pop %v1048
      %v1051 = vmul.f32 %v1040, %v1049
      %v1052 = vmul.f32 %v1042, %v1050
      %v1053 = vpack.c.bf16 %v1052, %v1051
      %1055 = vrot.lane.b32.xlu0 %v981, 64
      %v1056 = vpop.permute.xlu0 %1055
      %v1058 = vmul.f32 %v552, %v1056
      %v1059 = vmul.f32 %v555, %v1056
      %v1060 = vpack.c.bf16 %v1059, %v1058
      %1062 = vrot.lane.b32.xlu0 %v1060, 64
      %v1063 = vpop.permute.xlu0 %1062
      %v1065 = vsel %vm621, %v1053, 0
      %v1068 = vand.u32 %v1063, %v746
      %1070 = vmatprep.subr.bf16.mxu0 0
      %1071 = vmatpush1.bf16.msra.mxu0 %v1068
      %1072 = vmatprep.subr.bf16.mxu0 0
      %1073 = vmatpush1.bf16.msra.mxu0 0
      %1074 = vmatprep.subr.bf16.mxu0 0
      %1075 = vmatpush1.bf16.msra.mxu0 0
      %1076 = vmatprep.subr.bf16.mxu0 0
      %1077 = vmatpush1.bf16.msra.mxu0 0
      %1078 = vmatprep.subr.bf16.mxu0 0
      %1079 = vmatpush1.bf16.msra.mxu0 0
      %1080 = vmatprep.subr.bf16.mxu0 0
      %1081 = vmatpush1.bf16.msra.mxu0 0
      %1082 = vmatprep.subr.bf16.mxu0 0
      %1083 = vmatpush1.bf16.msra.mxu0 0
      %1084 = vmatprep.subr.bf16.mxu0 0
      %1085 = vmatpush1.bf16.msra.mxu0 0
      %1086 = vmatprep.subr.bf16.mxu0 0
      %1087 = vmatpush1.bf16.msra.mxu0 0
      %1088 = vmatprep.subr.bf16.mxu0 0
      %1089 = vmatpush1.bf16.msra.mxu0 0
      %1090 = vmatprep.subr.bf16.mxu0 0
      %1091 = vmatpush1.bf16.msra.mxu0 0
      %1092 = vmatprep.subr.bf16.mxu0 0
      %1093 = vmatpush1.bf16.msra.mxu0 0
      %1094 = vmatprep.subr.bf16.mxu0 0
      %1095 = vmatpush1.bf16.msra.mxu0 0
      %1096 = vmatprep.subr.bf16.mxu0 0
      %1097 = vmatpush1.bf16.msra.mxu0 0
      %1098 = vmatprep.subr.bf16.mxu0 0
      %1099 = vmatpush1.bf16.msra.mxu0 0
      %1100 = vmatprep.subr.bf16.mxu0 0
      %1101 = vmatpush1.bf16.msra.mxu0 0
      %1102 = vmatprep.mubr.bf16.mxu0 0
      %1103 = vmatmul.mubr.bf16.gmra.mrb[0].mxu0 %v1065
      %v1104 = vpop.f32.mrb[0].mxu0
      %v1105 = vadd.f32 0.0, %v1104
      %v1106 = vpop.f32.mrb[0].mxu0
      %v1107 = vpop.f32.mrb[0].mxu0
      %v1108 = vadd.f32 0.0, %v1107
      %v1109 = vpop.f32.mrb[0].mxu0
      %1110 = vdwg.mxu0
      %v1111 = vadd.f32 %v975, %v1105
      %v1112 = vadd.f32 %v976, %v1108
      %v1113 = vpack.c.bf16 %v1112, %v1111
      %s1114 = smul.addr %s443, 4
      %s1115 = scalar_lea.vmem %s5, %s1114
      %v1116 = vld [vmem:[%s1115] sm:$0xf]
      %v1117 = vld [vmem:[%s1115 + $0x4] sm:$0xf]
      %v1118 = vld [vmem:[%s1115 + $0x8] sm:$0xf]
      %v1119 = vld [vmem:[%s1115 + $0xc] sm:$0xf]
      %s1120 = scalar_lea.vmem %s6, %s28
      %v1121 = vld [vmem:[%s1120] sm:$0x1]
      %v1123 = vlaneseq
      %v1124 = vshrl.u32 %v1123, 7
      %v1125 = vsub.s32 0, %v1124
      %v1126 = vrot.slane %v1121, %v1125
      %v1132 = vunpack.c.l.b16 %v1116
      %v1133 = vunpack.c.l.b16 %v1117
      %v1134 = vunpack.c.l.b16 %v1118
      %v1135 = vunpack.c.l.b16 %v1119
      %v1136 = vpack.c.b16 %v1133, %v1132
      %v1137 = vpack.c.b16 %v1135, %v1134
      %v1141 = vsel %vm446, %v1113, 0
      %1143 = vmatprep.subr.bf16.mxu0 0
      %1144 = vmatpush1.bf16.msra.mxu0 %v1136
      %1145 = vmatprep.subr.bf16.mxu0 0
      %1146 = vmatpush1.bf16.msra.mxu0 %v1137
      %1147 = vmatprep.subr.bf16.mxu0 0
      %1148 = vmatpush1.bf16.msra.mxu0 0
      %1149 = vmatprep.subr.bf16.mxu0 0
      %1150 = vmatpush1.bf16.msra.mxu0 0
      %1151 = vmatprep.subr.bf16.mxu0 0
      %1152 = vmatpush1.bf16.msra.mxu0 0
      %1153 = vmatprep.subr.bf16.mxu0 0
      %1154 = vmatpush1.bf16.msra.mxu0 0
      %1155 = vmatprep.subr.bf16.mxu0 0
      %1156 = vmatpush1.bf16.msra.mxu0 0
      %1157 = vmatprep.subr.bf16.mxu0 0
      %1158 = vmatpush1.bf16.msra.mxu0 0
      %1159 = vmatprep.subr.bf16.mxu0 0
      %1160 = vmatpush1.bf16.msra.mxu0 0
      %1161 = vmatprep.subr.bf16.mxu0 0
      %1162 = vmatpush1.bf16.msra.mxu0 0
      %1163 = vmatprep.subr.bf16.mxu0 0
      %1164 = vmatpush1.bf16.msra.mxu0 0
      %1165 = vmatprep.subr.bf16.mxu0 0
      %1166 = vmatpush1.bf16.msra.mxu0 0
      %1167 = vmatprep.subr.bf16.mxu0 0
      %1168 = vmatpush1.bf16.msra.mxu0 0
      %1169 = vmatprep.subr.bf16.mxu0 0
      %1170 = vmatpush1.bf16.msra.mxu0 0
      %1171 = vmatprep.subr.bf16.mxu0 0
      %1172 = vmatpush1.bf16.msra.mxu0 0
      %1173 = vmatprep.subr.bf16.mxu0 0
      %1174 = vmatpush1.bf16.msra.mxu0 0
      %1175 = vmatprep.mubr.bf16.mxu0 0
      %1176 = vmatmul.mubr.bf16.gmra.mrb[0].mxu0 %v1141
      %v1177 = vpop.f32.mrb[0].mxu0
      %v1178 = vadd.f32 %v1126, %v1177
      %v1179 = vpop.f32.mrb[0].mxu0
      %v1180 = vpop.f32.mrb[0].mxu0
      %v1181 = vadd.f32 %v1126, %v1180
      %v1182 = vpop.f32.mrb[0].mxu0
      %1183 = vdwg.mxu0
      %v1184 = vadd.f32 %v441, %v1178
      %v1185 = vadd.f32 %v442, %v1181
      %v1186 = vsel %vm446, %v1184, 0.0
      %1187 = vadd.xlane.f32.xlu0 %v1186
      %v1188 = vpop.xlane.xlu0 %1187
      %v1189 = vsel %vm450, %v1185, 0.0
      %1190 = vadd.xlane.f32.xlu0 %v1189
      %v1191 = vpop.xlane.xlu0 %1190
      %v1192 = vmul.f32 %v1188, %v454
      %v1193 = vmul.f32 %v1191, %v454
      %v1194 = vsub.f32 %v1184, %v1192
      %v1195 = vsub.f32 %v1185, %v1193
      %v1196 = vmul.f32 %v1194, %v1194
      %v1197 = vmul.f32 %v1195, %v1195
      %v1198 = vsel %vm446, %v1196, 0.0
      %1199 = vadd.xlane.f32.xlu0 %v1198
      %v1200 = vpop.xlane.xlu0 %1199
      %v1201 = vsel %vm450, %v1197, 0.0
      %1202 = vadd.xlane.f32.xlu0 %v1201
      %v1203 = vpop.xlane.xlu0 %1202
      %v1204 = vmul.f32 %v1200, %v454
      %v1205 = vmul.f32 %v1203, %v454
      %v1206 = vadd.f32 %v1204, 1e-05
      %v1207 = vadd.f32 %v1205, 1e-05
      %v1208 = vrsqrt.pop %v1206
      %v1209 = vrsqrt.pop %v1207
      %v1210 = vmul.f32 %v1194, %v1208
      %v1211 = vmul.f32 %v1195, %v1209
      %v1212 = vlaneseq
      %v1213 = vshrl.u32 %v1212, 7
      %v1214 = vsub.s32 2, %v1213
      %v1215 = vrot.slane %v445, %v1214
      %v1216 = vmul.f32 %v1210, %v1215
      %v1217 = vmul.f32 %v1211, %v1215
      %v1218 = vlaneseq
      %v1219 = vshrl.u32 %v1218, 7
      %v1220 = vsub.s32 3, %v1219
      %v1221 = vrot.slane %v445, %v1220
      %v1222 = vadd.f32 %v1216, %v1221
      %v1223 = vadd.f32 %v1217, %v1221
      %v1224 = vpack.c.bf16 %v1223, %v1222
      %s1225 = smul.addr %s443, 4
      %s1226 = scalar_lea.vmem %s7, %s1225
      %v1227 = vld [vmem:[%s1226] sm:$0xf]
      %v1228 = vld [vmem:[%s1226 + $0x4] sm:$0xf]
      %v1229 = vld [vmem:[%s1226 + $0x8] sm:$0xf]
      %v1230 = vld [vmem:[%s1226 + $0xc] sm:$0xf]
      %s1231 = scalar_lea.vmem %s8, %s28
      %v1232 = vld [vmem:[%s1231] sm:$0x1]
      %v1234 = vlaneseq
      %v1235 = vshrl.u32 %v1234, 7
      %v1236 = vsub.s32 0, %v1235
      %v1237 = vrot.slane %v1232, %v1236
      %v1243 = vunpack.c.l.b16 %v1227
      %v1244 = vunpack.c.l.b16 %v1228
      %v1245 = vunpack.c.l.b16 %v1229
      %v1246 = vunpack.c.l.b16 %v1230
      %v1247 = vpack.c.b16 %v1244, %v1243
      %v1248 = vpack.c.b16 %v1246, %v1245
      %v1252 = vsel %vm446, %v1224, 0
      %1254 = vmatprep.subr.bf16.mxu0 0
      %1255 = vmatpush1.bf16.msra.mxu0 %v1247
      %1256 = vmatprep.subr.bf16.mxu0 0
      %1257 = vmatpush1.bf16.msra.mxu0 %v1248
      %1258 = vmatprep.subr.bf16.mxu0 0
      %1259 = vmatpush1.bf16.msra.mxu0 0
      %1260 = vmatprep.subr.bf16.mxu0 0
      %1261 = vmatpush1.bf16.msra.mxu0 0
      %1262 = vmatprep.subr.bf16.mxu0 0
      %1263 = vmatpush1.bf16.msra.mxu0 0
      %1264 = vmatprep.subr.bf16.mxu0 0
      %1265 = vmatpush1.bf16.msra.mxu0 0
      %1266 = vmatprep.subr.bf16.mxu0 0
      %1267 = vmatpush1.bf16.msra.mxu0 0
      %1268 = vmatprep.subr.bf16.mxu0 0
      %1269 = vmatpush1.bf16.msra.mxu0 0
      %1270 = vmatprep.subr.bf16.mxu0 0
      %1271 = vmatpush1.bf16.msra.mxu0 0
      %1272 = vmatprep.subr.bf16.mxu0 0
      %1273 = vmatpush1.bf16.msra.mxu0 0
      %1274 = vmatprep.subr.bf16.mxu0 0
      %1275 = vmatpush1.bf16.msra.mxu0 0
      %1276 = vmatprep.subr.bf16.mxu0 0
      %1277 = vmatpush1.bf16.msra.mxu0 0
      %1278 = vmatprep.subr.bf16.mxu0 0
      %1279 = vmatpush1.bf16.msra.mxu0 0
      %1280 = vmatprep.subr.bf16.mxu0 0
      %1281 = vmatpush1.bf16.msra.mxu0 0
      %1282 = vmatprep.subr.bf16.mxu0 0
      %1283 = vmatpush1.bf16.msra.mxu0 0
      %1284 = vmatprep.subr.bf16.mxu0 0
      %1285 = vmatpush1.bf16.msra.mxu0 0
      %1286 = vmatprep.mubr.bf16.mxu0 0
      %1287 = vmatmul.mubr.bf16.gmra.mrb[0].mxu0 %v1252
      %v1288 = vpop.f32.mrb[0].mxu0
      %v1289 = vadd.f32 %v1237, %v1288
      %v1290 = vpop.f32.mrb[0].mxu0
      %v1291 = vpop.f32.mrb[0].mxu0
      %v1292 = vadd.f32 %v1237, %v1291
      %v1293 = vpop.f32.mrb[0].mxu0
      %1294 = vdwg.mxu0
      %v1295 = vmul.f32 %v1289, 0.5
      %v1296 = vmul.f32 %v1292, 0.5
      %v1297 = vmul.f32 %v1289, 0.70710677
      %v1298 = vmul.f32 %v1292, 0.70710677
      %v1299 = vand.u32 2147483647, %v1297
      %v1300 = vand.u32 2147483647, %v1298
      %v1301 = vmul.f32 %v1299, 0.3275911
      %v1302 = vmul.f32 %v1300, 0.3275911
      %v1303 = vadd.f32 %v1301, 1.0
      %v1304 = vadd.f32 %v1302, 1.0
      %v1305 = vrcp.pop %v1303
      %v1306 = vmul.f32 1.0, %v1305
      %v1307 = vrcp.pop %v1304
      %v1308 = vmul.f32 1.0, %v1307
      %v1309 = vmul.f32 %v1306, 1.0614054
      %v1310 = vmul.f32 %v1308, 1.0614054
      %v1311 = vadd.f32 %v1309, -1.4531521
      %v1312 = vadd.f32 %v1310, -1.4531521
      %v1313 = vmul.f32 %v1311, %v1306
      %v1314 = vmul.f32 %v1312, %v1308
      %v1315 = vadd.f32 %v1313, 1.4214138
      %v1316 = vadd.f32 %v1314, 1.4214138
      %v1317 = vmul.f32 %v1315, %v1306
      %v1318 = vmul.f32 %v1316, %v1308
      %v1319 = vadd.f32 %v1317, -0.28449672
      %v1320 = vadd.f32 %v1318, -0.28449672
      %v1321 = vmul.f32 %v1319, %v1306
      %v1322 = vmul.f32 %v1320, %v1308
      %v1323 = vadd.f32 %v1321, 0.2548296
      %v1324 = vadd.f32 %v1322, 0.2548296
      %v1325 = vmul.f32 %v1323, %v1306
      %v1326 = vmul.f32 %v1324, %v1308
      %v1327 = vsub.f32 0.0, %v1299
      %v1328 = vsub.f32 0.0, %v1300
      %v1329 = vmul.f32 %v1327, %v1299
      %v1330 = vmul.f32 %v1328, %v1300
      %v1331 = vmul.f32 %v1329, 1.442695
      %v1332 = vpow.pop %v1331
      %v1333 = vmul.f32 %v1330, 1.442695
      %v1334 = vpow.pop %v1333
      %v1335 = vmul.f32 %v1325, %v1332
      %v1336 = vmul.f32 %v1326, %v1334
      %v1337 = vsub.f32 1.0, %v1335
      %v1338 = vsub.f32 1.0, %v1336
      %vm1339 = vcmp.ge.f32.partialorder %v1297, 0.0
      %vm1340 = vcmp.ge.f32.partialorder %v1298, 0.0
      %v1341 = vsub.f32 0.0, %v1337
      %v1342 = vsub.f32 0.0, %v1338
      %v1343 = vsel %vm1339, %v1337, %v1341
      %v1344 = vsel %vm1340, %v1338, %v1342
      %v1345 = vadd.f32 %v1343, 1.0
      %v1346 = vadd.f32 %v1344, 1.0
      %v1347 = vmul.f32 %v1295, %v1345
      %v1348 = vmul.f32 %v1296, %v1346
      %v1349 = vpack.c.bf16 %v1348, %v1347
      %s1350 = smul.u32 %s28, 16
      %s1351 = smul.addr %s1350, 4
      %s1352 = scalar_lea.vmem %s9, %s1351
      %v1353 = vld [vmem:[%s1352] sm:$0xf]
      %v1354 = vld [vmem:[%s1352 + $0x4] sm:$0xf]
      %v1355 = vld [vmem:[%s1352 + $0x8] sm:$0xf]
      %v1356 = vld [vmem:[%s1352 + $0xc] sm:$0xf]
      %v1357 = vld [vmem:[%s1352 + $0x10] sm:$0xf]
      %v1358 = vld [vmem:[%s1352 + $0x14] sm:$0xf]
      %v1359 = vld [vmem:[%s1352 + $0x18] sm:$0xf]
      %v1360 = vld [vmem:[%s1352 + $0x1c] sm:$0xf]
      %v1361 = vld [vmem:[%s1352 + $0x20] sm:$0xf]
      %v1362 = vld [vmem:[%s1352 + $0x24] sm:$0xf]
      %v1363 = vld [vmem:[%s1352 + $0x28] sm:$0xf]
      %v1364 = vld [vmem:[%s1352 + $0x2c] sm:$0xf]
      %v1365 = vld [vmem:[%s1352 + $0x30] sm:$0xf]
      %v1366 = vld [vmem:[%s1352 + $0x34] sm:$0xf]
      %v1367 = vld [vmem:[%s1352 + $0x38] sm:$0xf]
      %v1368 = vld [vmem:[%s1352 + $0x3c] sm:$0xf]
      %s1369 = scalar_lea.vmem %s10, %s28
      %v1370 = vld [vmem:[%s1369] sm:$0x1]
      %v1372 = vlaneseq
      %v1373 = vshrl.u32 %v1372, 7
      %v1374 = vsub.s32 0, %v1373
      %v1375 = vrot.slane %v1370, %v1374
      %v1393 = vunpack.c.l.b16 %v1353
      %v1394 = vunpack.c.l.b16 %v1354
      %v1395 = vunpack.c.l.b16 %v1355
      %v1396 = vunpack.c.l.b16 %v1356
      %v1397 = vunpack.c.l.b16 %v1357
      %v1398 = vunpack.c.l.b16 %v1358
      %v1399 = vunpack.c.l.b16 %v1359
      %v1400 = vunpack.c.l.b16 %v1360
      %v1401 = vunpack.c.l.b16 %v1361
      %v1402 = vunpack.c.l.b16 %v1362
      %v1403 = vunpack.c.l.b16 %v1363
      %v1404 = vunpack.c.l.b16 %v1364
      %v1405 = vunpack.c.l.b16 %v1365
      %v1406 = vunpack.c.l.b16 %v1366
      %v1407 = vunpack.c.l.b16 %v1367
      %v1408 = vunpack.c.l.b16 %v1368
      %v1409 = vpack.c.b16 %v1394, %v1393
      %v1410 = vpack.c.b16 %v1396, %v1395
      %v1411 = vpack.c.b16 %v1398, %v1397
      %v1412 = vpack.c.b16 %v1400, %v1399
      %v1413 = vpack.c.b16 %v1402, %v1401
      %v1414 = vpack.c.b16 %v1404, %v1403
      %v1415 = vpack.c.b16 %v1406, %v1405
      %v1416 = vpack.c.b16 %v1408, %v1407
      %1425 = vmatprep.subr.bf16.mxu0 0
      %1426 = vmatpush1.bf16.msra.mxu0 %v1409
      %1427 = vmatprep.subr.bf16.mxu0 0
      %1428 = vmatpush1.bf16.msra.mxu0 %v1410
      %1429 = vmatprep.subr.bf16.mxu0 0
      %1430 = vmatpush1.bf16.msra.mxu0 %v1411
      %1431 = vmatprep.subr.bf16.mxu0 0
      %1432 = vmatpush1.bf16.msra.mxu0 %v1412
      %1433 = vmatprep.subr.bf16.mxu0 0
      %1434 = vmatpush1.bf16.msra.mxu0 %v1413
      %1435 = vmatprep.subr.bf16.mxu0 0
      %1436 = vmatpush1.bf16.msra.mxu0 %v1414
      %1437 = vmatprep.subr.bf16.mxu0 0
      %1438 = vmatpush1.bf16.msra.mxu0 %v1415
      %1439 = vmatprep.subr.bf16.mxu0 0
      %1440 = vmatpush1.bf16.msra.mxu0 %v1416
      %1441 = vmatprep.subr.bf16.mxu0 0
      %1442 = vmatpush1.bf16.msra.mxu0 0
      %1443 = vmatprep.subr.bf16.mxu0 0
      %1444 = vmatpush1.bf16.msra.mxu0 0
      %1445 = vmatprep.subr.bf16.mxu0 0
      %1446 = vmatpush1.bf16.msra.mxu0 0
      %1447 = vmatprep.subr.bf16.mxu0 0
      %1448 = vmatpush1.bf16.msra.mxu0 0
      %1449 = vmatprep.subr.bf16.mxu0 0
      %1450 = vmatpush1.bf16.msra.mxu0 0
      %1451 = vmatprep.subr.bf16.mxu0 0
      %1452 = vmatpush1.bf16.msra.mxu0 0
      %1453 = vmatprep.subr.bf16.mxu0 0
      %1454 = vmatpush1.bf16.msra.mxu0 0
      %1455 = vmatprep.subr.bf16.mxu0 0
      %1456 = vmatpush1.bf16.msra.mxu0 0
      %1457 = vmatprep.mubr.bf16.mxu0 0
      %1458 = vmatmul.mubr.bf16.gmra.mrb[0].mxu0 %v1349
      %v1459 = vpop.f32.mrb[0].mxu0
      %v1460 = vadd.f32 %v1375, %v1459
      %v1461 = vpop.f32.mrb[0].mxu0
      %v1462 = vpop.f32.mrb[0].mxu0
      %v1463 = vadd.f32 %v1375, %v1462
      %v1464 = vpop.f32.mrb[0].mxu0
      %1465 = vdwg.mxu0
      %v1466 = vadd.f32 %v1184, %v1460
      %v1467 = vadd.f32 %v1185, %v1463
      %p1468 = scmp.lt.s32.totalorder %s28, 0
      // Predicated region
      $region73: #{forward.8} parent=67 // pred_check
        %p1469 = pneg %p1468
      $region74: #{forward.8} parent=67 // pred_check_branch
        %1471 = sbr.rel (%p1469) target = $region76
      $region75: #{forward.8} parent=67 // pred_region
        %1472 = vst.msk [vmem:[#allocation2] sm:$0xff] %vm446, %v1466
        %1473 = vst.msk [vmem:[#allocation2 + $0x8] sm:$0x1] %vm450, %v1467
      $region76: #{forward.8} parent=67 // pred_fallthru
        _
      // Predicated region
      $region77: #{forward.8} parent=67 // pred_check
        %p1474 = pneg %p427
      $region78: #{forward.8} parent=67 // pred_check_branch
        %1476 = sbr.rel (%p1474) target = $region80
      $region79: #{forward.8} parent=67 // pred_region
        %v1477 = vld [vmem:[%s11] sm:$0x3]
        %v1478 = vsel %vm446, %v1466, 0.0
        %1479 = vadd.xlane.f32.xlu0 %v1478
        %v1480 = vpop.xlane.xlu0 %1479
        %v1481 = vsel %vm450, %v1467, 0.0
        %1482 = vadd.xlane.f32.xlu0 %v1481
        %v1483 = vpop.xlane.xlu0 %1482
        %v1484 = vmul.f32 %v1480, %v454
        %v1485 = vmul.f32 %v1483, %v454
        %v1486 = vsub.f32 %v1466, %v1484
        %v1487 = vsub.f32 %v1467, %v1485
        %v1488 = vmul.f32 %v1486, %v1486
        %v1489 = vmul.f32 %v1487, %v1487
        %v1490 = vsel %vm446, %v1488, 0.0
        %1491 = vadd.xlane.f32.xlu0 %v1490
        %v1492 = vpop.xlane.xlu0 %1491
        %v1493 = vsel %vm450, %v1489, 0.0
        %1494 = vadd.xlane.f32.xlu0 %v1493
        %v1495 = vpop.xlane.xlu0 %1494
        %v1496 = vmul.f32 %v1492, %v454
        %v1497 = vmul.f32 %v1495, %v454
        %v1498 = vadd.f32 %v1496, 1e-05
        %v1499 = vadd.f32 %v1497, 1e-05
        %v1500 = vrsqrt.pop %v1498
        %v1501 = vrsqrt.pop %v1499
        %v1502 = vmul.f32 %v1486, %v1500
        %v1503 = vmul.f32 %v1487, %v1501
        %v1504 = vlaneseq
        %v1505 = vshrl.u32 %v1504, 7
        %v1506 = vsub.s32 0, %v1505
        %v1507 = vrot.slane %v1477, %v1506
        %v1508 = vmul.f32 %v1502, %v1507
        %v1509 = vmul.f32 %v1503, %v1507
        %v1510 = vlaneseq
        %v1511 = vshrl.u32 %v1510, 7
        %v1512 = vsub.s32 1, %v1511
        %v1513 = vrot.slane %v1477, %v1512
        %v1514 = vadd.f32 %v1508, %v1513
        %v1515 = vadd.f32 %v1509, %v1513
        %v1516 = vpack.c.bf16 %v1515, %v1514
        %v1518 = vunpack.c.l.b16 %v1516
        %v1519 = vunpack.c.h.b16 %v1516
        %v1520 = vpack.c.b16 %v1518, %v1518
        %v1521 = vpack.c.b16 %v1519, %v1519
        %vm1524 = vcmask 257024
        %1525 = vst.msk [vmem:[%s425] sm:$0xf] %vm1524, %v1520
        %vm1526 = vcmask 253952
        %vm1527 = vsmask.f32 256
        %vm1528 = vmand %vm1526, %vm1527
        %v1529 = vld [vmem:[%s425 + $0x4] sm:$0x1]
        %v1530 = vsel %vm1528, %v1521, %v1529
        %1531 = vst [vmem:[%s425 + $0x4] sm:$0x1] %v1530
      $region80: #{forward.8} parent=67 // pred_fallthru
        _
      %p1532 = scmp.lt.s32.totalorder %s27, 1
      %s1533 = scalar_select %p1532, %s27, 1
      %s1534 = smul.addr %s1533, 2
      %s1535 = smul.addr %s1534, 4
      %s1536 = scalar_lea.vmem %s12, %s1535
      // Predicated region
      $region81: #{forward.8} parent=67 // pred_check
        %p1537 = pneg %p310
      $region82: #{forward.8} parent=67 // pred_check_branch
        %1539 = sbr.rel (%p1537) target = $region84
      $region83: #{forward.8} parent=67 // pred_region
        _
      $region84: #{forward.8} parent=67 // pred_fallthru
        _
    $region68: #{forward.8} parent=5 // pred_fallthru
      _
    %p1540 = scmp.le.s32.totalorder 2, %s18
    // Predicated region
    $region85: #{forward.8} parent=5 // pred_check
      %p1541 = pneg %p1540
    $region86: #{forward.8} parent=5 // pred_check_branch
      %1543 = sbr.rel (%p1541) target = $region88
    $region87: #{forward.8} parent=5 // pred_region
      %s1544 = ssub.s32 %s18, 2
      // Predicated region
      $region89: #{forward.8} parent=87 // pred_check
        %p1545 = pneg %p316
      $region90: #{forward.8} parent=87 // pred_check_branch
        %1547 = sbr.rel (%p1545) target = $region92
      $region91: #{forward.8} parent=87 // pred_region
        %p1548 = scmp.lt.s32.totalorder %s29, 1
        %s1549 = scalar_select %p1548, %s29, 1
        %s1550 = smul.addr %s1549, 2
        %s1551 = smul.addr %s1550, 4
        %s1552 = scalar_lea.vmem %s12, %s1551
      $region92: #{forward.8} parent=87 // pred_fallthru
        _
    $region88: #{forward.8} parent=5 // pred_fallthru
      _
  $region6: #{forward.8} parent=0 // loop_footer
    %s22 = sadd.s32 1, %s18
  $region7: #{forward.8} parent=0 // loop_footer_branch
    %17 = sbr.rel target = $region3
  $region8: #{forward.8} parent=0 // loop_exit
    _

// kernel: forward.9
$region0: #{forward.9}
  #allocation0 [shape = 'u32[]', space=smem, size = 0x4, offset = 0x4, fixed_abs, tag = 'smem constant byte address 0x4 - core index']
  #allocation1 [shape = 'u32[144,128]{1,0:T(1,128)}', space=vmem, size = 0x12000, scoped, tag = 'internal scratch']
  #allocation2 [shape = 'f32[1,1]{1,0:T(1,128)}', space=vmem, size = 0x200, scoped, tag = 'scratch operand']
  #allocation3 [shape = 'f32[1,1]{1,0:T(1,128)}', space=vmem, size = 0x200, scoped, tag = 'scratch operand']
  %s0 = inlined_call_operand.vmem [shape: bf16[2,9,32], index: 0, kind: input, shape index: {}]
  %s1 = inlined_call_operand.vmem [shape: bf16[32,256], index: 1, kind: input, shape index: {}]
  %s2 = inlined_call_operand.vmem [shape: f32[1,256], index: 2, kind: input, shape index: {}]
  %s3 = inlined_call_operand.vmem [shape: f32[2,8,256], index: 3, kind: input, shape index: {}]
  %s4 = inlined_call_operand.vmem [shape: f32[2,8,1], index: 4, kind: input, shape index: {}]
  %s5 = inlined_call_operand.hbm [shape: f32[2,8,256], index: 5, kind: output, shape index: {0}]
  %s6 = inlined_call_operand.hbm [shape: f32[1,1], index: 6, kind: output, shape index: {1}]
  %7 = xla_tuple %s5, %s6
  %s8 = sld [smem:[#allocation0]]
  $region69: #{forward.9} parent=0
    _
  %s10 = ssub.s32 1, %s8
  %s11 = scalar_select 0, %s10, %s8
  $region1: #{forward.9} parent=0
    #allocation4 [shape = 'u8[16384]{0}', space=vmem, size = 0x4000, scoped, tag = 'output window, operand 0']
    #allocation5 [shape = 's32[2]{0}', space=sflag, size = 0x8, scoped, tag = 'scoped memory for forward.9']
    #allocation6 [shape = 'u8[512]{0}', space=vmem, size = 0x400, scoped, tag = 'output window, operand 1, single buffered']
    #allocation7 [shape = 's32[1]{0}', space=sflag, size = 0x4, scoped, tag = 'scoped memory for forward.9']
    %12 = vsyncpa [#allocation5], 0
    %s13 = scalar_lea.sflag [#allocation5], 1
    %14 = vsyncpa %s13, 0
    %15 = vsyncpa [#allocation7], 0
    loop: start=0, step=1, limit=4
    $region2: #{forward.9} parent=1 // loop_pre_header
      _
    $region3: #{forward.9} parent=1 // loop_header
      %s17 = sphi 0, %s21
      %p18 = scmp.ge.s32.totalorder %s17, 4
      %s27 = sphi 0, %s29
      %s30 = sphi 0, %s27
      %s31 = sphi 0, %s30
      %s47 = sphi 0, %s31
      %s51 = sphi 0, %s51
      %s53 = sphi 0, %s51
      %s54 = sphi 0, %s53
      %s68 = sphi 0, %s54
      %s72 = sphi 0, %s72
      %s74 = sphi 0, %s72
      %s75 = sphi 0, %s74
      %s89 = sphi 0, %s75
      %s95 = sphi 0, %s97
      %s98 = sphi 0, %s95
      %s99 = sphi 0, %s98
      %s115 = sphi 0, %s99
      %s121 = sphi 0, %s123
      %s124 = sphi 0, %s121
      %s125 = sphi 0, %s124
      %s141 = sphi 0, %s125
      %s147 = sphi 0, %s149
      %s150 = sphi 0, %s147
      %s151 = sphi 0, %s150
      %s167 = sphi 0, %s151
      %s171 = sphi 0, %s171
      %s173 = sphi 0, %s171
      %s174 = sphi 0, %s173
      %s188 = sphi 0, %s174
    $region4: #{forward.9} parent=1 // loop_header_branch
      %20 = sbr.rel (%p18) target = $region8
    $region5: #{forward.9} parent=1 // loop_body
      %s22 = ssub.s32 %s17, 1
      %s23 = ssub.s32 %s17, 2
      %s24 = sadd.s32 %s17, 1
      %s25 = ssub.s32 %s17, %s24
      %p26 = scmp.eq.s32.totalorder %s25, 0
      %s28 = sadd.s32 %s27, 1
      %s29 = scalar_select %p26, %s27, %s28
      %p32 = pneg %p26
      %p33 = scmp.eq.s32.totalorder %s17, 1
      %p34 = por %p32, %p33
      %p35 = scmp.ne.s32.totalorder %s27, %s30
      %p36 = scmp.eq.s32.totalorder %s17, 0
      %p37 = por %p35, %p36
      %p38 = scmp.ne.s32.totalorder %s27, %s30
      %p39 = scmp.eq.s32.totalorder %s22, 1
      %p40 = por %p38, %p39
      %p41 = scmp.ne.s32.totalorder %s30, %s31
      %p42 = scmp.eq.s32.totalorder %s22, 0
      %p43 = por %p41, %p42
      %p44 = scmp.ne.s32.totalorder %s30, %s31
      %p45 = scmp.eq.s32.totalorder %s23, 1
      %p46 = por %p44, %p45
      %p48 = scmp.ne.s32.totalorder %s31, %s47
      %p49 = scmp.eq.s32.totalorder %s23, 0
      %p50 = por %p48, %p49
      %s52 = sadd.s32 %s51, 1
      %p55 = scmp.eq.s32.totalorder %s17, 1
      %p56 = scmp.ne.s32.totalorder %s51, %s53
      %p57 = scmp.eq.s32.totalorder %s17, 0
      %p58 = por %p56, %p57
      %p59 = scmp.ne.s32.totalorder %s51, %s53
      %p60 = scmp.eq.s32.totalorder %s22, 1
      %p61 = por %p59, %p60
      %p62 = scmp.ne.s32.totalorder %s53, %s54
      %p63 = scmp.eq.s32.totalorder %s22, 0
      %p64 = por %p62, %p63
      %p65 = scmp.ne.s32.totalorder %s53, %s54
      %p66 = scmp.eq.s32.totalorder %s23, 1
      %p67 = por %p65, %p66
      %p69 = scmp.ne.s32.totalorder %s54, %s68
      %p70 = scmp.eq.s32.totalorder %s23, 0
      %p71 = por %p69, %p70
      %s73 = sadd.s32 %s72, 1
      %p76 = scmp.eq.s32.totalorder %s17, 1
      %p77 = scmp.ne.s32.totalorder %s72, %s74
      %p78 = scmp.eq.s32.totalorder %s17, 0
      %p79 = por %p77, %p78
      %p80 = scmp.ne.s32.totalorder %s72, %s74
      %p81 = scmp.eq.s32.totalorder %s22, 1
      %p82 = por %p80, %p81
      %p83 = scmp.ne.s32.totalorder %s74, %s75
      %p84 = scmp.eq.s32.totalorder %s22, 0
      %p85 = por %p83, %p84
      %p86 = scmp.ne.s32.totalorder %s74, %s75
      %p87 = scmp.eq.s32.totalorder %s23, 1
      %p88 = por %p86, %p87
      %p90 = scmp.ne.s32.totalorder %s75, %s89
      %p91 = scmp.eq.s32.totalorder %s23, 0
      %p92 = por %p90, %p91
      %s93 = ssub.s32 %s17, %s24
      %p94 = scmp.eq.s32.totalorder %s93, 0
      %s96 = sadd.s32 %s95, 1
      %s97 = scalar_select %p94, %s95, %s96
      %p100 = pneg %p94
      %p101 = scmp.eq.s32.totalorder %s17, 1
      %p102 = por %p100, %p101
      %p103 = scmp.ne.s32.totalorder %s95, %s98
      %p104 = scmp.eq.s32.totalorder %s17, 0
      %p105 = por %p103, %p104
      %p106 = scmp.ne.s32.totalorder %s95, %s98
      %p107 = scmp.eq.s32.totalorder %s22, 1
      %p108 = por %p106, %p107
      %p109 = scmp.ne.s32.totalorder %s98, %s99
      %p110 = scmp.eq.s32.totalorder %s22, 0
      %p111 = por %p109, %p110
      %p112 = scmp.ne.s32.totalorder %s98, %s99
      %p113 = scmp.eq.s32.totalorder %s23, 1
      %p114 = por %p112, %p113
      %p116 = scmp.ne.s32.totalorder %s99, %s115
      %p117 = scmp.eq.s32.totalorder %s23, 0
      %p118 = por %p116, %p117
      %s119 = ssub.s32 %s17, %s24
      %p120 = scmp.eq.s32.totalorder %s119, 0
      %s122 = sadd.s32 %s121, 1
      %s123 = scalar_select %p120, %s121, %s122
      %p126 = pneg %p120
      %p127 = scmp.eq.s32.totalorder %s17, 1
      %p128 = por %p126, %p127
      %p129 = scmp.ne.s32.totalorder %s121, %s124
      %p130 = scmp.eq.s32.totalorder %s17, 0
      %p131 = por %p129, %p130
      %p132 = scmp.ne.s32.totalorder %s121, %s124
      %p133 = scmp.eq.s32.totalorder %s22, 1
      %p134 = por %p132, %p133
      %p135 = scmp.ne.s32.totalorder %s124, %s125
      %p136 = scmp.eq.s32.totalorder %s22, 0
      %p137 = por %p135, %p136
      %p138 = scmp.ne.s32.totalorder %s124, %s125
      %p139 = scmp.eq.s32.totalorder %s23, 1
      %p140 = por %p138, %p139
      %p142 = scmp.ne.s32.totalorder %s125, %s141
      %p143 = scmp.eq.s32.totalorder %s23, 0
      %p144 = por %p142, %p143
      %s145 = ssub.s32 %s17, %s24
      %p146 = scmp.eq.s32.totalorder %s145, 0
      %s148 = sadd.s32 %s147, 1
      %s149 = scalar_select %p146, %s147, %s148
      %p152 = pneg %p146
      %p153 = scmp.eq.s32.totalorder %s17, 1
      %p154 = por %p152, %p153
      %p155 = scmp.ne.s32.totalorder %s147, %s150
      %p156 = scmp.eq.s32.totalorder %s17, 0
      %p157 = por %p155, %p156
      %p158 = scmp.ne.s32.totalorder %s147, %s150
      %p159 = scmp.eq.s32.totalorder %s22, 1
      %p160 = por %p158, %p159
      %p161 = scmp.ne.s32.totalorder %s150, %s151
      %p162 = scmp.eq.s32.totalorder %s22, 0
      %p163 = por %p161, %p162
      %p164 = scmp.ne.s32.totalorder %s150, %s151
      %p165 = scmp.eq.s32.totalorder %s23, 1
      %p166 = por %p164, %p165
      %p168 = scmp.ne.s32.totalorder %s151, %s167
      %p169 = scmp.eq.s32.totalorder %s23, 0
      %p170 = por %p168, %p169
      %s172 = sadd.s32 %s171, 1
      %p175 = scmp.eq.s32.totalorder %s17, 1
      %p176 = scmp.ne.s32.totalorder %s171, %s173
      %p177 = scmp.eq.s32.totalorder %s17, 0
      %p178 = por %p176, %p177
      %p179 = scmp.ne.s32.totalorder %s171, %s173
      %p180 = scmp.eq.s32.totalorder %s22, 1
      %p181 = por %p179, %p180
      %p182 = scmp.ne.s32.totalorder %s173, %s174
      %p183 = scmp.eq.s32.totalorder %s22, 0
      %p184 = por %p182, %p183
      %p185 = scmp.ne.s32.totalorder %s173, %s174
      %p186 = scmp.eq.s32.totalorder %s23, 1
      %p187 = por %p185, %p186
      %p189 = scmp.ne.s32.totalorder %s174, %s188
      %p190 = scmp.eq.s32.totalorder %s23, 0
      %p191 = por %p189, %p190
      %p192 = scmp.le.s32.totalorder 1, %s17
      %p193 = scmp.lt.s32.totalorder %s17, 3
      %p194 = pnand %p192, %p193
      %p195 = pneg %p194
      // Predicated region
      $region9: #{forward.9} parent=5 // pred_check
        _
      $region10: #{forward.9} parent=5 // pred_check_branch
        %197 = sbr.rel (%p194) target = $region12
      $region11: #{forward.9} parent=5 // pred_region
        %s198 = ssub.s32 %s17, 1
        // Predicated region
        $region13: #{forward.9} parent=11 // pred_check
          %p199 = pneg %p64
        $region14: #{forward.9} parent=11 // pred_check_branch
          %201 = sbr.rel (%p199) target = $region16
        $region15: #{forward.9} parent=11 // pred_region
          _
        $region16: #{forward.9} parent=11 // pred_fallthru
          _
        // Predicated region
        $region17: #{forward.9} parent=11 // pred_check
          %p202 = pneg %p85
        $region18: #{forward.9} parent=11 // pred_check_branch
          %204 = sbr.rel (%p202) target = $region20
        $region19: #{forward.9} parent=11 // pred_region
          _
        $region20: #{forward.9} parent=11 // pred_fallthru
          _
      $region12: #{forward.9} parent=5 // pred_fallthru
        _
      %p205 = scmp.lt.s32.totalorder %s17, 2
      // Predicated region
      $region21: #{forward.9} parent=5 // pred_check
        %p206 = pneg %p205
      $region22: #{forward.9} parent=5 // pred_check_branch
        %208 = sbr.rel (%p206) target = $region24
      $region23: #{forward.9} parent=5 // pred_region
        // Predicated region
        $region25: #{forward.9} parent=23 // pred_check
          %p209 = pneg %p37
        $region26: #{forward.9} parent=23 // pred_check_branch
          %211 = sbr.rel (%p209) target = $region28
        $region27: #{forward.9} parent=23 // pred_region
          %p212 = scmp.lt.s32.totalorder %s17, 1
          %s213 = scalar_select %p212, %s17, 1
          %s214 = smul.addr %s213, 2
          %s215 = smul.addr %s214, 4
          %s216 = scalar_lea.vmem %s0, %s215
        $region28: #{forward.9} parent=23 // pred_fallthru
          _
        // Predicated region
        $region29: #{forward.9} parent=23 // pred_check
          %p217 = pneg %p105
        $region30: #{forward.9} parent=23 // pred_check_branch
          %219 = sbr.rel (%p217) target = $region32
        $region31: #{forward.9} parent=23 // pred_region
          %p220 = scmp.lt.s32.totalorder %s17, 1
          %s221 = scalar_select %p220, %s17, 1
          %s222 = smul.addr %s221, 2
          %s223 = smul.addr %s222, 8
          %s224 = scalar_lea.vmem %s3, %s223
        $region32: #{forward.9} parent=23 // pred_fallthru
          _
        // Predicated region
        $region33: #{forward.9} parent=23 // pred_check
          %p225 = pneg %p131
        $region34: #{forward.9} parent=23 // pred_check_branch
          %227 = sbr.rel (%p225) target = $region36
        $region35: #{forward.9} parent=23 // pred_region
          %p228 = scmp.lt.s32.totalorder %s17, 1
          %s229 = scalar_select %p228, %s17, 1
          %s230 = smul.addr %s229, 8
          %s231 = scalar_lea.vmem %s4, %s230
        $region36: #{forward.9} parent=23 // pred_fallthru
          _
      $region24: #{forward.9} parent=5 // pred_fallthru
        _
      %p232 = scmp.le.s32.totalorder 1, %s17
      %p233 = scmp.lt.s32.totalorder %s17, 3
      %p234 = pnand %p232, %p233
      %p235 = pneg %p234
      // Predicated region
      $region37: #{forward.9} parent=5 // pred_check
        _
      $region38: #{forward.9} parent=5 // pred_check_branch
        %237 = sbr.rel (%p234) target = $region40
      $region39: #{forward.9} parent=5 // pred_region
        %s238 = ssub.s32 %s17, 1
        %p239 = scmp.lt.s32.totalorder %s22, 1
        %s240 = scalar_select %p239, %s22, 1
        %s241 = smul.addr %s240, 2
        %s242 = smul.addr %s241, 4
        %s243 = scalar_lea.vmem %s0, %s242
        %p244 = pneg %p43
        %p245 = pneg %p40
        %p246 = pneg %p64
        %p247 = pneg %p61
        %p248 = pneg %p85
        %p249 = pneg %p82
        %p250 = scmp.lt.s32.totalorder %s22, 1
        %s251 = scalar_select %p250, %s22, 1
        %s252 = smul.addr %s251, 2
        %s253 = smul.addr %s252, 8
        %s254 = scalar_lea.vmem %s3, %s253
        %p255 = pneg %p111
        %p256 = pneg %p108
        %p257 = scmp.lt.s32.totalorder %s22, 1
        %s258 = scalar_select %p257, %s22, 1
        %s259 = smul.addr %s258, 8
        %s260 = scalar_lea.vmem %s4, %s259
        %p261 = pneg %p137
        %p262 = pneg %p134
        %p263 = pneg %p163
        %p264 = pneg %p160
        %s265 = sand.u32 %s150, 1
        %s266 = scalar_lea.sflag [#allocation5], %s265
        %s267 = sand.u32 %s150, 1
        %s268 = smul.addr %s267, 16
        %s269 = scalar_lea.vmem [#allocation4], %s268
        %p270 = pneg %p184
        %p271 = pneg %p181
        %p272 = scmp.lt.s32.totalorder %s22, 1
        %s273 = scalar_select %p272, %s22, 1
        %s274 = smul.addr %s273, 2
        %s275 = smul.addr %s274, 4
        %s276 = scalar_lea.vmem %s0, %s275
        %p277 = scmp.lt.s32.totalorder %s22, 1
        %s278 = scalar_select %p277, %s22, 1
        %s279 = smul.addr %s278, 2
        %s280 = smul.addr %s279, 8
        %s281 = scalar_lea.vmem %s3, %s280
        %p282 = scmp.lt.s32.totalorder %s22, 1
        %s283 = scalar_select %p282, %s22, 1
        %s284 = smul.addr %s283, 8
        %s285 = scalar_lea.vmem %s4, %s284
        %p287 = scmp.eq.s32.totalorder %s22, 0
        // Predicated region
        $region41: #{forward.9} parent=39 // pred_check
          %p288 = pneg %p287
        $region42: #{forward.9} parent=39 // pred_check_branch
          %290 = sbr.rel (%p288) target = $region44
        $region43: #{forward.9} parent=39 // pred_region
          %vm291 = vcmask 0
          %292 = vst.msk [vmem:[#allocation2] sm:$0x1] %vm291, 0.0
          %293 = vst.msk [vmem:[#allocation3] sm:$0x1] %vm291, 0.0
        $region44: #{forward.9} parent=39 // pred_fallthru
          _
        %v294 = vld [vmem:[%s276] sm:$0xf]
        %v295 = vld [vmem:[%s276 + $0x4] sm:$0x1]
        %v296 = vld [vmem:[%s1] sm:$0xff]
        %v297 = vld [vmem:[%s1 + $0x8] sm:$0xff]
        %v298 = vld [vmem:[%s1 + $0x10] sm:$0xff]
        %v299 = vld [vmem:[%s1 + $0x18] sm:$0xff]
        %v300 = vld [vmem:[%s2] sm:$0x3]
        %v302 = vlaneseq
        %v303 = vshrl.u32 %v302, 7
        %v304 = vsub.s32 0, %v303
        %v305 = vrot.slane %v300, %v304
        %v306 = vlaneseq
        %v307 = vshrl.u32 %v306, 7
        %v308 = vsub.s32 1, %v307
        %v309 = vrot.slane %v300, %v308
        %v314 = vunpack.c.l.b16 %v294
        %v315 = vunpack.c.l.b16 %v295
        %v316 = vpack.c.b16 %v315, %v314
        %v318 = vshrl.u32 %v316, 16
        %v320 = vshll.u32 %v316, 16
        %v322 = vrot.slane %v320, 1
        %v323 = vor.u32 %v318, %v322
        %v328 = vunpack.c.l.b16 %v296
        %v329 = vunpack.c.h.b16 %v296
        %v330 = vunpack.c.l.b16 %v297
        %v331 = vunpack.c.h.b16 %v297
        %v332 = vunpack.c.l.b16 %v298
        %v333 = vunpack.c.h.b16 %v298
        %v334 = vunpack.c.l.b16 %v299
        %v335 = vunpack.c.h.b16 %v299
        %v336 = vpack.c.b16 %v330, %v328
        %v337 = vpack.c.b16 %v331, %v329
        %v338 = vpack.c.b16 %v334, %v332
        %v339 = vpack.c.b16 %v335, %v333
        %vm344 = vcmask 261120
        %v346 = vsel %vm344, %v323, 0
        %348 = vmatprep.subr.bf16.mxu0 %v337
        %349 = vmatpush1.bf16.msra.mxu0 %v336
        %350 = vmatprep.subr.bf16.mxu0 %v339
        %351 = vmatpush1.bf16.msra.mxu0 %v338
        %352 = vmatprep.subr.bf16.mxu0 0
        %353 = vmatpush1.bf16.msra.mxu0 0
        %354 = vmatprep.subr.bf16.mxu0 0
        %355 = vmatpush1.bf16.msra.mxu0 0
        %356 = vmatprep.subr.bf16.mxu0 0
        %357 = vmatpush1.bf16.msra.mxu0 0
        %358 = vmatprep.subr.bf16.mxu0 0
        %359 = vmatpush1.bf16.msra.mxu0 0
        %360 = vmatprep.subr.bf16.mxu0 0
        %361 = vmatpush1.bf16.msra.mxu0 0
        %362 = vmatprep.subr.bf16.mxu0 0
        %363 = vmatpush1.bf16.msra.mxu0 0
        %364 = vmatprep.subr.bf16.mxu0 0
        %365 = vmatpush1.bf16.msra.mxu0 0
        %366 = vmatprep.subr.bf16.mxu0 0
        %367 = vmatpush1.bf16.msra.mxu0 0
        %368 = vmatprep.subr.bf16.mxu0 0
        %369 = vmatpush1.bf16.msra.mxu0 0
        %370 = vmatprep.subr.bf16.mxu0 0
        %371 = vmatpush1.bf16.msra.mxu0 0
        %372 = vmatprep.subr.bf16.mxu0 0
        %373 = vmatpush1.bf16.msra.mxu0 0
        %374 = vmatprep.subr.bf16.mxu0 0
        %375 = vmatpush1.bf16.msra.mxu0 0
        %376 = vmatprep.subr.bf16.mxu0 0
        %377 = vmatpush1.bf16.msra.mxu0 0
        %378 = vmatprep.subr.bf16.mxu0 0
        %379 = vmatpush1.bf16.msra.mxu0 0
        %380 = vmatprep.mubr.bf16.mxu0 0
        %381 = vmatmul.mubr.bf16.gmra.mrb[0].mxu0 %v346
        %v382 = vpop.f32.mrb[0].mxu0
        %v383 = vadd.f32 %v305, %v382
        %v384 = vpop.f32.mrb[0].mxu0
        %v385 = vadd.f32 %v309, %v384
        %v386 = vpop.f32.mrb[0].mxu0
        %v387 = vpop.f32.mrb[0].mxu0
        %388 = vdwg.mxu0
        %389 = vst [vmem:[%s269] sm:$0xff] %v383
        %390 = vst [vmem:[%s269 + $0x8] sm:$0xff] %v385
        %v391 = vld [vmem:[%s281] sm:$0xff]
        %v392 = vld [vmem:[%s281 + $0x8] sm:$0xff]
        %v393 = vsub.f32 %v383, %v391
        %v394 = vsub.f32 %v385, %v392
        %v395 = vmul.f32 %v393, %v393
        %v396 = vmul.f32 %v394, %v394
        %v397 = vadd.f32 %v395, %v396
        %398 = vadd.xlane.f32.xlu0 %v397
        %v399 = vpop.xlane.xlu0 %398
        %v400 = vrcp.pop 256.0
        %v401 = vmul.f32 %v399, %v400
        %v402 = vld [vmem:[%s285] sm:$0xff]
        %v403 = vld [vmem:[#allocation2] sm:$0x1]
        %v404 = vmul.f32 %v401, %v402
        %vm405 = vcmask 7168
        %v406 = vsel %vm405, %v404, 0.0
        %407 = vadd.xlane.f32.xlu0 %v406
        %v408 = vpop.xlane.xlu0 %407
        %v409 = vrot.slane %v408, 4
        %v410 = vadd.f32 %v408, %v409
        %v411 = vrot.slane %v410, 2
        %v412 = vadd.f32 %v410, %v411
        %v413 = vrot.slane %v412, 1
        %v414 = vadd.f32 %v412, %v413
        %s415 = vtos %v414
        %v416 = vstv %s415
        %v417 = vadd.f32 %v403, %v416
        %vm418 = vcmask 0
        %419 = vst.msk [vmem:[#allocation2] sm:$0x1] %vm418, %v417
        %v420 = vld [vmem:[#allocation3] sm:$0x1]
        %v421 = vsel %vm405, %v402, 0.0
        %422 = vadd.xlane.f32.xlu0 %v421
        %v423 = vpop.xlane.xlu0 %422
        %v424 = vrot.slane %v423, 4
        %v425 = vadd.f32 %v423, %v424
        %v426 = vrot.slane %v425, 2
        %v427 = vadd.f32 %v425, %v426
        %v428 = vrot.slane %v427, 1
        %v429 = vadd.f32 %v427, %v428
        %s430 = vtos %v429
        %v431 = vstv %s430
        %v432 = vadd.f32 %v420, %v431
        %433 = vst.msk [vmem:[#allocation3] sm:$0x1] %vm418, %v432
        %p434 = scmp.eq.s32.totalorder %s22, 1
        // Predicated region
        $region45: #{forward.9} parent=39 // pred_check
          %p435 = pneg %p434
        $region46: #{forward.9} parent=39 // pred_check_branch
          %437 = sbr.rel (%p435) target = $region48
        $region47: #{forward.9} parent=39 // pred_region
          %v438 = vld [vmem:[#allocation2] sm:$0x1]
          %v439 = vld [vmem:[#allocation3] sm:$0x1]
          %v440 = vrcp.pop %v439
          %v441 = vmul.f32 %v438, %v440
          %442 = vst.msk [vmem:[#allocation6] sm:$0x1] %vm418, %v441
        $region48: #{forward.9} parent=39 // pred_fallthru
          _
        %s443 = sand.u32 %s150, 1
        %s444 = scalar_lea.sflag [#allocation5], %s443
        %s445 = sand.u32 %s150, 1
        %s446 = smul.addr %s445, 16
        %s447 = scalar_lea.vmem [#allocation4], %s446
        // Predicated region
        $region49: #{forward.9} parent=39 // pred_check
          %p448 = pneg %p160
        $region50: #{forward.9} parent=39 // pred_check_branch
          %450 = sbr.rel (%p448) target = $region52
        $region51: #{forward.9} parent=39 // pred_region
          %s452 = ssub.s32 256, 256
          %453 = vsyncadd %s444, %s452
          %s454 = smul.addr %s22, 2
          %s455 = smul.addr %s454, 128
          %s456 = scalar_lea.hbm %s5, %s455
          %s458 = sshll.u32 %s447, 4
          %s459 = int_to_ptr.vmem [resolvable:$true] %s458
          %461 = dma.vmem_to_hbm [thread:$0]  %s459, 256, %s456, %s444
        $region52: #{forward.9} parent=39 // pred_fallthru
          _
        // Predicated region
        $region53: #{forward.9} parent=39 // pred_check
          %p462 = pneg %p181
        $region54: #{forward.9} parent=39 // pred_check_branch
          %464 = sbr.rel (%p462) target = $region56
        $region55: #{forward.9} parent=39 // pred_region
          %s466 = ssub.s32 16, 16
          %467 = vsyncadd [#allocation7], %s466
          %s469 = sshll.u32 [#allocation6], 4
          %s470 = int_to_ptr.vmem [resolvable:$true] %s469
          %472 = dma.vmem_to_hbm [thread:$0]  %s470, 16, %s6, [#allocation7]
        $region56: #{forward.9} parent=39 // pred_fallthru
          _
        // Predicated region
        $region57: #{forward.9} parent=39 // pred_check
          %p473 = pneg %p181
        $region58: #{forward.9} parent=39 // pred_check_branch
          %475 = sbr.rel (%p473) target = $region60
        $region59: #{forward.9} parent=39 // pred_region
          %476 = dma.done [#allocation7], 16
        $region60: #{forward.9} parent=39 // pred_fallthru
          _
      $region40: #{forward.9} parent=5 // pred_fallthru
        _
      %p477 = scmp.le.s32.totalorder 2, %s17
      // Predicated region
      $region61: #{forward.9} parent=5 // pred_check
        %p478 = pneg %p477
      $region62: #{forward.9} parent=5 // pred_check_branch
        %480 = sbr.rel (%p478) target = $region64
      $region63: #{forward.9} parent=5 // pred_region
        %s481 = ssub.s32 %s17, 2
        // Predicated region
        $region65: #{forward.9} parent=63 // pred_check
          %p482 = pneg %p166
        $region66: #{forward.9} parent=63 // pred_check_branch
          %484 = sbr.rel (%p482) target = $region68
        $region67: #{forward.9} parent=63 // pred_region
          %s485 = sand.u32 %s151, 1
          %s486 = scalar_lea.sflag [#allocation5], %s485
          %s487 = sand.u32 %s151, 1
          %s488 = smul.addr %s487, 16
          %s489 = scalar_lea.vmem [#allocation4], %s488
          %490 = dma.done %s486, 256
        $region68: #{forward.9} parent=63 // pred_fallthru
          _
      $region64: #{forward.9} parent=5 // pred_fallthru
        _
    $region6: #{forward.9} parent=1 // loop_footer
      %s21 = sadd.s32 1, %s17
    $region7: #{forward.9} parent=1 // loop_footer_branch
      %16 = sbr.rel target = $region3
    $region8: #{forward.9} parent=1 // loop_exit
      _
    %491 = vsyncpa [#allocation5], 1
    %s492 = scalar_lea.sflag [#allocation5], 1
    %493 = vsyncpa %s492, 1
    %494 = vsyncpa [#allocation7], 1

</llo_original>
